<compile_context>
chip_gen: v7x
topology: tpu7x:2x2x1
jax: 0.10.0
libtpu: 0.0.40
codegen_flags: <defaults>
</compile_context>

<pallas_src>
import functools

import jax
import jax.numpy as jnp
from jax.experimental import pallas as pl
from jax.experimental.pallas import tpu as pltpu


def _rup128(n):
    return ((n + 127) // 128) * 128


def _sigmoid(x):
    # sigmoid(x) == 0.5 * tanh(0.5 * x) + 0.5 : single EUP push instead of exp+recip.
    return 0.5 * jnp.tanh(0.5 * x) + 0.5


# ----------------------------- fused kernel -----------------------------

def _enc_dec_kernel(in_ref, w_ref, b_ref, out_ref, x_scr, *, P, M, T, F, D_out):
    f32 = jnp.float32
    bf16 = jnp.bfloat16
    F2, F3 = 2 * F, 3 * F

    # ---- static unpack of the bf16 weight pack (loop-invariant, done once) ----
    o_enc_wh = 0
    o_enc_hd = o_enc_wh + _rup128(F3)
    o_dec_wx = o_enc_hd + _rup128(F)
    o_dec_wh = o_dec_wx + _rup128(F3)
    o_dec_hd = o_dec_wh + _rup128(F3)

    enc_wh_rz = w_ref[:, o_enc_wh:o_enc_wh + F2]            # (F, 2F) fused r|z h-side
    enc_wh_u = w_ref[:, o_enc_wh + F2:o_enc_wh + F3]        # (F, F)
    enc_hd_w = w_ref[:, o_enc_hd:o_enc_hd + F]              # (F, F)  encoder head
    dec_wx = w_ref[:, o_dec_wx:o_dec_wx + F3]               # (F, 3F) decoder x-side r|z|u
    dec_wh_rz = w_ref[:, o_dec_wh:o_dec_wh + F2]            # (F, 2F)
    dec_wh_u = w_ref[:, o_dec_wh + F2:o_dec_wh + F3]        # (F, F)
    dec_hd_w = w_ref[:, o_dec_hd:o_dec_hd + D_out]          # (F, D_out) decoder head

    # ---- f32 bias / row-vector pack ----
    enc_in_w = b_ref[0:1, 0:F3]      # linear_in folded into encoder x-side pack
    enc_in_b = b_ref[1:2, 0:F3]
    enc_hd_b = b_ref[2:3, 0:F]
    dec_xb = b_ref[3:4, 0:F3]
    dec_hd_b = b_ref[4:5, 0:D_out]
    w_out = b_ref[5:6, 0:D_out]      # linear_out weight (transposed)
    b_out = b_ref[6:7, 0:1]

    # ---- encoder x-side prepass for ALL P timesteps (r|z|u lanes), biases folded ----
    x_scr[...] = in_ref[...] * enc_in_w + enc_in_b          # (P*M, 3F)

    # ---- encoder recurrence (serial over P, statically unrolled) ----
    hx = jnp.zeros((M, F), f32)
    for t in range(P):
        lo = t * M
        x_rz = x_scr[lo:lo + M, 0:F2]
        x_u = x_scr[lo:lo + M, F2:F3]
        rz = _sigmoid(x_rz + jnp.dot(hx.astype(bf16), enc_wh_rz,
                                     preferred_element_type=f32))
        r, z = rz[:, 0:F], rz[:, F:F2]
        cy = jnp.tanh(x_u + jnp.dot((r * hx).astype(bf16), enc_wh_u,
                                    preferred_element_type=f32))
        # matches reference polarity: hy = z*hx + (1 - z)*cy
        hx = z * hx + (1.0 - z) * cy

    # ---- encoder head (only the last step's yt feeds the decoder) ----
    yt_enc = _sigmoid(jnp.dot(hx.astype(bf16), enc_hd_w,
                              preferred_element_type=f32) + enc_hd_b)

    # ---- decoder x-side projections: x (= yt_enc) is constant -> ONE dot ----
    dx = (jnp.dot(yt_enc.astype(bf16), dec_wx, preferred_element_type=f32)
          + dec_xb)                                          # (M, 3F)
    dx_rz, dx_u = dx[:, 0:F2], dx[:, F2:F3]

    # ---- decoder recurrence + per-step head + fused linear_out ----
    # TODO(synk): on v7x, stage the loop-invariant h-side weights in the MRB via
    # pltpu.matmul_push_rhs / matmul_acc_lhs / matmul_pop to skip per-step pushes.
    cols = []
    for _ in range(T):
        rz = _sigmoid(dx_rz + jnp.dot(hx.astype(bf16), dec_wh_rz,
                                      preferred_element_type=f32))
        r, z = rz[:, 0:F], rz[:, F:F2]
        cy = jnp.tanh(dx_u + jnp.dot((r * hx).astype(bf16), dec_wh_u,
                                     preferred_element_type=f32))
        hx = z * hx + (1.0 - z) * cy
        yt = _sigmoid(jnp.dot(hx.astype(bf16), dec_hd_w,
                              preferred_element_type=f32) + dec_hd_b)   # (M, D_out)
        # linear_out (D_out -> 1): lane reduction instead of a width-1 matmul.
        cols.append(jnp.sum(yt * w_out, axis=-1, keepdims=True) + b_out)
    out_ref[...] = jnp.concatenate(cols, axis=-1)            # single (M, T) store


# ----------------------------- param packing (once, outside jit) -----------------------------

def pack_params(params):
    """Repack concat-form parameters into the 2 kernel buffers. Call once at init."""
    f32 = jnp.float32
    F = params["w_in"].shape[1]
    D_out = params["dec_W"].shape[1]
    F3 = 3 * F

    def split(gate_w, gate_b, upd_w, upd_b):
        # concat-form GRU -> x-side / h-side packs in r|z|u lane order
        wx = jnp.concatenate([gate_w[:F, :F], gate_w[:F, F:], upd_w[:F, :]], axis=1)
        wh = jnp.concatenate([gate_w[F:, :F], gate_w[F:, F:], upd_w[F:, :]], axis=1)
        bb = jnp.concatenate([gate_b[:, :F], gate_b[:, F:], upd_b], axis=1)
        return wx, wh, bb

    enc_wx, enc_wh, enc_bx = split(params["enc_gate_w"], params["enc_gate_b"],
                                   params["enc_upd_w"], params["enc_upd_b"])
    dec_wx, dec_wh, dec_bx = split(params["dec_gate_w"], params["dec_gate_b"],
                                   params["dec_upd_w"], params["dec_upd_b"])

    # Fold linear_in (1 -> F) into the encoder x-side prepass:
    #   (in @ w_in + b_in) @ Wx + bx == in @ (w_in @ Wx) + (b_in @ Wx + bx)
    enc_in_w = params["w_in"] @ enc_wx                              # (1, 3F)
    enc_in_b = params["b_in"].reshape(1, F) @ enc_wx + enc_bx       # (1, 3F)

    def lane_pad128(x):
        pad = _rup128(x.shape[1]) - x.shape[1]
        return jnp.pad(x, ((0, 0), (0, pad))) if pad else x

    # bf16 weight pack; each group starts on a 128-lane boundary so the static
    # sub-slices taken inside the kernel never cross lane tiles.
    w_pack = jnp.concatenate(
        [lane_pad128(enc_wh), lane_pad128(params["enc_W"]),
         lane_pad128(dec_wx), lane_pad128(dec_wh), params["dec_W"]],
        axis=1).astype(jnp.bfloat16)                                 # (F, 4*rup + D_out)

    # f32 row-vector pack
    WB = max(F3, D_out)

    def row(v):
        v = jnp.asarray(v, f32).reshape(1, -1)
        return jnp.pad(v, ((0, 0), (0, WB - v.shape[1])))

    b_pack = jnp.concatenate(
        [row(enc_in_w), row(enc_in_b), row(params["enc_b"]),
         row(dec_bx), row(params["dec_b"]),
         row(params["w_out"].T), row(params["b_out"]),
         jnp.zeros((1, WB), f32)], axis=0)                           # (8, WB)
    return w_pack, b_pack


# ----------------------------- wrapper -----------------------------

@functools.partial(jax.jit, static_argnames=("seq_target",))
def enc_dec_linear_forward(inputs, w_pack, b_pack, seq_target):
    """inputs: (B, P, N, 1)  ->  (B, seq_target, N, 1)"""
    B, P, N, _ = inputs.shape
    F = w_pack.shape[0]
    o_dec_hd = _rup128(3 * F) + _rup128(F) + _rup128(3 * F) + _rup128(3 * F)
    D_out = w_pack.shape[1] - o_dec_hd
    M = B * N
    T = seq_target

    # time-major, flatten (B, N) -> M rows; scalar inputs (linear_in fused in-kernel)
    in_flat = jnp.transpose(inputs, (1, 0, 2, 3)).reshape(P * M, 1)

    out_flat = pl.pallas_call(
        functools.partial(_enc_dec_kernel, P=P, M=M, T=T, F=F, D_out=D_out),
        out_shape=jax.ShapeDtypeStruct((M, T), jnp.float32),
        scratch_shapes=[pltpu.VMEM((P * M, 3 * F), jnp.float32)],
    )(in_flat, w_pack, b_pack)

    # (M, T) -> (B, T, N, 1) with M rows ordered as m = b*N + n
    return out_flat.reshape(B, N, T).transpose(0, 2, 1)[..., None]


# ----------------------------- params & reference -----------------------------

def init_params(key, dim_in, dim_out):
    ks = jax.random.split(key, 14)
    u = lambda k, shape, scale: jax.random.uniform(
        k, shape, jnp.float32, -scale, scale)
    F = dim_in
    return dict(
        w_in=u(ks[0], (1, F), 1.0), b_in=u(ks[1], (F,), 1.0),
        enc_gate_w=u(ks[2], (2 * F, 2 * F), (2 * F) ** -0.5),
        enc_gate_b=u(ks[3], (1, 2 * F), (2 * F) ** -0.5),
        enc_upd_w=u(ks[4], (2 * F, F), (2 * F) ** -0.5),
        enc_upd_b=u(ks[5], (1, F), (2 * F) ** -0.5),
        enc_W=u(ks[6], (F, F), F ** -0.5),
        enc_b=u(ks[7], (1, F), F ** -0.5),
        dec_gate_w=u(ks[8], (2 * F, 2 * F), (2 * F) ** -0.5),
        dec_gate_b=u(ks[9], (1, 2 * F), (2 * F) ** -0.5),
        dec_upd_w=u(ks[10], (2 * F, F), (2 * F) ** -0.5),
        dec_upd_b=u(ks[11], (1, F), (2 * F) ** -0.5),
        dec_W=u(ks[12], (F, dim_out), F ** -0.5),
        dec_b=u(ks[13], (1, dim_out), F ** -0.5),
        w_out=u(jax.random.fold_in(key, 99), (dim_out, 1), dim_out ** -0.5),
        b_out=jnp.zeros((1,), jnp.float32),
    )


def reference_forward(inputs, params, seq_target):
    """Pure-JAX mirror of the PyTorch Enc_Dec_linear forward (concat form)."""
    B, P, N, _ = inputs.shape
    F = params["w_in"].shape[1]
    x = inputs @ params["w_in"] + params["b_in"]                     # (B,P,N,F)
    hx = jnp.zeros((B, N, F), jnp.float32)
    for t in range(P):
        xt = x[:, t]
        comb = jnp.concatenate([xt, hx], axis=-1)
        gates = comb @ params["enc_gate_w"] + params["enc_gate_b"]
        r = jax.nn.sigmoid(gates[..., :F]); z = jax.nn.sigmoid(gates[..., F:])
        comb2 = jnp.concatenate([xt, r * hx], axis=-1)
        cy = jnp.tanh(comb2 @ params["enc_upd_w"] + params["enc_upd_b"])
        hx = z * hx + (1.0 - z) * cy
    yt = jax.nn.sigmoid(hx @ params["enc_W"] + params["enc_b"])
    outs = []
    for _ in range(seq_target):
        comb = jnp.concatenate([yt, hx], axis=-1)
        gates = comb @ params["dec_gate_w"] + params["dec_gate_b"]
        r = jax.nn.sigmoid(gates[..., :F]); z = jax.nn.sigmoid(gates[..., F:])
        comb2 = jnp.concatenate([yt, r * hx], axis=-1)
        cy = jnp.tanh(comb2 @ params["dec_upd_w"] + params["dec_upd_b"])
        hx = z * hx + (1.0 - z) * cy
        outs.append(jax.nn.sigmoid(hx @ params["dec_W"] + params["dec_b"]))
    out = jnp.stack(outs, axis=1)                                    # (B,T,N,D_out)
    return out @ params["w_out"] + params["b_out"]                   # (B,T,N,1)


# ----------------------------- main -----------------------------

if __name__ == "__main__":
    B, P, N = 2, 8, 16          # batch, input sequence length, num vertices
    dim_in, dim_out = 32, 32
    seq_target = 4

    key = jax.random.PRNGKey(0)
    k_in, k_par = jax.random.split(key)
    inputs = jax.random.normal(k_in, (B, P, N, 1), jnp.float32)
    params = init_params(k_par, dim_in, dim_out)

    # one-time parameter repack, kept out of the jitted per-call path
    w_pack, b_pack = pack_params(params)

    out = enc_dec_linear_forward(inputs, w_pack, b_pack, seq_target=seq_target)
    out = jax.block_until_ready(out)
    assert out.shape == (B, seq_target, N, 1), out.shape
    assert bool(jnp.all(jnp.isfinite(out)))

    # sanity-check against a plain-JAX reference (highest-precision f32 matmuls);
    # bf16 matmul operands in the 12-step recurrence compound rounding (~1e-2).
    with jax.default_matmul_precision("highest"):
        ref = reference_forward(inputs, params, seq_target)
    ref = jax.block_until_ready(ref)
    err = float(jnp.max(jnp.abs(out - ref)))
    assert err < 5e-2, f"mismatch vs reference: max abs err = {err}"

    print("KERNEL_OK")
</pallas_src>

<mosaic_0001>
module attributes {stable_mosaic.version = 11 : i64} {
  func.func @_enc_dec_kernel(%arg0: memref<256x1xf32, #tpu.memory_space<vmem>>, %arg1: memref<32x544xbf16, #tpu.memory_space<vmem>>, %arg2: memref<8x96xf32, #tpu.memory_space<vmem>>, %arg3: memref<32x4xf32, #tpu.memory_space<vmem>>, %arg4: memref<256x96xf32, #tpu.memory_space<vmem>>) attributes {dimension_semantics = [], scalar_prefetch = 0 : i64, scratch_operands = 1 : i64, tpu.core_type = #tpu.core_type<tc>} {
    %c0 = arith.constant 0 : index
    %c0_0 = arith.constant 0 : index
    %0 = vector.load %arg1[%c0, %c0_0] : memref<32x544xbf16, #tpu.memory_space<vmem>>, vector<32x64xbf16>
    %c0_1 = arith.constant 0 : index
    %c64 = arith.constant 64 : index
    %1 = vector.load %arg1[%c0_1, %c64] : memref<32x544xbf16, #tpu.memory_space<vmem>>, vector<32x32xbf16>
    %c0_2 = arith.constant 0 : index
    %c128 = arith.constant 128 : index
    %2 = vector.load %arg1[%c0_2, %c128] : memref<32x544xbf16, #tpu.memory_space<vmem>>, vector<32x32xbf16>
    %c0_3 = arith.constant 0 : index
    %c256 = arith.constant 256 : index
    %3 = vector.load %arg1[%c0_3, %c256] : memref<32x544xbf16, #tpu.memory_space<vmem>>, vector<32x96xbf16>
    %c0_4 = arith.constant 0 : index
    %c384 = arith.constant 384 : index
    %4 = vector.load %arg1[%c0_4, %c384] : memref<32x544xbf16, #tpu.memory_space<vmem>>, vector<32x64xbf16>
    %c0_5 = arith.constant 0 : index
    %c448 = arith.constant 448 : index
    %5 = vector.load %arg1[%c0_5, %c448] : memref<32x544xbf16, #tpu.memory_space<vmem>>, vector<32x32xbf16>
    %c0_6 = arith.constant 0 : index
    %c512 = arith.constant 512 : index
    %6 = vector.load %arg1[%c0_6, %c512] : memref<32x544xbf16, #tpu.memory_space<vmem>>, vector<32x32xbf16>
    %c0_7 = arith.constant 0 : index
    %c0_8 = arith.constant 0 : index
    %7 = vector.load %arg2[%c0_7, %c0_8] : memref<8x96xf32, #tpu.memory_space<vmem>>, vector<1x96xf32>
    %c1 = arith.constant 1 : index
    %c0_9 = arith.constant 0 : index
    %8 = vector.load %arg2[%c1, %c0_9] : memref<8x96xf32, #tpu.memory_space<vmem>>, vector<1x96xf32>
    %c2 = arith.constant 2 : index
    %c0_10 = arith.constant 0 : index
    %9 = vector.load %arg2[%c2, %c0_10] : memref<8x96xf32, #tpu.memory_space<vmem>>, vector<1x32xf32>
    %c3 = arith.constant 3 : index
    %c0_11 = arith.constant 0 : index
    %10 = vector.load %arg2[%c3, %c0_11] : memref<8x96xf32, #tpu.memory_space<vmem>>, vector<1x96xf32>
    %c4 = arith.constant 4 : index
    %c0_12 = arith.constant 0 : index
    %11 = vector.load %arg2[%c4, %c0_12] : memref<8x96xf32, #tpu.memory_space<vmem>>, vector<1x32xf32>
    %c5 = arith.constant 5 : index
    %c0_13 = arith.constant 0 : index
    %12 = vector.load %arg2[%c5, %c0_13] : memref<8x96xf32, #tpu.memory_space<vmem>>, vector<1x32xf32>
    %c6 = arith.constant 6 : index
    %c0_14 = arith.constant 0 : index
    %13 = vector.load %arg2[%c6, %c0_14] : memref<8x96xf32, #tpu.memory_space<vmem>>, vector<1x1xf32>
    %c0_15 = arith.constant 0 : index
    %c0_16 = arith.constant 0 : index
    %14 = vector.load %arg0[%c0_15, %c0_16] : memref<256x1xf32, #tpu.memory_space<vmem>>, vector<256x1xf32>
    %15 = vector.broadcast %14 : vector<256x1xf32> to vector<256x96xf32>
    %16 = vector.broadcast %7 : vector<1x96xf32> to vector<256x96xf32>
    %17 = arith.mulf %15, %16 : vector<256x96xf32>
    %18 = vector.broadcast %8 : vector<1x96xf32> to vector<256x96xf32>
    %19 = arith.addf %17, %18 : vector<256x96xf32>
    %c0_17 = arith.constant 0 : index
    %c0_18 = arith.constant 0 : index
    %20 = vector.load %arg4[%c0_17, %c0_18] : memref<256x96xf32, #tpu.memory_space<vmem>>, vector<256x96xf32>
    tpu.vector_store %arg4[%c0_17, %c0_18], %19 {strides = array<i32>} : memref<256x96xf32, #tpu.memory_space<vmem>>, vector<256x96xf32>,
    %cst = arith.constant 0.000000e+00 : f32
    %21 = vector.broadcast %cst : f32 to vector<32x32xf32>
    %c0_19 = arith.constant 0 : index
    %c0_20 = arith.constant 0 : index
    %22 = vector.load %arg4[%c0_19, %c0_20] : memref<256x96xf32, #tpu.memory_space<vmem>>, vector<32x64xf32>
    %c0_21 = arith.constant 0 : index
    %c64_22 = arith.constant 64 : index
    %23 = vector.load %arg4[%c0_21, %c64_22] : memref<256x96xf32, #tpu.memory_space<vmem>>, vector<32x32xf32>
    %24 = arith.truncf %21 : vector<32x32xf32> to vector<32x32xbf16>
    %cst_23 = arith.constant dense<0.000000e+00> : vector<32x64xf32>
    %25 = tpu.matmul %24, %0, %cst_23 {dimension_numbers = #tpu.dot_dimension_numbers<[1], [0], [0], [1], [0, 0, 1, 1], [], []>} : vector<32x32xbf16>, vector<32x64xbf16>, vector<32x64xf32> -> vector<32x64xf32>
    %26 = arith.addf %22, %25 : vector<32x64xf32>
    %cst_24 = arith.constant 5.000000e-01 : f32
    %27 = vector.broadcast %cst_24 : f32 to vector<32x64xf32>
    %28 = arith.mulf %27, %26 : vector<32x64xf32>
    %29 = math.tanh %28 : vector<32x64xf32>
    %cst_25 = arith.constant 5.000000e-01 : f32
    %30 = vector.broadcast %cst_25 : f32 to vector<32x64xf32>
    %31 = arith.mulf %30, %29 : vector<32x64xf32>
    %cst_26 = arith.constant 5.000000e-01 : f32
    %32 = vector.broadcast %cst_26 : f32 to vector<32x64xf32>
    %33 = arith.addf %31, %32 : vector<32x64xf32>
    %34 = vector.extract_strided_slice %33 {offsets = [0, 0], sizes = [32, 32], strides = [1, 1]} : vector<32x64xf32> to vector<32x32xf32>
    %35 = vector.extract_strided_slice %33 {offsets = [0, 32], sizes = [32, 32], strides = [1, 1]} : vector<32x64xf32> to vector<32x32xf32>
    %36 = arith.mulf %34, %21 : vector<32x32xf32>
    %37 = arith.truncf %36 : vector<32x32xf32> to vector<32x32xbf16>
    %cst_27 = arith.constant dense<0.000000e+00> : vector<32x32xf32>
    %38 = tpu.matmul %37, %1, %cst_27 {dimension_numbers = #tpu.dot_dimension_numbers<[1], [0], [0], [1], [0, 0, 1, 1], [], []>} : vector<32x32xbf16>, vector<32x32xbf16>, vector<32x32xf32> -> vector<32x32xf32>
    %39 = arith.addf %23, %38 : vector<32x32xf32>
    %40 = math.tanh %39 : vector<32x32xf32>
    %41 = arith.mulf %35, %21 : vector<32x32xf32>
    %cst_28 = arith.constant 1.000000e+00 : f32
    %42 = vector.broadcast %cst_28 : f32 to vector<32x32xf32>
    %43 = arith.subf %42, %35 : vector<32x32xf32>
    %44 = arith.mulf %43, %40 : vector<32x32xf32>
    %45 = arith.addf %41, %44 : vector<32x32xf32>
    %c32 = arith.constant 32 : index
    %c0_29 = arith.constant 0 : index
    %46 = vector.load %arg4[%c32, %c0_29] : memref<256x96xf32, #tpu.memory_space<vmem>>, vector<32x64xf32>
    %c32_30 = arith.constant 32 : index
    %c64_31 = arith.constant 64 : index
    %47 = vector.load %arg4[%c32_30, %c64_31] : memref<256x96xf32, #tpu.memory_space<vmem>>, vector<32x32xf32>
    %48 = arith.truncf %45 : vector<32x32xf32> to vector<32x32xbf16>
    %cst_32 = arith.constant dense<0.000000e+00> : vector<32x64xf32>
    %49 = tpu.matmul %48, %0, %cst_32 {dimension_numbers = #tpu.dot_dimension_numbers<[1], [0], [0], [1], [0, 0, 1, 1], [], []>} : vector<32x32xbf16>, vector<32x64xbf16>, vector<32x64xf32> -> vector<32x64xf32>
    %50 = arith.addf %46, %49 : vector<32x64xf32>
    %cst_33 = arith.constant 5.000000e-01 : f32
    %51 = vector.broadcast %cst_33 : f32 to vector<32x64xf32>
    %52 = arith.mulf %51, %50 : vector<32x64xf32>
    %53 = math.tanh %52 : vector<32x64xf32>
    %cst_34 = arith.constant 5.000000e-01 : f32
    %54 = vector.broadcast %cst_34 : f32 to vector<32x64xf32>
    %55 = arith.mulf %54, %53 : vector<32x64xf32>
    %cst_35 = arith.constant 5.000000e-01 : f32
    %56 = vector.broadcast %cst_35 : f32 to vector<32x64xf32>
    %57 = arith.addf %55, %56 : vector<32x64xf32>
    %58 = vector.extract_strided_slice %57 {offsets = [0, 0], sizes = [32, 32], strides = [1, 1]} : vector<32x64xf32> to vector<32x32xf32>
    %59 = vector.extract_strided_slice %57 {offsets = [0, 32], sizes = [32, 32], strides = [1, 1]} : vector<32x64xf32> to vector<32x32xf32>
    %60 = arith.mulf %58, %45 : vector<32x32xf32>
    %61 = arith.truncf %60 : vector<32x32xf32> to vector<32x32xbf16>
    %cst_36 = arith.constant dense<0.000000e+00> : vector<32x32xf32>
    %62 = tpu.matmul %61, %1, %cst_36 {dimension_numbers = #tpu.dot_dimension_numbers<[1], [0], [0], [1], [0, 0, 1, 1], [], []>} : vector<32x32xbf16>, vector<32x32xbf16>, vector<32x32xf32> -> vector<32x32xf32>
    %63 = arith.addf %47, %62 : vector<32x32xf32>
    %64 = math.tanh %63 : vector<32x32xf32>
    %65 = arith.mulf %59, %45 : vector<32x32xf32>
    %cst_37 = arith.constant 1.000000e+00 : f32
    %66 = vector.broadcast %cst_37 : f32 to vector<32x32xf32>
    %67 = arith.subf %66, %59 : vector<32x32xf32>
    %68 = arith.mulf %67, %64 : vector<32x32xf32>
    %69 = arith.addf %65, %68 : vector<32x32xf32>
    %c64_38 = arith.constant 64 : index
    %c0_39 = arith.constant 0 : index
    %70 = vector.load %arg4[%c64_38, %c0_39] : memref<256x96xf32, #tpu.memory_space<vmem>>, vector<32x64xf32>
    %c64_40 = arith.constant 64 : index
    %c64_41 = arith.constant 64 : index
    %71 = vector.load %arg4[%c64_40, %c64_41] : memref<256x96xf32, #tpu.memory_space<vmem>>, vector<32x32xf32>
    %72 = arith.truncf %69 : vector<32x32xf32> to vector<32x32xbf16>
    %cst_42 = arith.constant dense<0.000000e+00> : vector<32x64xf32>
    %73 = tpu.matmul %72, %0, %cst_42 {dimension_numbers = #tpu.dot_dimension_numbers<[1], [0], [0], [1], [0, 0, 1, 1], [], []>} : vector<32x32xbf16>, vector<32x64xbf16>, vector<32x64xf32> -> vector<32x64xf32>
    %74 = arith.addf %70, %73 : vector<32x64xf32>
    %cst_43 = arith.constant 5.000000e-01 : f32
    %75 = vector.broadcast %cst_43 : f32 to vector<32x64xf32>
    %76 = arith.mulf %75, %74 : vector<32x64xf32>
    %77 = math.tanh %76 : vector<32x64xf32>
    %cst_44 = arith.constant 5.000000e-01 : f32
    %78 = vector.broadcast %cst_44 : f32 to vector<32x64xf32>
    %79 = arith.mulf %78, %77 : vector<32x64xf32>
    %cst_45 = arith.constant 5.000000e-01 : f32
    %80 = vector.broadcast %cst_45 : f32 to vector<32x64xf32>
    %81 = arith.addf %79, %80 : vector<32x64xf32>
    %82 = vector.extract_strided_slice %81 {offsets = [0, 0], sizes = [32, 32], strides = [1, 1]} : vector<32x64xf32> to vector<32x32xf32>
    %83 = vector.extract_strided_slice %81 {offsets = [0, 32], sizes = [32, 32], strides = [1, 1]} : vector<32x64xf32> to vector<32x32xf32>
    %84 = arith.mulf %82, %69 : vector<32x32xf32>
    %85 = arith.truncf %84 : vector<32x32xf32> to vector<32x32xbf16>
    %cst_46 = arith.constant dense<0.000000e+00> : vector<32x32xf32>
    %86 = tpu.matmul %85, %1, %cst_46 {dimension_numbers = #tpu.dot_dimension_numbers<[1], [0], [0], [1], [0, 0, 1, 1], [], []>} : vector<32x32xbf16>, vector<32x32xbf16>, vector<32x32xf32> -> vector<32x32xf32>
    %87 = arith.addf %71, %86 : vector<32x32xf32>
    %88 = math.tanh %87 : vector<32x32xf32>
    %89 = arith.mulf %83, %69 : vector<32x32xf32>
    %cst_47 = arith.constant 1.000000e+00 : f32
    %90 = vector.broadcast %cst_47 : f32 to vector<32x32xf32>
    %91 = arith.subf %90, %83 : vector<32x32xf32>
    %92 = arith.mulf %91, %88 : vector<32x32xf32>
    %93 = arith.addf %89, %92 : vector<32x32xf32>
    %c96 = arith.constant 96 : index
    %c0_48 = arith.constant 0 : index
    %94 = vector.load %arg4[%c96, %c0_48] : memref<256x96xf32, #tpu.memory_space<vmem>>, vector<32x64xf32>
    %c96_49 = arith.constant 96 : index
    %c64_50 = arith.constant 64 : index
    %95 = vector.load %arg4[%c96_49, %c64_50] : memref<256x96xf32, #tpu.memory_space<vmem>>, vector<32x32xf32>
    %96 = arith.truncf %93 : vector<32x32xf32> to vector<32x32xbf16>
    %cst_51 = arith.constant dense<0.000000e+00> : vector<32x64xf32>
    %97 = tpu.matmul %96, %0, %cst_51 {dimension_numbers = #tpu.dot_dimension_numbers<[1], [0], [0], [1], [0, 0, 1, 1], [], []>} : vector<32x32xbf16>, vector<32x64xbf16>, vector<32x64xf32> -> vector<32x64xf32>
    %98 = arith.addf %94, %97 : vector<32x64xf32>
    %cst_52 = arith.constant 5.000000e-01 : f32
    %99 = vector.broadcast %cst_52 : f32 to vector<32x64xf32>
    %100 = arith.mulf %99, %98 : vector<32x64xf32>
    %101 = math.tanh %100 : vector<32x64xf32>
    %cst_53 = arith.constant 5.000000e-01 : f32
    %102 = vector.broadcast %cst_53 : f32 to vector<32x64xf32>
    %103 = arith.mulf %102, %101 : vector<32x64xf32>
    %cst_54 = arith.constant 5.000000e-01 : f32
    %104 = vector.broadcast %cst_54 : f32 to vector<32x64xf32>
    %105 = arith.addf %103, %104 : vector<32x64xf32>
    %106 = vector.extract_strided_slice %105 {offsets = [0, 0], sizes = [32, 32], strides = [1, 1]} : vector<32x64xf32> to vector<32x32xf32>
    %107 = vector.extract_strided_slice %105 {offsets = [0, 32], sizes = [32, 32], strides = [1, 1]} : vector<32x64xf32> to vector<32x32xf32>
    %108 = arith.mulf %106, %93 : vector<32x32xf32>
    %109 = arith.truncf %108 : vector<32x32xf32> to vector<32x32xbf16>
    %cst_55 = arith.constant dense<0.000000e+00> : vector<32x32xf32>
    %110 = tpu.matmul %109, %1, %cst_55 {dimension_numbers = #tpu.dot_dimension_numbers<[1], [0], [0], [1], [0, 0, 1, 1], [], []>} : vector<32x32xbf16>, vector<32x32xbf16>, vector<32x32xf32> -> vector<32x32xf32>
    %111 = arith.addf %95, %110 : vector<32x32xf32>
    %112 = math.tanh %111 : vector<32x32xf32>
    %113 = arith.mulf %107, %93 : vector<32x32xf32>
    %cst_56 = arith.constant 1.000000e+00 : f32
    %114 = vector.broadcast %cst_56 : f32 to vector<32x32xf32>
    %115 = arith.subf %114, %107 : vector<32x32xf32>
    %116 = arith.mulf %115, %112 : vector<32x32xf32>
    %117 = arith.addf %113, %116 : vector<32x32xf32>
    %c128_57 = arith.constant 128 : index
    %c0_58 = arith.constant 0 : index
    %118 = vector.load %arg4[%c128_57, %c0_58] : memref<256x96xf32, #tpu.memory_space<vmem>>, vector<32x64xf32>
    %c128_59 = arith.constant 128 : index
    %c64_60 = arith.constant 64 : index
    %119 = vector.load %arg4[%c128_59, %c64_60] : memref<256x96xf32, #tpu.memory_space<vmem>>, vector<32x32xf32>
    %120 = arith.truncf %117 : vector<32x32xf32> to vector<32x32xbf16>
    %cst_61 = arith.constant dense<0.000000e+00> : vector<32x64xf32>
    %121 = tpu.matmul %120, %0, %cst_61 {dimension_numbers = #tpu.dot_dimension_numbers<[1], [0], [0], [1], [0, 0, 1, 1], [], []>} : vector<32x32xbf16>, vector<32x64xbf16>, vector<32x64xf32> -> vector<32x64xf32>
    %122 = arith.addf %118, %121 : vector<32x64xf32>
    %cst_62 = arith.constant 5.000000e-01 : f32
    %123 = vector.broadcast %cst_62 : f32 to vector<32x64xf32>
    %124 = arith.mulf %123, %122 : vector<32x64xf32>
    %125 = math.tanh %124 : vector<32x64xf32>
    %cst_63 = arith.constant 5.000000e-01 : f32
    %126 = vector.broadcast %cst_63 : f32 to vector<32x64xf32>
    %127 = arith.mulf %126, %125 : vector<32x64xf32>
    %cst_64 = arith.constant 5.000000e-01 : f32
    %128 = vector.broadcast %cst_64 : f32 to vector<32x64xf32>
    %129 = arith.addf %127, %128 : vector<32x64xf32>
    %130 = vector.extract_strided_slice %129 {offsets = [0, 0], sizes = [32, 32], strides = [1, 1]} : vector<32x64xf32> to vector<32x32xf32>
    %131 = vector.extract_strided_slice %129 {offsets = [0, 32], sizes = [32, 32], strides = [1, 1]} : vector<32x64xf32> to vector<32x32xf32>
    %132 = arith.mulf %130, %117 : vector<32x32xf32>
    %133 = arith.truncf %132 : vector<32x32xf32> to vector<32x32xbf16>
    %cst_65 = arith.constant dense<0.000000e+00> : vector<32x32xf32>
    %134 = tpu.matmul %133, %1, %cst_65 {dimension_numbers = #tpu.dot_dimension_numbers<[1], [0], [0], [1], [0, 0, 1, 1], [], []>} : vector<32x32xbf16>, vector<32x32xbf16>, vector<32x32xf32> -> vector<32x32xf32>
    %135 = arith.addf %119, %134 : vector<32x32xf32>
    %136 = math.tanh %135 : vector<32x32xf32>
    %137 = arith.mulf %131, %117 : vector<32x32xf32>
    %cst_66 = arith.constant 1.000000e+00 : f32
    %138 = vector.broadcast %cst_66 : f32 to vector<32x32xf32>
    %139 = arith.subf %138, %131 : vector<32x32xf32>
    %140 = arith.mulf %139, %136 : vector<32x32xf32>
    %141 = arith.addf %137, %140 : vector<32x32xf32>
    %c160 = arith.constant 160 : index
    %c0_67 = arith.constant 0 : index
    %142 = vector.load %arg4[%c160, %c0_67] : memref<256x96xf32, #tpu.memory_space<vmem>>, vector<32x64xf32>
    %c160_68 = arith.constant 160 : index
    %c64_69 = arith.constant 64 : index
    %143 = vector.load %arg4[%c160_68, %c64_69] : memref<256x96xf32, #tpu.memory_space<vmem>>, vector<32x32xf32>
    %144 = arith.truncf %141 : vector<32x32xf32> to vector<32x32xbf16>
    %cst_70 = arith.constant dense<0.000000e+00> : vector<32x64xf32>
    %145 = tpu.matmul %144, %0, %cst_70 {dimension_numbers = #tpu.dot_dimension_numbers<[1], [0], [0], [1], [0, 0, 1, 1], [], []>} : vector<32x32xbf16>, vector<32x64xbf16>, vector<32x64xf32> -> vector<32x64xf32>
    %146 = arith.addf %142, %145 : vector<32x64xf32>
    %cst_71 = arith.constant 5.000000e-01 : f32
    %147 = vector.broadcast %cst_71 : f32 to vector<32x64xf32>
    %148 = arith.mulf %147, %146 : vector<32x64xf32>
    %149 = math.tanh %148 : vector<32x64xf32>
    %cst_72 = arith.constant 5.000000e-01 : f32
    %150 = vector.broadcast %cst_72 : f32 to vector<32x64xf32>
    %151 = arith.mulf %150, %149 : vector<32x64xf32>
    %cst_73 = arith.constant 5.000000e-01 : f32
    %152 = vector.broadcast %cst_73 : f32 to vector<32x64xf32>
    %153 = arith.addf %151, %152 : vector<32x64xf32>
    %154 = vector.extract_strided_slice %153 {offsets = [0, 0], sizes = [32, 32], strides = [1, 1]} : vector<32x64xf32> to vector<32x32xf32>
    %155 = vector.extract_strided_slice %153 {offsets = [0, 32], sizes = [32, 32], strides = [1, 1]} : vector<32x64xf32> to vector<32x32xf32>
    %156 = arith.mulf %154, %141 : vector<32x32xf32>
    %157 = arith.truncf %156 : vector<32x32xf32> to vector<32x32xbf16>
    %cst_74 = arith.constant dense<0.000000e+00> : vector<32x32xf32>
    %158 = tpu.matmul %157, %1, %cst_74 {dimension_numbers = #tpu.dot_dimension_numbers<[1], [0], [0], [1], [0, 0, 1, 1], [], []>} : vector<32x32xbf16>, vector<32x32xbf16>, vector<32x32xf32> -> vector<32x32xf32>
    %159 = arith.addf %143, %158 : vector<32x32xf32>
    %160 = math.tanh %159 : vector<32x32xf32>
    %161 = arith.mulf %155, %141 : vector<32x32xf32>
    %cst_75 = arith.constant 1.000000e+00 : f32
    %162 = vector.broadcast %cst_75 : f32 to vector<32x32xf32>
    %163 = arith.subf %162, %155 : vector<32x32xf32>
    %164 = arith.mulf %163, %160 : vector<32x32xf32>
    %165 = arith.addf %161, %164 : vector<32x32xf32>
    %c192 = arith.constant 192 : index
    %c0_76 = arith.constant 0 : index
    %166 = vector.load %arg4[%c192, %c0_76] : memref<256x96xf32, #tpu.memory_space<vmem>>, vector<32x64xf32>
    %c192_77 = arith.constant 192 : index
    %c64_78 = arith.constant 64 : index
    %167 = vector.load %arg4[%c192_77, %c64_78] : memref<256x96xf32, #tpu.memory_space<vmem>>, vector<32x32xf32>
    %168 = arith.truncf %165 : vector<32x32xf32> to vector<32x32xbf16>
    %cst_79 = arith.constant dense<0.000000e+00> : vector<32x64xf32>
    %169 = tpu.matmul %168, %0, %cst_79 {dimension_numbers = #tpu.dot_dimension_numbers<[1], [0], [0], [1], [0, 0, 1, 1], [], []>} : vector<32x32xbf16>, vector<32x64xbf16>, vector<32x64xf32> -> vector<32x64xf32>
    %170 = arith.addf %166, %169 : vector<32x64xf32>
    %cst_80 = arith.constant 5.000000e-01 : f32
    %171 = vector.broadcast %cst_80 : f32 to vector<32x64xf32>
    %172 = arith.mulf %171, %170 : vector<32x64xf32>
    %173 = math.tanh %172 : vector<32x64xf32>
    %cst_81 = arith.constant 5.000000e-01 : f32
    %174 = vector.broadcast %cst_81 : f32 to vector<32x64xf32>
    %175 = arith.mulf %174, %173 : vector<32x64xf32>
    %cst_82 = arith.constant 5.000000e-01 : f32
    %176 = vector.broadcast %cst_82 : f32 to vector<32x64xf32>
    %177 = arith.addf %175, %176 : vector<32x64xf32>
    %178 = vector.extract_strided_slice %177 {offsets = [0, 0], sizes = [32, 32], strides = [1, 1]} : vector<32x64xf32> to vector<32x32xf32>
    %179 = vector.extract_strided_slice %177 {offsets = [0, 32], sizes = [32, 32], strides = [1, 1]} : vector<32x64xf32> to vector<32x32xf32>
    %180 = arith.mulf %178, %165 : vector<32x32xf32>
    %181 = arith.truncf %180 : vector<32x32xf32> to vector<32x32xbf16>
    %cst_83 = arith.constant dense<0.000000e+00> : vector<32x32xf32>
    %182 = tpu.matmul %181, %1, %cst_83 {dimension_numbers = #tpu.dot_dimension_numbers<[1], [0], [0], [1], [0, 0, 1, 1], [], []>} : vector<32x32xbf16>, vector<32x32xbf16>, vector<32x32xf32> -> vector<32x32xf32>
    %183 = arith.addf %167, %182 : vector<32x32xf32>
    %184 = math.tanh %183 : vector<32x32xf32>
    %185 = arith.mulf %179, %165 : vector<32x32xf32>
    %cst_84 = arith.constant 1.000000e+00 : f32
    %186 = vector.broadcast %cst_84 : f32 to vector<32x32xf32>
    %187 = arith.subf %186, %179 : vector<32x32xf32>
    %188 = arith.mulf %187, %184 : vector<32x32xf32>
    %189 = arith.addf %185, %188 : vector<32x32xf32>
    %c224 = arith.constant 224 : index
    %c0_85 = arith.constant 0 : index
    %190 = vector.load %arg4[%c224, %c0_85] : memref<256x96xf32, #tpu.memory_space<vmem>>, vector<32x64xf32>
    %c224_86 = arith.constant 224 : index
    %c64_87 = arith.constant 64 : index
    %191 = vector.load %arg4[%c224_86, %c64_87] : memref<256x96xf32, #tpu.memory_space<vmem>>, vector<32x32xf32>
    %192 = arith.truncf %189 : vector<32x32xf32> to vector<32x32xbf16>
    %cst_88 = arith.constant dense<0.000000e+00> : vector<32x64xf32>
    %193 = tpu.matmul %192, %0, %cst_88 {dimension_numbers = #tpu.dot_dimension_numbers<[1], [0], [0], [1], [0, 0, 1, 1], [], []>} : vector<32x32xbf16>, vector<32x64xbf16>, vector<32x64xf32> -> vector<32x64xf32>
    %194 = arith.addf %190, %193 : vector<32x64xf32>
    %cst_89 = arith.constant 5.000000e-01 : f32
    %195 = vector.broadcast %cst_89 : f32 to vector<32x64xf32>
    %196 = arith.mulf %195, %194 : vector<32x64xf32>
    %197 = math.tanh %196 : vector<32x64xf32>
    %cst_90 = arith.constant 5.000000e-01 : f32
    %198 = vector.broadcast %cst_90 : f32 to vector<32x64xf32>
    %199 = arith.mulf %198, %197 : vector<32x64xf32>
    %cst_91 = arith.constant 5.000000e-01 : f32
    %200 = vector.broadcast %cst_91 : f32 to vector<32x64xf32>
    %201 = arith.addf %199, %200 : vector<32x64xf32>
    %202 = vector.extract_strided_slice %201 {offsets = [0, 0], sizes = [32, 32], strides = [1, 1]} : vector<32x64xf32> to vector<32x32xf32>
    %203 = vector.extract_strided_slice %201 {offsets = [0, 32], sizes = [32, 32], strides = [1, 1]} : vector<32x64xf32> to vector<32x32xf32>
    %204 = arith.mulf %202, %189 : vector<32x32xf32>
    %205 = arith.truncf %204 : vector<32x32xf32> to vector<32x32xbf16>
    %cst_92 = arith.constant dense<0.000000e+00> : vector<32x32xf32>
    %206 = tpu.matmul %205, %1, %cst_92 {dimension_numbers = #tpu.dot_dimension_numbers<[1], [0], [0], [1], [0, 0, 1, 1], [], []>} : vector<32x32xbf16>, vector<32x32xbf16>, vector<32x32xf32> -> vector<32x32xf32>
    %207 = arith.addf %191, %206 : vector<32x32xf32>
    %208 = math.tanh %207 : vector<32x32xf32>
    %209 = arith.mulf %203, %189 : vector<32x32xf32>
    %cst_93 = arith.constant 1.000000e+00 : f32
    %210 = vector.broadcast %cst_93 : f32 to vector<32x32xf32>
    %211 = arith.subf %210, %203 : vector<32x32xf32>
    %212 = arith.mulf %211, %208 : vector<32x32xf32>
    %213 = arith.addf %209, %212 : vector<32x32xf32>
    %214 = arith.truncf %213 : vector<32x32xf32> to vector<32x32xbf16>
    %cst_94 = arith.constant dense<0.000000e+00> : vector<32x32xf32>
    %215 = tpu.matmul %214, %2, %cst_94 {dimension_numbers = #tpu.dot_dimension_numbers<[1], [0], [0], [1], [0, 0, 1, 1], [], []>} : vector<32x32xbf16>, vector<32x32xbf16>, vector<32x32xf32> -> vector<32x32xf32>
    %216 = vector.broadcast %9 : vector<1x32xf32> to vector<32x32xf32>
    %217 = arith.addf %215, %216 : vector<32x32xf32>
    %cst_95 = arith.constant 5.000000e-01 : f32
    %218 = vector.broadcast %cst_95 : f32 to vector<32x32xf32>
    %219 = arith.mulf %218, %217 : vector<32x32xf32>
    %220 = math.tanh %219 : vector<32x32xf32>
    %cst_96 = arith.constant 5.000000e-01 : f32
    %221 = vector.broadcast %cst_96 : f32 to vector<32x32xf32>
    %222 = arith.mulf %221, %220 : vector<32x32xf32>
    %cst_97 = arith.constant 5.000000e-01 : f32
    %223 = vector.broadcast %cst_97 : f32 to vector<32x32xf32>
    %224 = arith.addf %222, %223 : vector<32x32xf32>
    %225 = arith.truncf %224 : vector<32x32xf32> to vector<32x32xbf16>
    %cst_98 = arith.constant dense<0.000000e+00> : vector<32x96xf32>
    %226 = tpu.matmul %225, %3, %cst_98 {dimension_numbers = #tpu.dot_dimension_numbers<[1], [0], [0], [1], [0, 0, 1, 1], [], []>} : vector<32x32xbf16>, vector<32x96xbf16>, vector<32x96xf32> -> vector<32x96xf32>
    %227 = vector.broadcast %10 : vector<1x96xf32> to vector<32x96xf32>
    %228 = arith.addf %226, %227 : vector<32x96xf32>
    %229 = vector.extract_strided_slice %228 {offsets = [0, 0], sizes = [32, 64], strides = [1, 1]} : vector<32x96xf32> to vector<32x64xf32>
    %230 = vector.extract_strided_slice %228 {offsets = [0, 64], sizes = [32, 32], strides = [1, 1]} : vector<32x96xf32> to vector<32x32xf32>
    %231 = arith.truncf %213 : vector<32x32xf32> to vector<32x32xbf16>
    %cst_99 = arith.constant dense<0.000000e+00> : vector<32x64xf32>
    %232 = tpu.matmul %231, %4, %cst_99 {dimension_numbers = #tpu.dot_dimension_numbers<[1], [0], [0], [1], [0, 0, 1, 1], [], []>} : vector<32x32xbf16>, vector<32x64xbf16>, vector<32x64xf32> -> vector<32x64xf32>
    %233 = arith.addf %229, %232 : vector<32x64xf32>
    %cst_100 = arith.constant 5.000000e-01 : f32
    %234 = vector.broadcast %cst_100 : f32 to vector<32x64xf32>
    %235 = arith.mulf %234, %233 : vector<32x64xf32>
    %236 = math.tanh %235 : vector<32x64xf32>
    %cst_101 = arith.constant 5.000000e-01 : f32
    %237 = vector.broadcast %cst_101 : f32 to vector<32x64xf32>
    %238 = arith.mulf %237, %236 : vector<32x64xf32>
    %cst_102 = arith.constant 5.000000e-01 : f32
    %239 = vector.broadcast %cst_102 : f32 to vector<32x64xf32>
    %240 = arith.addf %238, %239 : vector<32x64xf32>
    %241 = vector.extract_strided_slice %240 {offsets = [0, 0], sizes = [32, 32], strides = [1, 1]} : vector<32x64xf32> to vector<32x32xf32>
    %242 = vector.extract_strided_slice %240 {offsets = [0, 32], sizes = [32, 32], strides = [1, 1]} : vector<32x64xf32> to vector<32x32xf32>
    %243 = arith.mulf %241, %213 : vector<32x32xf32>
    %244 = arith.truncf %243 : vector<32x32xf32> to vector<32x32xbf16>
    %cst_103 = arith.constant dense<0.000000e+00> : vector<32x32xf32>
    %245 = tpu.matmul %244, %5, %cst_103 {dimension_numbers = #tpu.dot_dimension_numbers<[1], [0], [0], [1], [0, 0, 1, 1], [], []>} : vector<32x32xbf16>, vector<32x32xbf16>, vector<32x32xf32> -> vector<32x32xf32>
    %246 = arith.addf %230, %245 : vector<32x32xf32>
    %247 = math.tanh %246 : vector<32x32xf32>
    %248 = arith.mulf %242, %213 : vector<32x32xf32>
    %cst_104 = arith.constant 1.000000e+00 : f32
    %249 = vector.broadcast %cst_104 : f32 to vector<32x32xf32>
    %250 = arith.subf %249, %242 : vector<32x32xf32>
    %251 = arith.mulf %250, %247 : vector<32x32xf32>
    %252 = arith.addf %248, %251 : vector<32x32xf32>
    %253 = arith.truncf %252 : vector<32x32xf32> to vector<32x32xbf16>
    %cst_105 = arith.constant dense<0.000000e+00> : vector<32x32xf32>
    %254 = tpu.matmul %253, %6, %cst_105 {dimension_numbers = #tpu.dot_dimension_numbers<[1], [0], [0], [1], [0, 0, 1, 1], [], []>} : vector<32x32xbf16>, vector<32x32xbf16>, vector<32x32xf32> -> vector<32x32xf32>
    %255 = vector.broadcast %11 : vector<1x32xf32> to vector<32x32xf32>
    %256 = arith.addf %254, %255 : vector<32x32xf32>
    %cst_106 = arith.constant 5.000000e-01 : f32
    %257 = vector.broadcast %cst_106 : f32 to vector<32x32xf32>
    %258 = arith.mulf %257, %256 : vector<32x32xf32>
    %259 = math.tanh %258 : vector<32x32xf32>
    %cst_107 = arith.constant 5.000000e-01 : f32
    %260 = vector.broadcast %cst_107 : f32 to vector<32x32xf32>
    %261 = arith.mulf %260, %259 : vector<32x32xf32>
    %cst_108 = arith.constant 5.000000e-01 : f32
    %262 = vector.broadcast %cst_108 : f32 to vector<32x32xf32>
    %263 = arith.addf %261, %262 : vector<32x32xf32>
    %264 = vector.broadcast %12 : vector<1x32xf32> to vector<32x32xf32>
    %265 = arith.mulf %263, %264 : vector<32x32xf32>
    %cst_109 = arith.constant dense<0.000000e+00> : vector<32xf32>
    %266 = vector.multi_reduction <add>, %265, %cst_109 [1] : vector<32x32xf32> to vector<32xf32>
    %267 = vector.shape_cast %266 : vector<32xf32> to vector<32x1xf32>
    %268 = vector.broadcast %13 : vector<1x1xf32> to vector<32x1xf32>
    %269 = arith.addf %267, %268 : vector<32x1xf32>
    %270 = arith.truncf %252 : vector<32x32xf32> to vector<32x32xbf16>
    %cst_110 = arith.constant dense<0.000000e+00> : vector<32x64xf32>
    %271 = tpu.matmul %270, %4, %cst_110 {dimension_numbers = #tpu.dot_dimension_numbers<[1], [0], [0], [1], [0, 0, 1, 1], [], []>} : vector<32x32xbf16>, vector<32x64xbf16>, vector<32x64xf32> -> vector<32x64xf32>
    %272 = arith.addf %229, %271 : vector<32x64xf32>
    %cst_111 = arith.constant 5.000000e-01 : f32
    %273 = vector.broadcast %cst_111 : f32 to vector<32x64xf32>
    %274 = arith.mulf %273, %272 : vector<32x64xf32>
    %275 = math.tanh %274 : vector<32x64xf32>
    %cst_112 = arith.constant 5.000000e-01 : f32
    %276 = vector.broadcast %cst_112 : f32 to vector<32x64xf32>
    %277 = arith.mulf %276, %275 : vector<32x64xf32>
    %cst_113 = arith.constant 5.000000e-01 : f32
    %278 = vector.broadcast %cst_113 : f32 to vector<32x64xf32>
    %279 = arith.addf %277, %278 : vector<32x64xf32>
    %280 = vector.extract_strided_slice %279 {offsets = [0, 0], sizes = [32, 32], strides = [1, 1]} : vector<32x64xf32> to vector<32x32xf32>
    %281 = vector.extract_strided_slice %279 {offsets = [0, 32], sizes = [32, 32], strides = [1, 1]} : vector<32x64xf32> to vector<32x32xf32>
    %282 = arith.mulf %280, %252 : vector<32x32xf32>
    %283 = arith.truncf %282 : vector<32x32xf32> to vector<32x32xbf16>
    %cst_114 = arith.constant dense<0.000000e+00> : vector<32x32xf32>
    %284 = tpu.matmul %283, %5, %cst_114 {dimension_numbers = #tpu.dot_dimension_numbers<[1], [0], [0], [1], [0, 0, 1, 1], [], []>} : vector<32x32xbf16>, vector<32x32xbf16>, vector<32x32xf32> -> vector<32x32xf32>
    %285 = arith.addf %230, %284 : vector<32x32xf32>
    %286 = math.tanh %285 : vector<32x32xf32>
    %287 = arith.mulf %281, %252 : vector<32x32xf32>
    %cst_115 = arith.constant 1.000000e+00 : f32
    %288 = vector.broadcast %cst_115 : f32 to vector<32x32xf32>
    %289 = arith.subf %288, %281 : vector<32x32xf32>
    %290 = arith.mulf %289, %286 : vector<32x32xf32>
    %291 = arith.addf %287, %290 : vector<32x32xf32>
    %292 = arith.truncf %291 : vector<32x32xf32> to vector<32x32xbf16>
    %cst_116 = arith.constant dense<0.000000e+00> : vector<32x32xf32>
    %293 = tpu.matmul %292, %6, %cst_116 {dimension_numbers = #tpu.dot_dimension_numbers<[1], [0], [0], [1], [0, 0, 1, 1], [], []>} : vector<32x32xbf16>, vector<32x32xbf16>, vector<32x32xf32> -> vector<32x32xf32>
    %294 = vector.broadcast %11 : vector<1x32xf32> to vector<32x32xf32>
    %295 = arith.addf %293, %294 : vector<32x32xf32>
    %cst_117 = arith.constant 5.000000e-01 : f32
    %296 = vector.broadcast %cst_117 : f32 to vector<32x32xf32>
    %297 = arith.mulf %296, %295 : vector<32x32xf32>
    %298 = math.tanh %297 : vector<32x32xf32>
    %cst_118 = arith.constant 5.000000e-01 : f32
    %299 = vector.broadcast %cst_118 : f32 to vector<32x32xf32>
    %300 = arith.mulf %299, %298 : vector<32x32xf32>
    %cst_119 = arith.constant 5.000000e-01 : f32
    %301 = vector.broadcast %cst_119 : f32 to vector<32x32xf32>
    %302 = arith.addf %300, %301 : vector<32x32xf32>
    %303 = vector.broadcast %12 : vector<1x32xf32> to vector<32x32xf32>
    %304 = arith.mulf %302, %303 : vector<32x32xf32>
    %cst_120 = arith.constant dense<0.000000e+00> : vector<32xf32>
    %305 = vector.multi_reduction <add>, %304, %cst_120 [1] : vector<32x32xf32> to vector<32xf32>
    %306 = vector.shape_cast %305 : vector<32xf32> to vector<32x1xf32>
    %307 = vector.broadcast %13 : vector<1x1xf32> to vector<32x1xf32>
    %308 = arith.addf %306, %307 : vector<32x1xf32>
    %309 = arith.truncf %291 : vector<32x32xf32> to vector<32x32xbf16>
    %cst_121 = arith.constant dense<0.000000e+00> : vector<32x64xf32>
    %310 = tpu.matmul %309, %4, %cst_121 {dimension_numbers = #tpu.dot_dimension_numbers<[1], [0], [0], [1], [0, 0, 1, 1], [], []>} : vector<32x32xbf16>, vector<32x64xbf16>, vector<32x64xf32> -> vector<32x64xf32>
    %311 = arith.addf %229, %310 : vector<32x64xf32>
    %cst_122 = arith.constant 5.000000e-01 : f32
    %312 = vector.broadcast %cst_122 : f32 to vector<32x64xf32>
    %313 = arith.mulf %312, %311 : vector<32x64xf32>
    %314 = math.tanh %313 : vector<32x64xf32>
    %cst_123 = arith.constant 5.000000e-01 : f32
    %315 = vector.broadcast %cst_123 : f32 to vector<32x64xf32>
    %316 = arith.mulf %315, %314 : vector<32x64xf32>
    %cst_124 = arith.constant 5.000000e-01 : f32
    %317 = vector.broadcast %cst_124 : f32 to vector<32x64xf32>
    %318 = arith.addf %316, %317 : vector<32x64xf32>
    %319 = vector.extract_strided_slice %318 {offsets = [0, 0], sizes = [32, 32], strides = [1, 1]} : vector<32x64xf32> to vector<32x32xf32>
    %320 = vector.extract_strided_slice %318 {offsets = [0, 32], sizes = [32, 32], strides = [1, 1]} : vector<32x64xf32> to vector<32x32xf32>
    %321 = arith.mulf %319, %291 : vector<32x32xf32>
    %322 = arith.truncf %321 : vector<32x32xf32> to vector<32x32xbf16>
    %cst_125 = arith.constant dense<0.000000e+00> : vector<32x32xf32>
    %323 = tpu.matmul %322, %5, %cst_125 {dimension_numbers = #tpu.dot_dimension_numbers<[1], [0], [0], [1], [0, 0, 1, 1], [], []>} : vector<32x32xbf16>, vector<32x32xbf16>, vector<32x32xf32> -> vector<32x32xf32>
    %324 = arith.addf %230, %323 : vector<32x32xf32>
    %325 = math.tanh %324 : vector<32x32xf32>
    %326 = arith.mulf %320, %291 : vector<32x32xf32>
    %cst_126 = arith.constant 1.000000e+00 : f32
    %327 = vector.broadcast %cst_126 : f32 to vector<32x32xf32>
    %328 = arith.subf %327, %320 : vector<32x32xf32>
    %329 = arith.mulf %328, %325 : vector<32x32xf32>
    %330 = arith.addf %326, %329 : vector<32x32xf32>
    %331 = arith.truncf %330 : vector<32x32xf32> to vector<32x32xbf16>
    %cst_127 = arith.constant dense<0.000000e+00> : vector<32x32xf32>
    %332 = tpu.matmul %331, %6, %cst_127 {dimension_numbers = #tpu.dot_dimension_numbers<[1], [0], [0], [1], [0, 0, 1, 1], [], []>} : vector<32x32xbf16>, vector<32x32xbf16>, vector<32x32xf32> -> vector<32x32xf32>
    %333 = vector.broadcast %11 : vector<1x32xf32> to vector<32x32xf32>
    %334 = arith.addf %332, %333 : vector<32x32xf32>
    %cst_128 = arith.constant 5.000000e-01 : f32
    %335 = vector.broadcast %cst_128 : f32 to vector<32x32xf32>
    %336 = arith.mulf %335, %334 : vector<32x32xf32>
    %337 = math.tanh %336 : vector<32x32xf32>
    %cst_129 = arith.constant 5.000000e-01 : f32
    %338 = vector.broadcast %cst_129 : f32 to vector<32x32xf32>
    %339 = arith.mulf %338, %337 : vector<32x32xf32>
    %cst_130 = arith.constant 5.000000e-01 : f32
    %340 = vector.broadcast %cst_130 : f32 to vector<32x32xf32>
    %341 = arith.addf %339, %340 : vector<32x32xf32>
    %342 = vector.broadcast %12 : vector<1x32xf32> to vector<32x32xf32>
    %343 = arith.mulf %341, %342 : vector<32x32xf32>
    %cst_131 = arith.constant dense<0.000000e+00> : vector<32xf32>
    %344 = vector.multi_reduction <add>, %343, %cst_131 [1] : vector<32x32xf32> to vector<32xf32>
    %345 = vector.shape_cast %344 : vector<32xf32> to vector<32x1xf32>
    %346 = vector.broadcast %13 : vector<1x1xf32> to vector<32x1xf32>
    %347 = arith.addf %345, %346 : vector<32x1xf32>
    %348 = arith.truncf %330 : vector<32x32xf32> to vector<32x32xbf16>
    %cst_132 = arith.constant dense<0.000000e+00> : vector<32x64xf32>
    %349 = tpu.matmul %348, %4, %cst_132 {dimension_numbers = #tpu.dot_dimension_numbers<[1], [0], [0], [1], [0, 0, 1, 1], [], []>} : vector<32x32xbf16>, vector<32x64xbf16>, vector<32x64xf32> -> vector<32x64xf32>
    %350 = arith.addf %229, %349 : vector<32x64xf32>
    %cst_133 = arith.constant 5.000000e-01 : f32
    %351 = vector.broadcast %cst_133 : f32 to vector<32x64xf32>
    %352 = arith.mulf %351, %350 : vector<32x64xf32>
    %353 = math.tanh %352 : vector<32x64xf32>
    %cst_134 = arith.constant 5.000000e-01 : f32
    %354 = vector.broadcast %cst_134 : f32 to vector<32x64xf32>
    %355 = arith.mulf %354, %353 : vector<32x64xf32>
    %cst_135 = arith.constant 5.000000e-01 : f32
    %356 = vector.broadcast %cst_135 : f32 to vector<32x64xf32>
    %357 = arith.addf %355, %356 : vector<32x64xf32>
    %358 = vector.extract_strided_slice %357 {offsets = [0, 0], sizes = [32, 32], strides = [1, 1]} : vector<32x64xf32> to vector<32x32xf32>
    %359 = vector.extract_strided_slice %357 {offsets = [0, 32], sizes = [32, 32], strides = [1, 1]} : vector<32x64xf32> to vector<32x32xf32>
    %360 = arith.mulf %358, %330 : vector<32x32xf32>
    %361 = arith.truncf %360 : vector<32x32xf32> to vector<32x32xbf16>
    %cst_136 = arith.constant dense<0.000000e+00> : vector<32x32xf32>
    %362 = tpu.matmul %361, %5, %cst_136 {dimension_numbers = #tpu.dot_dimension_numbers<[1], [0], [0], [1], [0, 0, 1, 1], [], []>} : vector<32x32xbf16>, vector<32x32xbf16>, vector<32x32xf32> -> vector<32x32xf32>
    %363 = arith.addf %230, %362 : vector<32x32xf32>
    %364 = math.tanh %363 : vector<32x32xf32>
    %365 = arith.mulf %359, %330 : vector<32x32xf32>
    %cst_137 = arith.constant 1.000000e+00 : f32
    %366 = vector.broadcast %cst_137 : f32 to vector<32x32xf32>
    %367 = arith.subf %366, %359 : vector<32x32xf32>
    %368 = arith.mulf %367, %364 : vector<32x32xf32>
    %369 = arith.addf %365, %368 : vector<32x32xf32>
    %370 = arith.truncf %369 : vector<32x32xf32> to vector<32x32xbf16>
    %cst_138 = arith.constant dense<0.000000e+00> : vector<32x32xf32>
    %371 = tpu.matmul %370, %6, %cst_138 {dimension_numbers = #tpu.dot_dimension_numbers<[1], [0], [0], [1], [0, 0, 1, 1], [], []>} : vector<32x32xbf16>, vector<32x32xbf16>, vector<32x32xf32> -> vector<32x32xf32>
    %372 = vector.broadcast %11 : vector<1x32xf32> to vector<32x32xf32>
    %373 = arith.addf %371, %372 : vector<32x32xf32>
    %cst_139 = arith.constant 5.000000e-01 : f32
    %374 = vector.broadcast %cst_139 : f32 to vector<32x32xf32>
    %375 = arith.mulf %374, %373 : vector<32x32xf32>
    %376 = math.tanh %375 : vector<32x32xf32>
    %cst_140 = arith.constant 5.000000e-01 : f32
    %377 = vector.broadcast %cst_140 : f32 to vector<32x32xf32>
    %378 = arith.mulf %377, %376 : vector<32x32xf32>
    %cst_141 = arith.constant 5.000000e-01 : f32
    %379 = vector.broadcast %cst_141 : f32 to vector<32x32xf32>
    %380 = arith.addf %378, %379 : vector<32x32xf32>
    %381 = vector.broadcast %12 : vector<1x32xf32> to vector<32x32xf32>
    %382 = arith.mulf %380, %381 : vector<32x32xf32>
    %cst_142 = arith.constant dense<0.000000e+00> : vector<32xf32>
    %383 = vector.multi_reduction <add>, %382, %cst_142 [1] : vector<32x32xf32> to vector<32xf32>
    %384 = vector.shape_cast %383 : vector<32xf32> to vector<32x1xf32>
    %385 = vector.broadcast %13 : vector<1x1xf32> to vector<32x1xf32>
    %386 = arith.addf %384, %385 : vector<32x1xf32>
    %387 = tpu.concatenate %269, %308, %347, %386 in 1 : vector<32x1xf32>, vector<32x1xf32>, vector<32x1xf32>, vector<32x1xf32> -> vector<32x4xf32>
    %c0_143 = arith.constant 0 : index
    %c0_144 = arith.constant 0 : index
    %388 = vector.load %arg3[%c0_143, %c0_144] : memref<32x4xf32, #tpu.memory_space<vmem>>, vector<32x4xf32>
    tpu.vector_store %arg3[%c0_143, %c0_144], %387 {strides = array<i32>} : memref<32x4xf32, #tpu.memory_space<vmem>>, vector<32x4xf32>,
    return
  }
}

</mosaic_0001>

<llo_original>
// kernel: enc_dec_linear_forward.1
$region0: #{enc_dec_linear_forward.1}
  #allocation0 [shape = 'u32[]', space=smem, size = 0x4, offset = 0x4, fixed_abs, tag = 'smem constant byte address 0x4 - core index']
  #allocation1 [shape = 'u32[144,128]{1,0:T(1,128)}', space=vmem, size = 0x12000, scoped, tag = 'internal scratch']
  #allocation2 [shape = 'f32[256,96]{1,0:T(8,128)}', space=vmem, size = 0x20000, scoped, tag = 'scratch operand']
  %s0 = inlined_call_operand.vmem [shape: f32[256,1], index: 0, kind: input, shape index: {}]
  %s1 = inlined_call_operand.vmem [shape: bf16[32,544], index: 1, kind: input, shape index: {}]
  %s2 = inlined_call_operand.vmem [shape: f32[8,96], index: 2, kind: input, shape index: {}]
  %s3 = inlined_call_operand.vmem [shape: f32[32,4], index: 3, kind: output, shape index: {}]
  %s4 = sld [smem:[#allocation0]]
  $region22: #{enc_dec_linear_forward.1} parent=0
    _
  %s6 = ssub.s32 1, %s4
  %s7 = scalar_select 0, %s6, %s4
  // Predicated region
  $region2: #{enc_dec_linear_forward.1} parent=0 // pred_check
    _
  $region3: #{enc_dec_linear_forward.1} parent=0 // pred_check_branch
    %9 = sbr.rel (0) target = $region5
  $region4: #{enc_dec_linear_forward.1} parent=0 // pred_region
    _
  $region5: #{enc_dec_linear_forward.1} parent=0 // pred_fallthru
    _
  // Predicated region
  $region6: #{enc_dec_linear_forward.1} parent=0 // pred_check
    _
  $region7: #{enc_dec_linear_forward.1} parent=0 // pred_check_branch
    %11 = sbr.rel (0) target = $region9
  $region8: #{enc_dec_linear_forward.1} parent=0 // pred_region
    _
  $region9: #{enc_dec_linear_forward.1} parent=0 // pred_fallthru
    _
  // Predicated region
  $region10: #{enc_dec_linear_forward.1} parent=0 // pred_check
    _
  $region11: #{enc_dec_linear_forward.1} parent=0 // pred_check_branch
    %13 = sbr.rel (0) target = $region13
  $region12: #{enc_dec_linear_forward.1} parent=0 // pred_region
    _
  $region13: #{enc_dec_linear_forward.1} parent=0 // pred_fallthru
    _
  %v15 = vld [vmem:[%s1] sm:$0xf]
  %v16 = vld [vmem:[%s1 + $0x14] sm:$0xf]
  %v17 = vld [vmem:[%s1 + $0x28] sm:$0xf]
  %v18 = vld [vmem:[%s1 + $0x3c] sm:$0xf]
  %v19 = vld [vmem:[%s1 + $0x4] sm:$0xf]
  %v20 = vld [vmem:[%s1 + $0x18] sm:$0xf]
  %v21 = vld [vmem:[%s1 + $0x2c] sm:$0xf]
  %v22 = vld [vmem:[%s1 + $0x40] sm:$0xf]
  %v23 = vld [vmem:[%s1 + $0x8] sm:$0xf]
  %v24 = vld [vmem:[%s1 + $0x1c] sm:$0xf]
  %v25 = vld [vmem:[%s1 + $0x30] sm:$0xf]
  %v26 = vld [vmem:[%s1 + $0x44] sm:$0xf]
  %v27 = vld [vmem:[%s1 + $0xc] sm:$0xf]
  %v28 = vld [vmem:[%s1 + $0x20] sm:$0xf]
  %v29 = vld [vmem:[%s1 + $0x34] sm:$0xf]
  %v30 = vld [vmem:[%s1 + $0x48] sm:$0xf]
  %v31 = vld [vmem:[%s1 + $0x10] sm:$0xf]
  %v32 = vld [vmem:[%s1 + $0x24] sm:$0xf]
  %v33 = vld [vmem:[%s1 + $0x38] sm:$0xf]
  %v34 = vld [vmem:[%s1 + $0x4c] sm:$0xf]
  %v35 = vld [vmem:[%s2] sm:$0x1]
  %v36 = vld [vmem:[%s2 + $0x1] sm:$0x1]
  %v37 = vld [vmem:[%s2 + $0x2] sm:$0x1]
  %v38 = vld [vmem:[%s2 + $0x3] sm:$0x1]
  %v39 = vld [vmem:[%s2 + $0x4] sm:$0x1]
  %v40 = vld [vmem:[%s2 + $0x5] sm:$0x1]
  %v41 = vld [vmem:[%s2 + $0x6] sm:$0x1]
  %v42 = vld [vmem:[%s0] sm:$0xff]
  %v43 = vld [vmem:[%s0 + $0x8] sm:$0xff]
  %v44 = vld [vmem:[%s0 + $0x10] sm:$0xff]
  %v45 = vld [vmem:[%s0 + $0x18] sm:$0xff]
  %v46 = vld [vmem:[%s0 + $0x20] sm:$0xff]
  %v47 = vld [vmem:[%s0 + $0x28] sm:$0xff]
  %v48 = vld [vmem:[%s0 + $0x30] sm:$0xff]
  %v49 = vld [vmem:[%s0 + $0x38] sm:$0xff]
  %v50 = vld [vmem:[%s0 + $0x40] sm:$0xff]
  %v51 = vld [vmem:[%s0 + $0x48] sm:$0xff]
  %v52 = vld [vmem:[%s0 + $0x50] sm:$0xff]
  %v53 = vld [vmem:[%s0 + $0x58] sm:$0xff]
  %v54 = vld [vmem:[%s0 + $0x60] sm:$0xff]
  %v55 = vld [vmem:[%s0 + $0x68] sm:$0xff]
  %v56 = vld [vmem:[%s0 + $0x70] sm:$0xff]
  %v57 = vld [vmem:[%s0 + $0x78] sm:$0xff]
  %v58 = vld [vmem:[%s0 + $0x80] sm:$0xff]
  %v59 = vld [vmem:[%s0 + $0x88] sm:$0xff]
  %v60 = vld [vmem:[%s0 + $0x90] sm:$0xff]
  %v61 = vld [vmem:[%s0 + $0x98] sm:$0xff]
  %v62 = vld [vmem:[%s0 + $0xa0] sm:$0xff]
  %v63 = vld [vmem:[%s0 + $0xa8] sm:$0xff]
  %v64 = vld [vmem:[%s0 + $0xb0] sm:$0xff]
  %v65 = vld [vmem:[%s0 + $0xb8] sm:$0xff]
  %v66 = vld [vmem:[%s0 + $0xc0] sm:$0xff]
  %v67 = vld [vmem:[%s0 + $0xc8] sm:$0xff]
  %v68 = vld [vmem:[%s0 + $0xd0] sm:$0xff]
  %v69 = vld [vmem:[%s0 + $0xd8] sm:$0xff]
  %v70 = vld [vmem:[%s0 + $0xe0] sm:$0xff]
  %v71 = vld [vmem:[%s0 + $0xe8] sm:$0xff]
  %v72 = vld [vmem:[%s0 + $0xf0] sm:$0xff]
  %v73 = vld [vmem:[%s0 + $0xf8] sm:$0xff]
  %75 = vset.pattern.permute.xlu0 0
  %76 = vperm.xlu0 %75, %v42
  %v77 = vpop.permute.xlu0 %76
  %80 = vset.pattern.permute.xlu0 0
  %81 = vperm.xlu0 %80, %v43
  %v82 = vpop.permute.xlu0 %81
  %85 = vset.pattern.permute.xlu0 0
  %86 = vperm.xlu0 %85, %v44
  %v87 = vpop.permute.xlu0 %86
  %90 = vset.pattern.permute.xlu0 0
  %91 = vperm.xlu0 %90, %v45
  %v92 = vpop.permute.xlu0 %91
  %95 = vset.pattern.permute.xlu0 0
  %96 = vperm.xlu0 %95, %v46
  %v97 = vpop.permute.xlu0 %96
  %100 = vset.pattern.permute.xlu0 0
  %101 = vperm.xlu0 %100, %v47
  %v102 = vpop.permute.xlu0 %101
  %105 = vset.pattern.permute.xlu0 0
  %106 = vperm.xlu0 %105, %v48
  %v107 = vpop.permute.xlu0 %106
  %110 = vset.pattern.permute.xlu0 0
  %111 = vperm.xlu0 %110, %v49
  %v112 = vpop.permute.xlu0 %111
  %115 = vset.pattern.permute.xlu0 0
  %116 = vperm.xlu0 %115, %v50
  %v117 = vpop.permute.xlu0 %116
  %120 = vset.pattern.permute.xlu0 0
  %121 = vperm.xlu0 %120, %v51
  %v122 = vpop.permute.xlu0 %121
  %125 = vset.pattern.permute.xlu0 0
  %126 = vperm.xlu0 %125, %v52
  %v127 = vpop.permute.xlu0 %126
  %130 = vset.pattern.permute.xlu0 0
  %131 = vperm.xlu0 %130, %v53
  %v132 = vpop.permute.xlu0 %131
  %135 = vset.pattern.permute.xlu0 0
  %136 = vperm.xlu0 %135, %v54
  %v137 = vpop.permute.xlu0 %136
  %140 = vset.pattern.permute.xlu0 0
  %141 = vperm.xlu0 %140, %v55
  %v142 = vpop.permute.xlu0 %141
  %145 = vset.pattern.permute.xlu0 0
  %146 = vperm.xlu0 %145, %v56
  %v147 = vpop.permute.xlu0 %146
  %150 = vset.pattern.permute.xlu0 0
  %151 = vperm.xlu0 %150, %v57
  %v152 = vpop.permute.xlu0 %151
  %155 = vset.pattern.permute.xlu0 0
  %156 = vperm.xlu0 %155, %v58
  %v157 = vpop.permute.xlu0 %156
  %160 = vset.pattern.permute.xlu0 0
  %161 = vperm.xlu0 %160, %v59
  %v162 = vpop.permute.xlu0 %161
  %165 = vset.pattern.permute.xlu0 0
  %166 = vperm.xlu0 %165, %v60
  %v167 = vpop.permute.xlu0 %166
  %170 = vset.pattern.permute.xlu0 0
  %171 = vperm.xlu0 %170, %v61
  %v172 = vpop.permute.xlu0 %171
  %175 = vset.pattern.permute.xlu0 0
  %176 = vperm.xlu0 %175, %v62
  %v177 = vpop.permute.xlu0 %176
  %180 = vset.pattern.permute.xlu0 0
  %181 = vperm.xlu0 %180, %v63
  %v182 = vpop.permute.xlu0 %181
  %185 = vset.pattern.permute.xlu0 0
  %186 = vperm.xlu0 %185, %v64
  %v187 = vpop.permute.xlu0 %186
  %190 = vset.pattern.permute.xlu0 0
  %191 = vperm.xlu0 %190, %v65
  %v192 = vpop.permute.xlu0 %191
  %195 = vset.pattern.permute.xlu0 0
  %196 = vperm.xlu0 %195, %v66
  %v197 = vpop.permute.xlu0 %196
  %200 = vset.pattern.permute.xlu0 0
  %201 = vperm.xlu0 %200, %v67
  %v202 = vpop.permute.xlu0 %201
  %205 = vset.pattern.permute.xlu0 0
  %206 = vperm.xlu0 %205, %v68
  %v207 = vpop.permute.xlu0 %206
  %210 = vset.pattern.permute.xlu0 0
  %211 = vperm.xlu0 %210, %v69
  %v212 = vpop.permute.xlu0 %211
  %215 = vset.pattern.permute.xlu0 0
  %216 = vperm.xlu0 %215, %v70
  %v217 = vpop.permute.xlu0 %216
  %220 = vset.pattern.permute.xlu0 0
  %221 = vperm.xlu0 %220, %v71
  %v222 = vpop.permute.xlu0 %221
  %225 = vset.pattern.permute.xlu0 0
  %226 = vperm.xlu0 %225, %v72
  %v227 = vpop.permute.xlu0 %226
  %230 = vset.pattern.permute.xlu0 0
  %231 = vperm.xlu0 %230, %v73
  %v232 = vpop.permute.xlu0 %231
  %v234 = vlaneseq
  %v235 = vshrl.u32 %v234, 7
  %v236 = vsub.s32 0, %v235
  %v237 = vrot.slane %v35, %v236
  %v238 = vmul.f32 %v77, %v237
  %v239 = vmul.f32 %v82, %v237
  %v240 = vmul.f32 %v87, %v237
  %v241 = vmul.f32 %v92, %v237
  %v242 = vmul.f32 %v97, %v237
  %v243 = vmul.f32 %v102, %v237
  %v244 = vmul.f32 %v107, %v237
  %v245 = vmul.f32 %v112, %v237
  %v246 = vmul.f32 %v117, %v237
  %v247 = vmul.f32 %v122, %v237
  %v248 = vmul.f32 %v127, %v237
  %v249 = vmul.f32 %v132, %v237
  %v250 = vmul.f32 %v137, %v237
  %v251 = vmul.f32 %v142, %v237
  %v252 = vmul.f32 %v147, %v237
  %v253 = vmul.f32 %v152, %v237
  %v254 = vmul.f32 %v157, %v237
  %v255 = vmul.f32 %v162, %v237
  %v256 = vmul.f32 %v167, %v237
  %v257 = vmul.f32 %v172, %v237
  %v258 = vmul.f32 %v177, %v237
  %v259 = vmul.f32 %v182, %v237
  %v260 = vmul.f32 %v187, %v237
  %v261 = vmul.f32 %v192, %v237
  %v262 = vmul.f32 %v197, %v237
  %v263 = vmul.f32 %v202, %v237
  %v264 = vmul.f32 %v207, %v237
  %v265 = vmul.f32 %v212, %v237
  %v266 = vmul.f32 %v217, %v237
  %v267 = vmul.f32 %v222, %v237
  %v268 = vmul.f32 %v227, %v237
  %v269 = vmul.f32 %v232, %v237
  %v270 = vlaneseq
  %v271 = vshrl.u32 %v270, 7
  %v272 = vsub.s32 0, %v271
  %v273 = vrot.slane %v36, %v272
  %v274 = vadd.f32 %v238, %v273
  %v275 = vadd.f32 %v239, %v273
  %v276 = vadd.f32 %v240, %v273
  %v277 = vadd.f32 %v241, %v273
  %v278 = vadd.f32 %v242, %v273
  %v279 = vadd.f32 %v243, %v273
  %v280 = vadd.f32 %v244, %v273
  %v281 = vadd.f32 %v245, %v273
  %v282 = vadd.f32 %v246, %v273
  %v283 = vadd.f32 %v247, %v273
  %v284 = vadd.f32 %v248, %v273
  %v285 = vadd.f32 %v249, %v273
  %v286 = vadd.f32 %v250, %v273
  %v287 = vadd.f32 %v251, %v273
  %v288 = vadd.f32 %v252, %v273
  %v289 = vadd.f32 %v253, %v273
  %v290 = vadd.f32 %v254, %v273
  %v291 = vadd.f32 %v255, %v273
  %v292 = vadd.f32 %v256, %v273
  %v293 = vadd.f32 %v257, %v273
  %v294 = vadd.f32 %v258, %v273
  %v295 = vadd.f32 %v259, %v273
  %v296 = vadd.f32 %v260, %v273
  %v297 = vadd.f32 %v261, %v273
  %v298 = vadd.f32 %v262, %v273
  %v299 = vadd.f32 %v263, %v273
  %v300 = vadd.f32 %v264, %v273
  %v301 = vadd.f32 %v265, %v273
  %v302 = vadd.f32 %v266, %v273
  %v303 = vadd.f32 %v267, %v273
  %v304 = vadd.f32 %v268, %v273
  %v305 = vadd.f32 %v269, %v273
  %vm306 = vcmask 785408
  %307 = vst.msk [vmem:[#allocation2] sm:$0xff] %vm306, %v274
  %308 = vst.msk [vmem:[#allocation2 + $0x8] sm:$0xff] %vm306, %v275
  %309 = vst.msk [vmem:[#allocation2 + $0x10] sm:$0xff] %vm306, %v276
  %310 = vst.msk [vmem:[#allocation2 + $0x18] sm:$0xff] %vm306, %v277
  %311 = vst.msk [vmem:[#allocation2 + $0x20] sm:$0xff] %vm306, %v278
  %312 = vst.msk [vmem:[#allocation2 + $0x28] sm:$0xff] %vm306, %v279
  %313 = vst.msk [vmem:[#allocation2 + $0x30] sm:$0xff] %vm306, %v280
  %314 = vst.msk [vmem:[#allocation2 + $0x38] sm:$0xff] %vm306, %v281
  %315 = vst.msk [vmem:[#allocation2 + $0x40] sm:$0xff] %vm306, %v282
  %316 = vst.msk [vmem:[#allocation2 + $0x48] sm:$0xff] %vm306, %v283
  %317 = vst.msk [vmem:[#allocation2 + $0x50] sm:$0xff] %vm306, %v284
  %318 = vst.msk [vmem:[#allocation2 + $0x58] sm:$0xff] %vm306, %v285
  %319 = vst.msk [vmem:[#allocation2 + $0x60] sm:$0xff] %vm306, %v286
  %320 = vst.msk [vmem:[#allocation2 + $0x68] sm:$0xff] %vm306, %v287
  %321 = vst.msk [vmem:[#allocation2 + $0x70] sm:$0xff] %vm306, %v288
  %322 = vst.msk [vmem:[#allocation2 + $0x78] sm:$0xff] %vm306, %v289
  %323 = vst.msk [vmem:[#allocation2 + $0x80] sm:$0xff] %vm306, %v290
  %324 = vst.msk [vmem:[#allocation2 + $0x88] sm:$0xff] %vm306, %v291
  %325 = vst.msk [vmem:[#allocation2 + $0x90] sm:$0xff] %vm306, %v292
  %326 = vst.msk [vmem:[#allocation2 + $0x98] sm:$0xff] %vm306, %v293
  %327 = vst.msk [vmem:[#allocation2 + $0xa0] sm:$0xff] %vm306, %v294
  %328 = vst.msk [vmem:[#allocation2 + $0xa8] sm:$0xff] %vm306, %v295
  %329 = vst.msk [vmem:[#allocation2 + $0xb0] sm:$0xff] %vm306, %v296
  %330 = vst.msk [vmem:[#allocation2 + $0xb8] sm:$0xff] %vm306, %v297
  %331 = vst.msk [vmem:[#allocation2 + $0xc0] sm:$0xff] %vm306, %v298
  %332 = vst.msk [vmem:[#allocation2 + $0xc8] sm:$0xff] %vm306, %v299
  %333 = vst.msk [vmem:[#allocation2 + $0xd0] sm:$0xff] %vm306, %v300
  %334 = vst.msk [vmem:[#allocation2 + $0xd8] sm:$0xff] %vm306, %v301
  %335 = vst.msk [vmem:[#allocation2 + $0xe0] sm:$0xff] %vm306, %v302
  %336 = vst.msk [vmem:[#allocation2 + $0xe8] sm:$0xff] %vm306, %v303
  %337 = vst.msk [vmem:[#allocation2 + $0xf0] sm:$0xff] %vm306, %v304
  %338 = vst.msk [vmem:[#allocation2 + $0xf8] sm:$0xff] %vm306, %v305
  %v339 = vld [vmem:[#allocation2] sm:$0xff]
  %v340 = vld [vmem:[#allocation2 + $0x8] sm:$0xff]
  %v341 = vld [vmem:[#allocation2 + $0x10] sm:$0xff]
  %v342 = vld [vmem:[#allocation2 + $0x18] sm:$0xff]
  %v347 = vunpack.c.l.b16 %v15
  %v348 = vunpack.c.l.b16 %v16
  %v349 = vunpack.c.l.b16 %v17
  %v350 = vunpack.c.l.b16 %v18
  %v351 = vpack.c.b16 %v348, %v347
  %v352 = vpack.c.b16 %v350, %v349
  %vm355 = vcmask 261120
  %v357 = vsel %vm355, 0, 0
  %359 = vmatprep.subr.bf16.mxu0 0
  %360 = vmatpush1.bf16.msra.mxu0 %v351
  %361 = vmatprep.subr.bf16.mxu0 0
  %362 = vmatpush1.bf16.msra.mxu0 %v352
  %363 = vmatprep.subr.bf16.mxu0 0
  %364 = vmatpush1.bf16.msra.mxu0 0
  %365 = vmatprep.subr.bf16.mxu0 0
  %366 = vmatpush1.bf16.msra.mxu0 0
  %367 = vmatprep.subr.bf16.mxu0 0
  %368 = vmatpush1.bf16.msra.mxu0 0
  %369 = vmatprep.subr.bf16.mxu0 0
  %370 = vmatpush1.bf16.msra.mxu0 0
  %371 = vmatprep.subr.bf16.mxu0 0
  %372 = vmatpush1.bf16.msra.mxu0 0
  %373 = vmatprep.subr.bf16.mxu0 0
  %374 = vmatpush1.bf16.msra.mxu0 0
  %375 = vmatprep.subr.bf16.mxu0 0
  %376 = vmatpush1.bf16.msra.mxu0 0
  %377 = vmatprep.subr.bf16.mxu0 0
  %378 = vmatpush1.bf16.msra.mxu0 0
  %379 = vmatprep.subr.bf16.mxu0 0
  %380 = vmatpush1.bf16.msra.mxu0 0
  %381 = vmatprep.subr.bf16.mxu0 0
  %382 = vmatpush1.bf16.msra.mxu0 0
  %383 = vmatprep.subr.bf16.mxu0 0
  %384 = vmatpush1.bf16.msra.mxu0 0
  %385 = vmatprep.subr.bf16.mxu0 0
  %386 = vmatpush1.bf16.msra.mxu0 0
  %387 = vmatprep.subr.bf16.mxu0 0
  %388 = vmatpush1.bf16.msra.mxu0 0
  %389 = vmatprep.subr.bf16.mxu0 0
  %390 = vmatpush1.bf16.msra.mxu0 0
  %391 = vmatprep.mubr.bf16.mxu0 0
  %392 = vmatmul.mubr.bf16.gmra.mrb[0].mxu0 %v357
  %v393 = vpop.f32.mrb[0].mxu0
  %v394 = vadd.f32 0.0, %v393
  %v395 = vpop.f32.mrb[0].mxu0
  %v396 = vpop.f32.mrb[0].mxu0
  %v397 = vadd.f32 0.0, %v396
  %v398 = vpop.f32.mrb[0].mxu0
  %399 = vmatprep.mubr.bf16.mxu0 0
  %400 = vmatmul.mubr.bf16.gmra.mrb[0].mxu0 %v357
  %v401 = vpop.f32.mrb[0].mxu0
  %v402 = vadd.f32 0.0, %v401
  %v403 = vpop.f32.mrb[0].mxu0
  %v404 = vpop.f32.mrb[0].mxu0
  %v405 = vadd.f32 0.0, %v404
  %v406 = vpop.f32.mrb[0].mxu0
  %407 = vdwg.mxu0
  %v408 = vadd.f32 %v339, %v394
  %v409 = vadd.f32 %v340, %v397
  %v410 = vadd.f32 %v341, %v402
  %v411 = vadd.f32 %v342, %v405
  %v412 = vmul.f32 %v408, 0.5
  %v413 = vmul.f32 %v409, 0.5
  %v414 = vmul.f32 %v410, 0.5
  %v415 = vmul.f32 %v411, 0.5
  %v416 = vtanh.pop %v412
  %v417 = vtanh.pop %v413
  %v418 = vtanh.pop %v414
  %v419 = vtanh.pop %v415
  %v420 = vmul.f32 %v416, 0.5
  %v421 = vmul.f32 %v417, 0.5
  %v422 = vmul.f32 %v418, 0.5
  %v423 = vmul.f32 %v419, 0.5
  %v424 = vadd.f32 %v420, 0.5
  %v425 = vadd.f32 %v421, 0.5
  %v426 = vadd.f32 %v422, 0.5
  %v427 = vadd.f32 %v423, 0.5
  %v428 = vmul.f32 %v424, 0.0
  %v429 = vmul.f32 %v425, 0.0
  %v430 = vmul.f32 %v426, 0.0
  %v431 = vmul.f32 %v427, 0.0
  %v432 = vpack.c.bf16 %v429, %v428
  %v433 = vpack.c.bf16 %v431, %v430
  %434 = vrot.lane.b32.xlu0 %v351, 64
  %v435 = vpop.permute.xlu0 %434
  %436 = vrot.lane.b32.xlu0 %v352, 64
  %v437 = vpop.permute.xlu0 %436
  %v441 = vsel %vm355, %v432, 0
  %v444 = vsel %vm355, %v433, 0
  %446 = vmatprep.subr.bf16.mxu0 0
  %447 = vmatpush1.bf16.msra.mxu0 %v435
  %448 = vmatprep.subr.bf16.mxu0 0
  %449 = vmatpush1.bf16.msra.mxu0 %v437
  %450 = vmatprep.subr.bf16.mxu0 0
  %451 = vmatpush1.bf16.msra.mxu0 0
  %452 = vmatprep.subr.bf16.mxu0 0
  %453 = vmatpush1.bf16.msra.mxu0 0
  %454 = vmatprep.subr.bf16.mxu0 0
  %455 = vmatpush1.bf16.msra.mxu0 0
  %456 = vmatprep.subr.bf16.mxu0 0
  %457 = vmatpush1.bf16.msra.mxu0 0
  %458 = vmatprep.subr.bf16.mxu0 0
  %459 = vmatpush1.bf16.msra.mxu0 0
  %460 = vmatprep.subr.bf16.mxu0 0
  %461 = vmatpush1.bf16.msra.mxu0 0
  %462 = vmatprep.subr.bf16.mxu0 0
  %463 = vmatpush1.bf16.msra.mxu0 0
  %464 = vmatprep.subr.bf16.mxu0 0
  %465 = vmatpush1.bf16.msra.mxu0 0
  %466 = vmatprep.subr.bf16.mxu0 0
  %467 = vmatpush1.bf16.msra.mxu0 0
  %468 = vmatprep.subr.bf16.mxu0 0
  %469 = vmatpush1.bf16.msra.mxu0 0
  %470 = vmatprep.subr.bf16.mxu0 0
  %471 = vmatpush1.bf16.msra.mxu0 0
  %472 = vmatprep.subr.bf16.mxu0 0
  %473 = vmatpush1.bf16.msra.mxu0 0
  %474 = vmatprep.subr.bf16.mxu0 0
  %475 = vmatpush1.bf16.msra.mxu0 0
  %476 = vmatprep.subr.bf16.mxu0 0
  %477 = vmatpush1.bf16.msra.mxu0 0
  %478 = vmatprep.mubr.bf16.mxu0 0
  %479 = vmatmul.mubr.bf16.gmra.mrb[0].mxu0 %v441
  %v480 = vpop.f32.mrb[0].mxu0
  %v481 = vadd.f32 0.0, %v480
  %v482 = vpop.f32.mrb[0].mxu0
  %v483 = vpop.f32.mrb[0].mxu0
  %v484 = vadd.f32 0.0, %v483
  %v485 = vpop.f32.mrb[0].mxu0
  %486 = vmatprep.mubr.bf16.mxu0 0
  %487 = vmatmul.mubr.bf16.gmra.mrb[0].mxu0 %v444
  %v488 = vpop.f32.mrb[0].mxu0
  %v489 = vadd.f32 0.0, %v488
  %v490 = vpop.f32.mrb[0].mxu0
  %v491 = vpop.f32.mrb[0].mxu0
  %v492 = vadd.f32 0.0, %v491
  %v493 = vpop.f32.mrb[0].mxu0
  %494 = vdwg.mxu0
  %499 = vrot.lane.b32.xlu0 %v481, 64
  %v500 = vpop.permute.xlu0 %499
  %501 = vrot.lane.b32.xlu0 %v484, 64
  %v502 = vpop.permute.xlu0 %501
  %503 = vrot.lane.b32.xlu0 %v489, 64
  %v504 = vpop.permute.xlu0 %503
  %505 = vrot.lane.b32.xlu0 %v492, 64
  %v506 = vpop.permute.xlu0 %505
  %v511 = vadd.f32 %v339, %v500
  %v512 = vadd.f32 %v340, %v502
  %v513 = vadd.f32 %v341, %v504
  %v514 = vadd.f32 %v342, %v506
  %v515 = vtanh.pop %v511
  %v516 = vtanh.pop %v512
  %v517 = vtanh.pop %v513
  %v518 = vtanh.pop %v514
  %v519 = vsub.f32 1.0, %v424
  %v520 = vsub.f32 1.0, %v425
  %v521 = vsub.f32 1.0, %v426
  %v522 = vsub.f32 1.0, %v427
  %527 = vrot.lane.b32.xlu0 %v515, 96
  %v528 = vpop.permute.xlu0 %527
  %529 = vrot.lane.b32.xlu0 %v516, 96
  %v530 = vpop.permute.xlu0 %529
  %531 = vrot.lane.b32.xlu0 %v517, 96
  %v532 = vpop.permute.xlu0 %531
  %533 = vrot.lane.b32.xlu0 %v518, 96
  %v534 = vpop.permute.xlu0 %533
  %v539 = vmul.f32 %v519, %v528
  %v540 = vmul.f32 %v520, %v530
  %v541 = vmul.f32 %v521, %v532
  %v542 = vmul.f32 %v522, %v534
  %v543 = vadd.f32 %v428, %v539
  %v544 = vadd.f32 %v429, %v540
  %v545 = vadd.f32 %v430, %v541
  %v546 = vadd.f32 %v431, %v542
  %v547 = vld [vmem:[#allocation2 + $0x20] sm:$0xff]
  %v548 = vld [vmem:[#allocation2 + $0x28] sm:$0xff]
  %v549 = vld [vmem:[#allocation2 + $0x30] sm:$0xff]
  %v550 = vld [vmem:[#allocation2 + $0x38] sm:$0xff]
  %v551 = vpack.c.bf16 %v544, %v543
  %v552 = vpack.c.bf16 %v546, %v545
  %555 = vrot.lane.b32.xlu0 %v551, 96
  %v556 = vpop.permute.xlu0 %555
  %557 = vrot.lane.b32.xlu0 %v552, 96
  %v558 = vpop.permute.xlu0 %557
  %v560 = vsel %vm355, %v556, 0
  %v563 = vsel %vm355, %v558, 0
  %565 = vmatprep.subr.bf16.mxu0 0
  %566 = vmatpush1.bf16.msra.mxu0 %v351
  %567 = vmatprep.subr.bf16.mxu0 0
  %568 = vmatpush1.bf16.msra.mxu0 %v352
  %569 = vmatprep.subr.bf16.mxu0 0
  %570 = vmatpush1.bf16.msra.mxu0 0
  %571 = vmatprep.subr.bf16.mxu0 0
  %572 = vmatpush1.bf16.msra.mxu0 0
  %573 = vmatprep.subr.bf16.mxu0 0
  %574 = vmatpush1.bf16.msra.mxu0 0
  %575 = vmatprep.subr.bf16.mxu0 0
  %576 = vmatpush1.bf16.msra.mxu0 0
  %577 = vmatprep.subr.bf16.mxu0 0
  %578 = vmatpush1.bf16.msra.mxu0 0
  %579 = vmatprep.subr.bf16.mxu0 0
  %580 = vmatpush1.bf16.msra.mxu0 0
  %581 = vmatprep.subr.bf16.mxu0 0
  %582 = vmatpush1.bf16.msra.mxu0 0
  %583 = vmatprep.subr.bf16.mxu0 0
  %584 = vmatpush1.bf16.msra.mxu0 0
  %585 = vmatprep.subr.bf16.mxu0 0
  %586 = vmatpush1.bf16.msra.mxu0 0
  %587 = vmatprep.subr.bf16.mxu0 0
  %588 = vmatpush1.bf16.msra.mxu0 0
  %589 = vmatprep.subr.bf16.mxu0 0
  %590 = vmatpush1.bf16.msra.mxu0 0
  %591 = vmatprep.subr.bf16.mxu0 0
  %592 = vmatpush1.bf16.msra.mxu0 0
  %593 = vmatprep.subr.bf16.mxu0 0
  %594 = vmatpush1.bf16.msra.mxu0 0
  %595 = vmatprep.subr.bf16.mxu0 0
  %596 = vmatpush1.bf16.msra.mxu0 0
  %597 = vmatprep.mubr.bf16.mxu0 0
  %598 = vmatmul.mubr.bf16.gmra.mrb[0].mxu0 %v560
  %v599 = vpop.f32.mrb[0].mxu0
  %v600 = vadd.f32 0.0, %v599
  %v601 = vpop.f32.mrb[0].mxu0
  %v602 = vpop.f32.mrb[0].mxu0
  %v603 = vadd.f32 0.0, %v602
  %v604 = vpop.f32.mrb[0].mxu0
  %605 = vmatprep.mubr.bf16.mxu0 0
  %606 = vmatmul.mubr.bf16.gmra.mrb[0].mxu0 %v563
  %v607 = vpop.f32.mrb[0].mxu0
  %v608 = vadd.f32 0.0, %v607
  %v609 = vpop.f32.mrb[0].mxu0
  %v610 = vpop.f32.mrb[0].mxu0
  %v611 = vadd.f32 0.0, %v610
  %v612 = vpop.f32.mrb[0].mxu0
  %613 = vdwg.mxu0
  %v614 = vadd.f32 %v547, %v600
  %v615 = vadd.f32 %v548, %v603
  %v616 = vadd.f32 %v549, %v608
  %v617 = vadd.f32 %v550, %v611
  %v618 = vmul.f32 %v614, 0.5
  %v619 = vmul.f32 %v615, 0.5
  %v620 = vmul.f32 %v616, 0.5
  %v621 = vmul.f32 %v617, 0.5
  %v622 = vtanh.pop %v618
  %v623 = vtanh.pop %v619
  %v624 = vtanh.pop %v620
  %v625 = vtanh.pop %v621
  %v626 = vmul.f32 %v622, 0.5
  %v627 = vmul.f32 %v623, 0.5
  %v628 = vmul.f32 %v624, 0.5
  %v629 = vmul.f32 %v625, 0.5
  %v630 = vadd.f32 %v626, 0.5
  %v631 = vadd.f32 %v627, 0.5
  %v632 = vadd.f32 %v628, 0.5
  %v633 = vadd.f32 %v629, 0.5
  %638 = vrot.lane.b32.xlu0 %v543, 96
  %v639 = vpop.permute.xlu0 %638
  %640 = vrot.lane.b32.xlu0 %v544, 96
  %v641 = vpop.permute.xlu0 %640
  %642 = vrot.lane.b32.xlu0 %v545, 96
  %v643 = vpop.permute.xlu0 %642
  %644 = vrot.lane.b32.xlu0 %v546, 96
  %v645 = vpop.permute.xlu0 %644
  %v650 = vmul.f32 %v630, %v639
  %v651 = vmul.f32 %v631, %v641
  %v652 = vmul.f32 %v632, %v643
  %v653 = vmul.f32 %v633, %v645
  %v654 = vpack.c.bf16 %v651, %v650
  %v655 = vpack.c.bf16 %v653, %v652
  %v657 = vsel %vm355, %v654, 0
  %v660 = vsel %vm355, %v655, 0
  %662 = vmatprep.subr.bf16.mxu0 0
  %663 = vmatpush1.bf16.msra.mxu0 %v435
  %664 = vmatprep.subr.bf16.mxu0 0
  %665 = vmatpush1.bf16.msra.mxu0 %v437
  %666 = vmatprep.subr.bf16.mxu0 0
  %667 = vmatpush1.bf16.msra.mxu0 0
  %668 = vmatprep.subr.bf16.mxu0 0
  %669 = vmatpush1.bf16.msra.mxu0 0
  %670 = vmatprep.subr.bf16.mxu0 0
  %671 = vmatpush1.bf16.msra.mxu0 0
  %672 = vmatprep.subr.bf16.mxu0 0
  %673 = vmatpush1.bf16.msra.mxu0 0
  %674 = vmatprep.subr.bf16.mxu0 0
  %675 = vmatpush1.bf16.msra.mxu0 0
  %676 = vmatprep.subr.bf16.mxu0 0
  %677 = vmatpush1.bf16.msra.mxu0 0
  %678 = vmatprep.subr.bf16.mxu0 0
  %679 = vmatpush1.bf16.msra.mxu0 0
  %680 = vmatprep.subr.bf16.mxu0 0
  %681 = vmatpush1.bf16.msra.mxu0 0
  %682 = vmatprep.subr.bf16.mxu0 0
  %683 = vmatpush1.bf16.msra.mxu0 0
  %684 = vmatprep.subr.bf16.mxu0 0
  %685 = vmatpush1.bf16.msra.mxu0 0
  %686 = vmatprep.subr.bf16.mxu0 0
  %687 = vmatpush1.bf16.msra.mxu0 0
  %688 = vmatprep.subr.bf16.mxu0 0
  %689 = vmatpush1.bf16.msra.mxu0 0
  %690 = vmatprep.subr.bf16.mxu0 0
  %691 = vmatpush1.bf16.msra.mxu0 0
  %692 = vmatprep.subr.bf16.mxu0 0
  %693 = vmatpush1.bf16.msra.mxu0 0
  %694 = vmatprep.mubr.bf16.mxu0 0
  %695 = vmatmul.mubr.bf16.gmra.mrb[0].mxu0 %v657
  %v696 = vpop.f32.mrb[0].mxu0
  %v697 = vadd.f32 0.0, %v696
  %v698 = vpop.f32.mrb[0].mxu0
  %v699 = vpop.f32.mrb[0].mxu0
  %v700 = vadd.f32 0.0, %v699
  %v701 = vpop.f32.mrb[0].mxu0
  %702 = vmatprep.mubr.bf16.mxu0 0
  %703 = vmatmul.mubr.bf16.gmra.mrb[0].mxu0 %v660
  %v704 = vpop.f32.mrb[0].mxu0
  %v705 = vadd.f32 0.0, %v704
  %v706 = vpop.f32.mrb[0].mxu0
  %v707 = vpop.f32.mrb[0].mxu0
  %v708 = vadd.f32 0.0, %v707
  %v709 = vpop.f32.mrb[0].mxu0
  %710 = vdwg.mxu0
  %715 = vrot.lane.b32.xlu0 %v697, 64
  %v716 = vpop.permute.xlu0 %715
  %717 = vrot.lane.b32.xlu0 %v700, 64
  %v718 = vpop.permute.xlu0 %717
  %719 = vrot.lane.b32.xlu0 %v705, 64
  %v720 = vpop.permute.xlu0 %719
  %721 = vrot.lane.b32.xlu0 %v708, 64
  %v722 = vpop.permute.xlu0 %721
  %v727 = vadd.f32 %v547, %v716
  %v728 = vadd.f32 %v548, %v718
  %v729 = vadd.f32 %v549, %v720
  %v730 = vadd.f32 %v550, %v722
  %v731 = vtanh.pop %v727
  %v732 = vtanh.pop %v728
  %v733 = vtanh.pop %v729
  %v734 = vtanh.pop %v730
  %v735 = vmul.f32 %v630, %v543
  %v736 = vmul.f32 %v631, %v544
  %v737 = vmul.f32 %v632, %v545
  %v738 = vmul.f32 %v633, %v546
  %v739 = vsub.f32 1.0, %v630
  %v740 = vsub.f32 1.0, %v631
  %v741 = vsub.f32 1.0, %v632
  %v742 = vsub.f32 1.0, %v633
  %747 = vrot.lane.b32.xlu0 %v731, 96
  %v748 = vpop.permute.xlu0 %747
  %749 = vrot.lane.b32.xlu0 %v732, 96
  %v750 = vpop.permute.xlu0 %749
  %751 = vrot.lane.b32.xlu0 %v733, 96
  %v752 = vpop.permute.xlu0 %751
  %753 = vrot.lane.b32.xlu0 %v734, 96
  %v754 = vpop.permute.xlu0 %753
  %v759 = vmul.f32 %v739, %v748
  %v760 = vmul.f32 %v740, %v750
  %v761 = vmul.f32 %v741, %v752
  %v762 = vmul.f32 %v742, %v754
  %v763 = vadd.f32 %v735, %v759
  %v764 = vadd.f32 %v736, %v760
  %v765 = vadd.f32 %v737, %v761
  %v766 = vadd.f32 %v738, %v762
  %v767 = vld [vmem:[#allocation2 + $0x40] sm:$0xff]
  %v768 = vld [vmem:[#allocation2 + $0x48] sm:$0xff]
  %v769 = vld [vmem:[#allocation2 + $0x50] sm:$0xff]
  %v770 = vld [vmem:[#allocation2 + $0x58] sm:$0xff]
  %v771 = vpack.c.bf16 %v764, %v763
  %v772 = vpack.c.bf16 %v766, %v765
  %775 = vrot.lane.b32.xlu0 %v771, 96
  %v776 = vpop.permute.xlu0 %775
  %777 = vrot.lane.b32.xlu0 %v772, 96
  %v778 = vpop.permute.xlu0 %777
  %v780 = vsel %vm355, %v776, 0
  %v783 = vsel %vm355, %v778, 0
  %785 = vmatprep.subr.bf16.mxu0 0
  %786 = vmatpush1.bf16.msra.mxu0 %v351
  %787 = vmatprep.subr.bf16.mxu0 0
  %788 = vmatpush1.bf16.msra.mxu0 %v352
  %789 = vmatprep.subr.bf16.mxu0 0
  %790 = vmatpush1.bf16.msra.mxu0 0
  %791 = vmatprep.subr.bf16.mxu0 0
  %792 = vmatpush1.bf16.msra.mxu0 0
  %793 = vmatprep.subr.bf16.mxu0 0
  %794 = vmatpush1.bf16.msra.mxu0 0
  %795 = vmatprep.subr.bf16.mxu0 0
  %796 = vmatpush1.bf16.msra.mxu0 0
  %797 = vmatprep.subr.bf16.mxu0 0
  %798 = vmatpush1.bf16.msra.mxu0 0
  %799 = vmatprep.subr.bf16.mxu0 0
  %800 = vmatpush1.bf16.msra.mxu0 0
  %801 = vmatprep.subr.bf16.mxu0 0
  %802 = vmatpush1.bf16.msra.mxu0 0
  %803 = vmatprep.subr.bf16.mxu0 0
  %804 = vmatpush1.bf16.msra.mxu0 0
  %805 = vmatprep.subr.bf16.mxu0 0
  %806 = vmatpush1.bf16.msra.mxu0 0
  %807 = vmatprep.subr.bf16.mxu0 0
  %808 = vmatpush1.bf16.msra.mxu0 0
  %809 = vmatprep.subr.bf16.mxu0 0
  %810 = vmatpush1.bf16.msra.mxu0 0
  %811 = vmatprep.subr.bf16.mxu0 0
  %812 = vmatpush1.bf16.msra.mxu0 0
  %813 = vmatprep.subr.bf16.mxu0 0
  %814 = vmatpush1.bf16.msra.mxu0 0
  %815 = vmatprep.subr.bf16.mxu0 0
  %816 = vmatpush1.bf16.msra.mxu0 0
  %817 = vmatprep.mubr.bf16.mxu0 0
  %818 = vmatmul.mubr.bf16.gmra.mrb[0].mxu0 %v780
  %v819 = vpop.f32.mrb[0].mxu0
  %v820 = vadd.f32 0.0, %v819
  %v821 = vpop.f32.mrb[0].mxu0
  %v822 = vpop.f32.mrb[0].mxu0
  %v823 = vadd.f32 0.0, %v822
  %v824 = vpop.f32.mrb[0].mxu0
  %825 = vmatprep.mubr.bf16.mxu0 0
  %826 = vmatmul.mubr.bf16.gmra.mrb[0].mxu0 %v783
  %v827 = vpop.f32.mrb[0].mxu0
  %v828 = vadd.f32 0.0, %v827
  %v829 = vpop.f32.mrb[0].mxu0
  %v830 = vpop.f32.mrb[0].mxu0
  %v831 = vadd.f32 0.0, %v830
  %v832 = vpop.f32.mrb[0].mxu0
  %833 = vdwg.mxu0
  %v834 = vadd.f32 %v767, %v820
  %v835 = vadd.f32 %v768, %v823
  %v836 = vadd.f32 %v769, %v828
  %v837 = vadd.f32 %v770, %v831
  %v838 = vmul.f32 %v834, 0.5
  %v839 = vmul.f32 %v835, 0.5
  %v840 = vmul.f32 %v836, 0.5
  %v841 = vmul.f32 %v837, 0.5
  %v842 = vtanh.pop %v838
  %v843 = vtanh.pop %v839
  %v844 = vtanh.pop %v840
  %v845 = vtanh.pop %v841
  %v846 = vmul.f32 %v842, 0.5
  %v847 = vmul.f32 %v843, 0.5
  %v848 = vmul.f32 %v844, 0.5
  %v849 = vmul.f32 %v845, 0.5
  %v850 = vadd.f32 %v846, 0.5
  %v851 = vadd.f32 %v847, 0.5
  %v852 = vadd.f32 %v848, 0.5
  %v853 = vadd.f32 %v849, 0.5
  %858 = vrot.lane.b32.xlu0 %v763, 96
  %v859 = vpop.permute.xlu0 %858
  %860 = vrot.lane.b32.xlu0 %v764, 96
  %v861 = vpop.permute.xlu0 %860
  %862 = vrot.lane.b32.xlu0 %v765, 96
  %v863 = vpop.permute.xlu0 %862
  %864 = vrot.lane.b32.xlu0 %v766, 96
  %v865 = vpop.permute.xlu0 %864
  %v870 = vmul.f32 %v850, %v859
  %v871 = vmul.f32 %v851, %v861
  %v872 = vmul.f32 %v852, %v863
  %v873 = vmul.f32 %v853, %v865
  %v874 = vpack.c.bf16 %v871, %v870
  %v875 = vpack.c.bf16 %v873, %v872
  %v877 = vsel %vm355, %v874, 0
  %v880 = vsel %vm355, %v875, 0
  %882 = vmatprep.subr.bf16.mxu0 0
  %883 = vmatpush1.bf16.msra.mxu0 %v435
  %884 = vmatprep.subr.bf16.mxu0 0
  %885 = vmatpush1.bf16.msra.mxu0 %v437
  %886 = vmatprep.subr.bf16.mxu0 0
  %887 = vmatpush1.bf16.msra.mxu0 0
  %888 = vmatprep.subr.bf16.mxu0 0
  %889 = vmatpush1.bf16.msra.mxu0 0
  %890 = vmatprep.subr.bf16.mxu0 0
  %891 = vmatpush1.bf16.msra.mxu0 0
  %892 = vmatprep.subr.bf16.mxu0 0
  %893 = vmatpush1.bf16.msra.mxu0 0
  %894 = vmatprep.subr.bf16.mxu0 0
  %895 = vmatpush1.bf16.msra.mxu0 0
  %896 = vmatprep.subr.bf16.mxu0 0
  %897 = vmatpush1.bf16.msra.mxu0 0
  %898 = vmatprep.subr.bf16.mxu0 0
  %899 = vmatpush1.bf16.msra.mxu0 0
  %900 = vmatprep.subr.bf16.mxu0 0
  %901 = vmatpush1.bf16.msra.mxu0 0
  %902 = vmatprep.subr.bf16.mxu0 0
  %903 = vmatpush1.bf16.msra.mxu0 0
  %904 = vmatprep.subr.bf16.mxu0 0
  %905 = vmatpush1.bf16.msra.mxu0 0
  %906 = vmatprep.subr.bf16.mxu0 0
  %907 = vmatpush1.bf16.msra.mxu0 0
  %908 = vmatprep.subr.bf16.mxu0 0
  %909 = vmatpush1.bf16.msra.mxu0 0
  %910 = vmatprep.subr.bf16.mxu0 0
  %911 = vmatpush1.bf16.msra.mxu0 0
  %912 = vmatprep.subr.bf16.mxu0 0
  %913 = vmatpush1.bf16.msra.mxu0 0
  %914 = vmatprep.mubr.bf16.mxu0 0
  %915 = vmatmul.mubr.bf16.gmra.mrb[0].mxu0 %v877
  %v916 = vpop.f32.mrb[0].mxu0
  %v917 = vadd.f32 0.0, %v916
  %v918 = vpop.f32.mrb[0].mxu0
  %v919 = vpop.f32.mrb[0].mxu0
  %v920 = vadd.f32 0.0, %v919
  %v921 = vpop.f32.mrb[0].mxu0
  %922 = vmatprep.mubr.bf16.mxu0 0
  %923 = vmatmul.mubr.bf16.gmra.mrb[0].mxu0 %v880
  %v924 = vpop.f32.mrb[0].mxu0
  %v925 = vadd.f32 0.0, %v924
  %v926 = vpop.f32.mrb[0].mxu0
  %v927 = vpop.f32.mrb[0].mxu0
  %v928 = vadd.f32 0.0, %v927
  %v929 = vpop.f32.mrb[0].mxu0
  %930 = vdwg.mxu0
  %935 = vrot.lane.b32.xlu0 %v917, 64
  %v936 = vpop.permute.xlu0 %935
  %937 = vrot.lane.b32.xlu0 %v920, 64
  %v938 = vpop.permute.xlu0 %937
  %939 = vrot.lane.b32.xlu0 %v925, 64
  %v940 = vpop.permute.xlu0 %939
  %941 = vrot.lane.b32.xlu0 %v928, 64
  %v942 = vpop.permute.xlu0 %941
  %v947 = vadd.f32 %v767, %v936
  %v948 = vadd.f32 %v768, %v938
  %v949 = vadd.f32 %v769, %v940
  %v950 = vadd.f32 %v770, %v942
  %v951 = vtanh.pop %v947
  %v952 = vtanh.pop %v948
  %v953 = vtanh.pop %v949
  %v954 = vtanh.pop %v950
  %v955 = vmul.f32 %v850, %v763
  %v956 = vmul.f32 %v851, %v764
  %v957 = vmul.f32 %v852, %v765
  %v958 = vmul.f32 %v853, %v766
  %v959 = vsub.f32 1.0, %v850
  %v960 = vsub.f32 1.0, %v851
  %v961 = vsub.f32 1.0, %v852
  %v962 = vsub.f32 1.0, %v853
  %967 = vrot.lane.b32.xlu0 %v951, 96
  %v968 = vpop.permute.xlu0 %967
  %969 = vrot.lane.b32.xlu0 %v952, 96
  %v970 = vpop.permute.xlu0 %969
  %971 = vrot.lane.b32.xlu0 %v953, 96
  %v972 = vpop.permute.xlu0 %971
  %973 = vrot.lane.b32.xlu0 %v954, 96
  %v974 = vpop.permute.xlu0 %973
  %v979 = vmul.f32 %v959, %v968
  %v980 = vmul.f32 %v960, %v970
  %v981 = vmul.f32 %v961, %v972
  %v982 = vmul.f32 %v962, %v974
  %v983 = vadd.f32 %v955, %v979
  %v984 = vadd.f32 %v956, %v980
  %v985 = vadd.f32 %v957, %v981
  %v986 = vadd.f32 %v958, %v982
  %v987 = vld [vmem:[#allocation2 + $0x60] sm:$0xff]
  %v988 = vld [vmem:[#allocation2 + $0x68] sm:$0xff]
  %v989 = vld [vmem:[#allocation2 + $0x70] sm:$0xff]
  %v990 = vld [vmem:[#allocation2 + $0x78] sm:$0xff]
  %v991 = vpack.c.bf16 %v984, %v983
  %v992 = vpack.c.bf16 %v986, %v985
  %995 = vrot.lane.b32.xlu0 %v991, 96
  %v996 = vpop.permute.xlu0 %995
  %997 = vrot.lane.b32.xlu0 %v992, 96
  %v998 = vpop.permute.xlu0 %997
  %v1000 = vsel %vm355, %v996, 0
  %v1003 = vsel %vm355, %v998, 0
  %1005 = vmatprep.subr.bf16.mxu0 0
  %1006 = vmatpush1.bf16.msra.mxu0 %v351
  %1007 = vmatprep.subr.bf16.mxu0 0
  %1008 = vmatpush1.bf16.msra.mxu0 %v352
  %1009 = vmatprep.subr.bf16.mxu0 0
  %1010 = vmatpush1.bf16.msra.mxu0 0
  %1011 = vmatprep.subr.bf16.mxu0 0
  %1012 = vmatpush1.bf16.msra.mxu0 0
  %1013 = vmatprep.subr.bf16.mxu0 0
  %1014 = vmatpush1.bf16.msra.mxu0 0
  %1015 = vmatprep.subr.bf16.mxu0 0
  %1016 = vmatpush1.bf16.msra.mxu0 0
  %1017 = vmatprep.subr.bf16.mxu0 0
  %1018 = vmatpush1.bf16.msra.mxu0 0
  %1019 = vmatprep.subr.bf16.mxu0 0
  %1020 = vmatpush1.bf16.msra.mxu0 0
  %1021 = vmatprep.subr.bf16.mxu0 0
  %1022 = vmatpush1.bf16.msra.mxu0 0
  %1023 = vmatprep.subr.bf16.mxu0 0
  %1024 = vmatpush1.bf16.msra.mxu0 0
  %1025 = vmatprep.subr.bf16.mxu0 0
  %1026 = vmatpush1.bf16.msra.mxu0 0
  %1027 = vmatprep.subr.bf16.mxu0 0
  %1028 = vmatpush1.bf16.msra.mxu0 0
  %1029 = vmatprep.subr.bf16.mxu0 0
  %1030 = vmatpush1.bf16.msra.mxu0 0
  %1031 = vmatprep.subr.bf16.mxu0 0
  %1032 = vmatpush1.bf16.msra.mxu0 0
  %1033 = vmatprep.subr.bf16.mxu0 0
  %1034 = vmatpush1.bf16.msra.mxu0 0
  %1035 = vmatprep.subr.bf16.mxu0 0
  %1036 = vmatpush1.bf16.msra.mxu0 0
  %1037 = vmatprep.mubr.bf16.mxu0 0
  %1038 = vmatmul.mubr.bf16.gmra.mrb[0].mxu0 %v1000
  %v1039 = vpop.f32.mrb[0].mxu0
  %v1040 = vadd.f32 0.0, %v1039
  %v1041 = vpop.f32.mrb[0].mxu0
  %v1042 = vpop.f32.mrb[0].mxu0
  %v1043 = vadd.f32 0.0, %v1042
  %v1044 = vpop.f32.mrb[0].mxu0
  %1045 = vmatprep.mubr.bf16.mxu0 0
  %1046 = vmatmul.mubr.bf16.gmra.mrb[0].mxu0 %v1003
  %v1047 = vpop.f32.mrb[0].mxu0
  %v1048 = vadd.f32 0.0, %v1047
  %v1049 = vpop.f32.mrb[0].mxu0
  %v1050 = vpop.f32.mrb[0].mxu0
  %v1051 = vadd.f32 0.0, %v1050
  %v1052 = vpop.f32.mrb[0].mxu0
  %1053 = vdwg.mxu0
  %v1054 = vadd.f32 %v987, %v1040
  %v1055 = vadd.f32 %v988, %v1043
  %v1056 = vadd.f32 %v989, %v1048
  %v1057 = vadd.f32 %v990, %v1051
  %v1058 = vmul.f32 %v1054, 0.5
  %v1059 = vmul.f32 %v1055, 0.5
  %v1060 = vmul.f32 %v1056, 0.5
  %v1061 = vmul.f32 %v1057, 0.5
  %v1062 = vtanh.pop %v1058
  %v1063 = vtanh.pop %v1059
  %v1064 = vtanh.pop %v1060
  %v1065 = vtanh.pop %v1061
  %v1066 = vmul.f32 %v1062, 0.5
  %v1067 = vmul.f32 %v1063, 0.5
  %v1068 = vmul.f32 %v1064, 0.5
  %v1069 = vmul.f32 %v1065, 0.5
  %v1070 = vadd.f32 %v1066, 0.5
  %v1071 = vadd.f32 %v1067, 0.5
  %v1072 = vadd.f32 %v1068, 0.5
  %v1073 = vadd.f32 %v1069, 0.5
  %1078 = vrot.lane.b32.xlu0 %v983, 96
  %v1079 = vpop.permute.xlu0 %1078
  %1080 = vrot.lane.b32.xlu0 %v984, 96
  %v1081 = vpop.permute.xlu0 %1080
  %1082 = vrot.lane.b32.xlu0 %v985, 96
  %v1083 = vpop.permute.xlu0 %1082
  %1084 = vrot.lane.b32.xlu0 %v986, 96
  %v1085 = vpop.permute.xlu0 %1084
  %v1090 = vmul.f32 %v1070, %v1079
  %v1091 = vmul.f32 %v1071, %v1081
  %v1092 = vmul.f32 %v1072, %v1083
  %v1093 = vmul.f32 %v1073, %v1085
  %v1094 = vpack.c.bf16 %v1091, %v1090
  %v1095 = vpack.c.bf16 %v1093, %v1092
  %v1097 = vsel %vm355, %v1094, 0
  %v1100 = vsel %vm355, %v1095, 0
  %1102 = vmatprep.subr.bf16.mxu0 0
  %1103 = vmatpush1.bf16.msra.mxu0 %v435
  %1104 = vmatprep.subr.bf16.mxu0 0
  %1105 = vmatpush1.bf16.msra.mxu0 %v437
  %1106 = vmatprep.subr.bf16.mxu0 0
  %1107 = vmatpush1.bf16.msra.mxu0 0
  %1108 = vmatprep.subr.bf16.mxu0 0
  %1109 = vmatpush1.bf16.msra.mxu0 0
  %1110 = vmatprep.subr.bf16.mxu0 0
  %1111 = vmatpush1.bf16.msra.mxu0 0
  %1112 = vmatprep.subr.bf16.mxu0 0
  %1113 = vmatpush1.bf16.msra.mxu0 0
  %1114 = vmatprep.subr.bf16.mxu0 0
  %1115 = vmatpush1.bf16.msra.mxu0 0
  %1116 = vmatprep.subr.bf16.mxu0 0
  %1117 = vmatpush1.bf16.msra.mxu0 0
  %1118 = vmatprep.subr.bf16.mxu0 0
  %1119 = vmatpush1.bf16.msra.mxu0 0
  %1120 = vmatprep.subr.bf16.mxu0 0
  %1121 = vmatpush1.bf16.msra.mxu0 0
  %1122 = vmatprep.subr.bf16.mxu0 0
  %1123 = vmatpush1.bf16.msra.mxu0 0
  %1124 = vmatprep.subr.bf16.mxu0 0
  %1125 = vmatpush1.bf16.msra.mxu0 0
  %1126 = vmatprep.subr.bf16.mxu0 0
  %1127 = vmatpush1.bf16.msra.mxu0 0
  %1128 = vmatprep.subr.bf16.mxu0 0
  %1129 = vmatpush1.bf16.msra.mxu0 0
  %1130 = vmatprep.subr.bf16.mxu0 0
  %1131 = vmatpush1.bf16.msra.mxu0 0
  %1132 = vmatprep.subr.bf16.mxu0 0
  %1133 = vmatpush1.bf16.msra.mxu0 0
  %1134 = vmatprep.mubr.bf16.mxu0 0
  %1135 = vmatmul.mubr.bf16.gmra.mrb[0].mxu0 %v1097
  %v1136 = vpop.f32.mrb[0].mxu0
  %v1137 = vadd.f32 0.0, %v1136
  %v1138 = vpop.f32.mrb[0].mxu0
  %v1139 = vpop.f32.mrb[0].mxu0
  %v1140 = vadd.f32 0.0, %v1139
  %v1141 = vpop.f32.mrb[0].mxu0
  %1142 = vmatprep.mubr.bf16.mxu0 0
  %1143 = vmatmul.mubr.bf16.gmra.mrb[0].mxu0 %v1100
  %v1144 = vpop.f32.mrb[0].mxu0
  %v1145 = vadd.f32 0.0, %v1144
  %v1146 = vpop.f32.mrb[0].mxu0
  %v1147 = vpop.f32.mrb[0].mxu0
  %v1148 = vadd.f32 0.0, %v1147
  %v1149 = vpop.f32.mrb[0].mxu0
  %1150 = vdwg.mxu0
  %1155 = vrot.lane.b32.xlu0 %v1137, 64
  %v1156 = vpop.permute.xlu0 %1155
  %1157 = vrot.lane.b32.xlu0 %v1140, 64
  %v1158 = vpop.permute.xlu0 %1157
  %1159 = vrot.lane.b32.xlu0 %v1145, 64
  %v1160 = vpop.permute.xlu0 %1159
  %1161 = vrot.lane.b32.xlu0 %v1148, 64
  %v1162 = vpop.permute.xlu0 %1161
  %v1167 = vadd.f32 %v987, %v1156
  %v1168 = vadd.f32 %v988, %v1158
  %v1169 = vadd.f32 %v989, %v1160
  %v1170 = vadd.f32 %v990, %v1162
  %v1171 = vtanh.pop %v1167
  %v1172 = vtanh.pop %v1168
  %v1173 = vtanh.pop %v1169
  %v1174 = vtanh.pop %v1170
  %v1175 = vmul.f32 %v1070, %v983
  %v1176 = vmul.f32 %v1071, %v984
  %v1177 = vmul.f32 %v1072, %v985
  %v1178 = vmul.f32 %v1073, %v986
  %v1179 = vsub.f32 1.0, %v1070
  %v1180 = vsub.f32 1.0, %v1071
  %v1181 = vsub.f32 1.0, %v1072
  %v1182 = vsub.f32 1.0, %v1073
  %1187 = vrot.lane.b32.xlu0 %v1171, 96
  %v1188 = vpop.permute.xlu0 %1187
  %1189 = vrot.lane.b32.xlu0 %v1172, 96
  %v1190 = vpop.permute.xlu0 %1189
  %1191 = vrot.lane.b32.xlu0 %v1173, 96
  %v1192 = vpop.permute.xlu0 %1191
  %1193 = vrot.lane.b32.xlu0 %v1174, 96
  %v1194 = vpop.permute.xlu0 %1193
  %v1199 = vmul.f32 %v1179, %v1188
  %v1200 = vmul.f32 %v1180, %v1190
  %v1201 = vmul.f32 %v1181, %v1192
  %v1202 = vmul.f32 %v1182, %v1194
  %v1203 = vadd.f32 %v1175, %v1199
  %v1204 = vadd.f32 %v1176, %v1200
  %v1205 = vadd.f32 %v1177, %v1201
  %v1206 = vadd.f32 %v1178, %v1202
  %v1207 = vld [vmem:[#allocation2 + $0x80] sm:$0xff]
  %v1208 = vld [vmem:[#allocation2 + $0x88] sm:$0xff]
  %v1209 = vld [vmem:[#allocation2 + $0x90] sm:$0xff]
  %v1210 = vld [vmem:[#allocation2 + $0x98] sm:$0xff]
  %v1211 = vpack.c.bf16 %v1204, %v1203
  %v1212 = vpack.c.bf16 %v1206, %v1205
  %1215 = vrot.lane.b32.xlu0 %v1211, 96
  %v1216 = vpop.permute.xlu0 %1215
  %1217 = vrot.lane.b32.xlu0 %v1212, 96
  %v1218 = vpop.permute.xlu0 %1217
  %v1220 = vsel %vm355, %v1216, 0
  %v1223 = vsel %vm355, %v1218, 0
  %1225 = vmatprep.subr.bf16.mxu0 0
  %1226 = vmatpush1.bf16.msra.mxu0 %v351
  %1227 = vmatprep.subr.bf16.mxu0 0
  %1228 = vmatpush1.bf16.msra.mxu0 %v352
  %1229 = vmatprep.subr.bf16.mxu0 0
  %1230 = vmatpush1.bf16.msra.mxu0 0
  %1231 = vmatprep.subr.bf16.mxu0 0
  %1232 = vmatpush1.bf16.msra.mxu0 0
  %1233 = vmatprep.subr.bf16.mxu0 0
  %1234 = vmatpush1.bf16.msra.mxu0 0
  %1235 = vmatprep.subr.bf16.mxu0 0
  %1236 = vmatpush1.bf16.msra.mxu0 0
  %1237 = vmatprep.subr.bf16.mxu0 0
  %1238 = vmatpush1.bf16.msra.mxu0 0
  %1239 = vmatprep.subr.bf16.mxu0 0
  %1240 = vmatpush1.bf16.msra.mxu0 0
  %1241 = vmatprep.subr.bf16.mxu0 0
  %1242 = vmatpush1.bf16.msra.mxu0 0
  %1243 = vmatprep.subr.bf16.mxu0 0
  %1244 = vmatpush1.bf16.msra.mxu0 0
  %1245 = vmatprep.subr.bf16.mxu0 0
  %1246 = vmatpush1.bf16.msra.mxu0 0
  %1247 = vmatprep.subr.bf16.mxu0 0
  %1248 = vmatpush1.bf16.msra.mxu0 0
  %1249 = vmatprep.subr.bf16.mxu0 0
  %1250 = vmatpush1.bf16.msra.mxu0 0
  %1251 = vmatprep.subr.bf16.mxu0 0
  %1252 = vmatpush1.bf16.msra.mxu0 0
  %1253 = vmatprep.subr.bf16.mxu0 0
  %1254 = vmatpush1.bf16.msra.mxu0 0
  %1255 = vmatprep.subr.bf16.mxu0 0
  %1256 = vmatpush1.bf16.msra.mxu0 0
  %1257 = vmatprep.mubr.bf16.mxu0 0
  %1258 = vmatmul.mubr.bf16.gmra.mrb[0].mxu0 %v1220
  %v1259 = vpop.f32.mrb[0].mxu0
  %v1260 = vadd.f32 0.0, %v1259
  %v1261 = vpop.f32.mrb[0].mxu0
  %v1262 = vpop.f32.mrb[0].mxu0
  %v1263 = vadd.f32 0.0, %v1262
  %v1264 = vpop.f32.mrb[0].mxu0
  %1265 = vmatprep.mubr.bf16.mxu0 0
  %1266 = vmatmul.mubr.bf16.gmra.mrb[0].mxu0 %v1223
  %v1267 = vpop.f32.mrb[0].mxu0
  %v1268 = vadd.f32 0.0, %v1267
  %v1269 = vpop.f32.mrb[0].mxu0
  %v1270 = vpop.f32.mrb[0].mxu0
  %v1271 = vadd.f32 0.0, %v1270
  %v1272 = vpop.f32.mrb[0].mxu0
  %1273 = vdwg.mxu0
  %v1274 = vadd.f32 %v1207, %v1260
  %v1275 = vadd.f32 %v1208, %v1263
  %v1276 = vadd.f32 %v1209, %v1268
  %v1277 = vadd.f32 %v1210, %v1271
  %v1278 = vmul.f32 %v1274, 0.5
  %v1279 = vmul.f32 %v1275, 0.5
  %v1280 = vmul.f32 %v1276, 0.5
  %v1281 = vmul.f32 %v1277, 0.5
  %v1282 = vtanh.pop %v1278
  %v1283 = vtanh.pop %v1279
  %v1284 = vtanh.pop %v1280
  %v1285 = vtanh.pop %v1281
  %v1286 = vmul.f32 %v1282, 0.5
  %v1287 = vmul.f32 %v1283, 0.5
  %v1288 = vmul.f32 %v1284, 0.5
  %v1289 = vmul.f32 %v1285, 0.5
  %v1290 = vadd.f32 %v1286, 0.5
  %v1291 = vadd.f32 %v1287, 0.5
  %v1292 = vadd.f32 %v1288, 0.5
  %v1293 = vadd.f32 %v1289, 0.5
  %1298 = vrot.lane.b32.xlu0 %v1203, 96
  %v1299 = vpop.permute.xlu0 %1298
  %1300 = vrot.lane.b32.xlu0 %v1204, 96
  %v1301 = vpop.permute.xlu0 %1300
  %1302 = vrot.lane.b32.xlu0 %v1205, 96
  %v1303 = vpop.permute.xlu0 %1302
  %1304 = vrot.lane.b32.xlu0 %v1206, 96
  %v1305 = vpop.permute.xlu0 %1304
  %v1310 = vmul.f32 %v1290, %v1299
  %v1311 = vmul.f32 %v1291, %v1301
  %v1312 = vmul.f32 %v1292, %v1303
  %v1313 = vmul.f32 %v1293, %v1305
  %v1314 = vpack.c.bf16 %v1311, %v1310
  %v1315 = vpack.c.bf16 %v1313, %v1312
  %v1317 = vsel %vm355, %v1314, 0
  %v1320 = vsel %vm355, %v1315, 0
  %1322 = vmatprep.subr.bf16.mxu0 0
  %1323 = vmatpush1.bf16.msra.mxu0 %v435
  %1324 = vmatprep.subr.bf16.mxu0 0
  %1325 = vmatpush1.bf16.msra.mxu0 %v437
  %1326 = vmatprep.subr.bf16.mxu0 0
  %1327 = vmatpush1.bf16.msra.mxu0 0
  %1328 = vmatprep.subr.bf16.mxu0 0
  %1329 = vmatpush1.bf16.msra.mxu0 0
  %1330 = vmatprep.subr.bf16.mxu0 0
  %1331 = vmatpush1.bf16.msra.mxu0 0
  %1332 = vmatprep.subr.bf16.mxu0 0
  %1333 = vmatpush1.bf16.msra.mxu0 0
  %1334 = vmatprep.subr.bf16.mxu0 0
  %1335 = vmatpush1.bf16.msra.mxu0 0
  %1336 = vmatprep.subr.bf16.mxu0 0
  %1337 = vmatpush1.bf16.msra.mxu0 0
  %1338 = vmatprep.subr.bf16.mxu0 0
  %1339 = vmatpush1.bf16.msra.mxu0 0
  %1340 = vmatprep.subr.bf16.mxu0 0
  %1341 = vmatpush1.bf16.msra.mxu0 0
  %1342 = vmatprep.subr.bf16.mxu0 0
  %1343 = vmatpush1.bf16.msra.mxu0 0
  %1344 = vmatprep.subr.bf16.mxu0 0
  %1345 = vmatpush1.bf16.msra.mxu0 0
  %1346 = vmatprep.subr.bf16.mxu0 0
  %1347 = vmatpush1.bf16.msra.mxu0 0
  %1348 = vmatprep.subr.bf16.mxu0 0
  %1349 = vmatpush1.bf16.msra.mxu0 0
  %1350 = vmatprep.subr.bf16.mxu0 0
  %1351 = vmatpush1.bf16.msra.mxu0 0
  %1352 = vmatprep.subr.bf16.mxu0 0
  %1353 = vmatpush1.bf16.msra.mxu0 0
  %1354 = vmatprep.mubr.bf16.mxu0 0
  %1355 = vmatmul.mubr.bf16.gmra.mrb[0].mxu0 %v1317
  %v1356 = vpop.f32.mrb[0].mxu0
  %v1357 = vadd.f32 0.0, %v1356
  %v1358 = vpop.f32.mrb[0].mxu0
  %v1359 = vpop.f32.mrb[0].mxu0
  %v1360 = vadd.f32 0.0, %v1359
  %v1361 = vpop.f32.mrb[0].mxu0
  %1362 = vmatprep.mubr.bf16.mxu0 0
  %1363 = vmatmul.mubr.bf16.gmra.mrb[0].mxu0 %v1320
  %v1364 = vpop.f32.mrb[0].mxu0
  %v1365 = vadd.f32 0.0, %v1364
  %v1366 = vpop.f32.mrb[0].mxu0
  %v1367 = vpop.f32.mrb[0].mxu0
  %v1368 = vadd.f32 0.0, %v1367
  %v1369 = vpop.f32.mrb[0].mxu0
  %1370 = vdwg.mxu0
  %1375 = vrot.lane.b32.xlu0 %v1357, 64
  %v1376 = vpop.permute.xlu0 %1375
  %1377 = vrot.lane.b32.xlu0 %v1360, 64
  %v1378 = vpop.permute.xlu0 %1377
  %1379 = vrot.lane.b32.xlu0 %v1365, 64
  %v1380 = vpop.permute.xlu0 %1379
  %1381 = vrot.lane.b32.xlu0 %v1368, 64
  %v1382 = vpop.permute.xlu0 %1381
  %v1387 = vadd.f32 %v1207, %v1376
  %v1388 = vadd.f32 %v1208, %v1378
  %v1389 = vadd.f32 %v1209, %v1380
  %v1390 = vadd.f32 %v1210, %v1382
  %v1391 = vtanh.pop %v1387
  %v1392 = vtanh.pop %v1388
  %v1393 = vtanh.pop %v1389
  %v1394 = vtanh.pop %v1390
  %v1395 = vmul.f32 %v1290, %v1203
  %v1396 = vmul.f32 %v1291, %v1204
  %v1397 = vmul.f32 %v1292, %v1205
  %v1398 = vmul.f32 %v1293, %v1206
  %v1399 = vsub.f32 1.0, %v1290
  %v1400 = vsub.f32 1.0, %v1291
  %v1401 = vsub.f32 1.0, %v1292
  %v1402 = vsub.f32 1.0, %v1293
  %1407 = vrot.lane.b32.xlu0 %v1391, 96
  %v1408 = vpop.permute.xlu0 %1407
  %1409 = vrot.lane.b32.xlu0 %v1392, 96
  %v1410 = vpop.permute.xlu0 %1409
  %1411 = vrot.lane.b32.xlu0 %v1393, 96
  %v1412 = vpop.permute.xlu0 %1411
  %1413 = vrot.lane.b32.xlu0 %v1394, 96
  %v1414 = vpop.permute.xlu0 %1413
  %v1419 = vmul.f32 %v1399, %v1408
  %v1420 = vmul.f32 %v1400, %v1410
  %v1421 = vmul.f32 %v1401, %v1412
  %v1422 = vmul.f32 %v1402, %v1414
  %v1423 = vadd.f32 %v1395, %v1419
  %v1424 = vadd.f32 %v1396, %v1420
  %v1425 = vadd.f32 %v1397, %v1421
  %v1426 = vadd.f32 %v1398, %v1422
  %v1427 = vld [vmem:[#allocation2 + $0xa0] sm:$0xff]
  %v1428 = vld [vmem:[#allocation2 + $0xa8] sm:$0xff]
  %v1429 = vld [vmem:[#allocation2 + $0xb0] sm:$0xff]
  %v1430 = vld [vmem:[#allocation2 + $0xb8] sm:$0xff]
  %v1431 = vpack.c.bf16 %v1424, %v1423
  %v1432 = vpack.c.bf16 %v1426, %v1425
  %1435 = vrot.lane.b32.xlu0 %v1431, 96
  %v1436 = vpop.permute.xlu0 %1435
  %1437 = vrot.lane.b32.xlu0 %v1432, 96
  %v1438 = vpop.permute.xlu0 %1437
  %v1440 = vsel %vm355, %v1436, 0
  %v1443 = vsel %vm355, %v1438, 0
  %1445 = vmatprep.subr.bf16.mxu0 0
  %1446 = vmatpush1.bf16.msra.mxu0 %v351
  %1447 = vmatprep.subr.bf16.mxu0 0
  %1448 = vmatpush1.bf16.msra.mxu0 %v352
  %1449 = vmatprep.subr.bf16.mxu0 0
  %1450 = vmatpush1.bf16.msra.mxu0 0
  %1451 = vmatprep.subr.bf16.mxu0 0
  %1452 = vmatpush1.bf16.msra.mxu0 0
  %1453 = vmatprep.subr.bf16.mxu0 0
  %1454 = vmatpush1.bf16.msra.mxu0 0
  %1455 = vmatprep.subr.bf16.mxu0 0
  %1456 = vmatpush1.bf16.msra.mxu0 0
  %1457 = vmatprep.subr.bf16.mxu0 0
  %1458 = vmatpush1.bf16.msra.mxu0 0
  %1459 = vmatprep.subr.bf16.mxu0 0
  %1460 = vmatpush1.bf16.msra.mxu0 0
  %1461 = vmatprep.subr.bf16.mxu0 0
  %1462 = vmatpush1.bf16.msra.mxu0 0
  %1463 = vmatprep.subr.bf16.mxu0 0
  %1464 = vmatpush1.bf16.msra.mxu0 0
  %1465 = vmatprep.subr.bf16.mxu0 0
  %1466 = vmatpush1.bf16.msra.mxu0 0
  %1467 = vmatprep.subr.bf16.mxu0 0
  %1468 = vmatpush1.bf16.msra.mxu0 0
  %1469 = vmatprep.subr.bf16.mxu0 0
  %1470 = vmatpush1.bf16.msra.mxu0 0
  %1471 = vmatprep.subr.bf16.mxu0 0
  %1472 = vmatpush1.bf16.msra.mxu0 0
  %1473 = vmatprep.subr.bf16.mxu0 0
  %1474 = vmatpush1.bf16.msra.mxu0 0
  %1475 = vmatprep.subr.bf16.mxu0 0
  %1476 = vmatpush1.bf16.msra.mxu0 0
  %1477 = vmatprep.mubr.bf16.mxu0 0
  %1478 = vmatmul.mubr.bf16.gmra.mrb[0].mxu0 %v1440
  %v1479 = vpop.f32.mrb[0].mxu0
  %v1480 = vadd.f32 0.0, %v1479
  %v1481 = vpop.f32.mrb[0].mxu0
  %v1482 = vpop.f32.mrb[0].mxu0
  %v1483 = vadd.f32 0.0, %v1482
  %v1484 = vpop.f32.mrb[0].mxu0
  %1485 = vmatprep.mubr.bf16.mxu0 0
  %1486 = vmatmul.mubr.bf16.gmra.mrb[0].mxu0 %v1443
  %v1487 = vpop.f32.mrb[0].mxu0
  %v1488 = vadd.f32 0.0, %v1487
  %v1489 = vpop.f32.mrb[0].mxu0
  %v1490 = vpop.f32.mrb[0].mxu0
  %v1491 = vadd.f32 0.0, %v1490
  %v1492 = vpop.f32.mrb[0].mxu0
  %1493 = vdwg.mxu0
  %v1494 = vadd.f32 %v1427, %v1480
  %v1495 = vadd.f32 %v1428, %v1483
  %v1496 = vadd.f32 %v1429, %v1488
  %v1497 = vadd.f32 %v1430, %v1491
  %v1498 = vmul.f32 %v1494, 0.5
  %v1499 = vmul.f32 %v1495, 0.5
  %v1500 = vmul.f32 %v1496, 0.5
  %v1501 = vmul.f32 %v1497, 0.5
  %v1502 = vtanh.pop %v1498
  %v1503 = vtanh.pop %v1499
  %v1504 = vtanh.pop %v1500
  %v1505 = vtanh.pop %v1501
  %v1506 = vmul.f32 %v1502, 0.5
  %v1507 = vmul.f32 %v1503, 0.5
  %v1508 = vmul.f32 %v1504, 0.5
  %v1509 = vmul.f32 %v1505, 0.5
  %v1510 = vadd.f32 %v1506, 0.5
  %v1511 = vadd.f32 %v1507, 0.5
  %v1512 = vadd.f32 %v1508, 0.5
  %v1513 = vadd.f32 %v1509, 0.5
  %1518 = vrot.lane.b32.xlu0 %v1423, 96
  %v1519 = vpop.permute.xlu0 %1518
  %1520 = vrot.lane.b32.xlu0 %v1424, 96
  %v1521 = vpop.permute.xlu0 %1520
  %1522 = vrot.lane.b32.xlu0 %v1425, 96
  %v1523 = vpop.permute.xlu0 %1522
  %1524 = vrot.lane.b32.xlu0 %v1426, 96
  %v1525 = vpop.permute.xlu0 %1524
  %v1530 = vmul.f32 %v1510, %v1519
  %v1531 = vmul.f32 %v1511, %v1521
  %v1532 = vmul.f32 %v1512, %v1523
  %v1533 = vmul.f32 %v1513, %v1525
  %v1534 = vpack.c.bf16 %v1531, %v1530
  %v1535 = vpack.c.bf16 %v1533, %v1532
  %v1537 = vsel %vm355, %v1534, 0
  %v1540 = vsel %vm355, %v1535, 0
  %1542 = vmatprep.subr.bf16.mxu0 0
  %1543 = vmatpush1.bf16.msra.mxu0 %v435
  %1544 = vmatprep.subr.bf16.mxu0 0
  %1545 = vmatpush1.bf16.msra.mxu0 %v437
  %1546 = vmatprep.subr.bf16.mxu0 0
  %1547 = vmatpush1.bf16.msra.mxu0 0
  %1548 = vmatprep.subr.bf16.mxu0 0
  %1549 = vmatpush1.bf16.msra.mxu0 0
  %1550 = vmatprep.subr.bf16.mxu0 0
  %1551 = vmatpush1.bf16.msra.mxu0 0
  %1552 = vmatprep.subr.bf16.mxu0 0
  %1553 = vmatpush1.bf16.msra.mxu0 0
  %1554 = vmatprep.subr.bf16.mxu0 0
  %1555 = vmatpush1.bf16.msra.mxu0 0
  %1556 = vmatprep.subr.bf16.mxu0 0
  %1557 = vmatpush1.bf16.msra.mxu0 0
  %1558 = vmatprep.subr.bf16.mxu0 0
  %1559 = vmatpush1.bf16.msra.mxu0 0
  %1560 = vmatprep.subr.bf16.mxu0 0
  %1561 = vmatpush1.bf16.msra.mxu0 0
  %1562 = vmatprep.subr.bf16.mxu0 0
  %1563 = vmatpush1.bf16.msra.mxu0 0
  %1564 = vmatprep.subr.bf16.mxu0 0
  %1565 = vmatpush1.bf16.msra.mxu0 0
  %1566 = vmatprep.subr.bf16.mxu0 0
  %1567 = vmatpush1.bf16.msra.mxu0 0
  %1568 = vmatprep.subr.bf16.mxu0 0
  %1569 = vmatpush1.bf16.msra.mxu0 0
  %1570 = vmatprep.subr.bf16.mxu0 0
  %1571 = vmatpush1.bf16.msra.mxu0 0
  %1572 = vmatprep.subr.bf16.mxu0 0
  %1573 = vmatpush1.bf16.msra.mxu0 0
  %1574 = vmatprep.mubr.bf16.mxu0 0
  %1575 = vmatmul.mubr.bf16.gmra.mrb[0].mxu0 %v1537
  %v1576 = vpop.f32.mrb[0].mxu0
  %v1577 = vadd.f32 0.0, %v1576
  %v1578 = vpop.f32.mrb[0].mxu0
  %v1579 = vpop.f32.mrb[0].mxu0
  %v1580 = vadd.f32 0.0, %v1579
  %v1581 = vpop.f32.mrb[0].mxu0
  %1582 = vmatprep.mubr.bf16.mxu0 0
  %1583 = vmatmul.mubr.bf16.gmra.mrb[0].mxu0 %v1540
  %v1584 = vpop.f32.mrb[0].mxu0
  %v1585 = vadd.f32 0.0, %v1584
  %v1586 = vpop.f32.mrb[0].mxu0
  %v1587 = vpop.f32.mrb[0].mxu0
  %v1588 = vadd.f32 0.0, %v1587
  %v1589 = vpop.f32.mrb[0].mxu0
  %1590 = vdwg.mxu0
  %1595 = vrot.lane.b32.xlu0 %v1577, 64
  %v1596 = vpop.permute.xlu0 %1595
  %1597 = vrot.lane.b32.xlu0 %v1580, 64
  %v1598 = vpop.permute.xlu0 %1597
  %1599 = vrot.lane.b32.xlu0 %v1585, 64
  %v1600 = vpop.permute.xlu0 %1599
  %1601 = vrot.lane.b32.xlu0 %v1588, 64
  %v1602 = vpop.permute.xlu0 %1601
  %v1607 = vadd.f32 %v1427, %v1596
  %v1608 = vadd.f32 %v1428, %v1598
  %v1609 = vadd.f32 %v1429, %v1600
  %v1610 = vadd.f32 %v1430, %v1602
  %v1611 = vtanh.pop %v1607
  %v1612 = vtanh.pop %v1608
  %v1613 = vtanh.pop %v1609
  %v1614 = vtanh.pop %v1610
  %v1615 = vmul.f32 %v1510, %v1423
  %v1616 = vmul.f32 %v1511, %v1424
  %v1617 = vmul.f32 %v1512, %v1425
  %v1618 = vmul.f32 %v1513, %v1426
  %v1619 = vsub.f32 1.0, %v1510
  %v1620 = vsub.f32 1.0, %v1511
  %v1621 = vsub.f32 1.0, %v1512
  %v1622 = vsub.f32 1.0, %v1513
  %1627 = vrot.lane.b32.xlu0 %v1611, 96
  %v1628 = vpop.permute.xlu0 %1627
  %1629 = vrot.lane.b32.xlu0 %v1612, 96
  %v1630 = vpop.permute.xlu0 %1629
  %1631 = vrot.lane.b32.xlu0 %v1613, 96
  %v1632 = vpop.permute.xlu0 %1631
  %1633 = vrot.lane.b32.xlu0 %v1614, 96
  %v1634 = vpop.permute.xlu0 %1633
  %v1639 = vmul.f32 %v1619, %v1628
  %v1640 = vmul.f32 %v1620, %v1630
  %v1641 = vmul.f32 %v1621, %v1632
  %v1642 = vmul.f32 %v1622, %v1634
  %v1643 = vadd.f32 %v1615, %v1639
  %v1644 = vadd.f32 %v1616, %v1640
  %v1645 = vadd.f32 %v1617, %v1641
  %v1646 = vadd.f32 %v1618, %v1642
  %v1647 = vld [vmem:[#allocation2 + $0xc0] sm:$0xff]
  %v1648 = vld [vmem:[#allocation2 + $0xc8] sm:$0xff]
  %v1649 = vld [vmem:[#allocation2 + $0xd0] sm:$0xff]
  %v1650 = vld [vmem:[#allocation2 + $0xd8] sm:$0xff]
  %v1651 = vpack.c.bf16 %v1644, %v1643
  %v1652 = vpack.c.bf16 %v1646, %v1645
  %1655 = vrot.lane.b32.xlu0 %v1651, 96
  %v1656 = vpop.permute.xlu0 %1655
  %1657 = vrot.lane.b32.xlu0 %v1652, 96
  %v1658 = vpop.permute.xlu0 %1657
  %v1660 = vsel %vm355, %v1656, 0
  %v1663 = vsel %vm355, %v1658, 0
  %1665 = vmatprep.subr.bf16.mxu0 0
  %1666 = vmatpush1.bf16.msra.mxu0 %v351
  %1667 = vmatprep.subr.bf16.mxu0 0
  %1668 = vmatpush1.bf16.msra.mxu0 %v352
  %1669 = vmatprep.subr.bf16.mxu0 0
  %1670 = vmatpush1.bf16.msra.mxu0 0
  %1671 = vmatprep.subr.bf16.mxu0 0
  %1672 = vmatpush1.bf16.msra.mxu0 0
  %1673 = vmatprep.subr.bf16.mxu0 0
  %1674 = vmatpush1.bf16.msra.mxu0 0
  %1675 = vmatprep.subr.bf16.mxu0 0
  %1676 = vmatpush1.bf16.msra.mxu0 0
  %1677 = vmatprep.subr.bf16.mxu0 0
  %1678 = vmatpush1.bf16.msra.mxu0 0
  %1679 = vmatprep.subr.bf16.mxu0 0
  %1680 = vmatpush1.bf16.msra.mxu0 0
  %1681 = vmatprep.subr.bf16.mxu0 0
  %1682 = vmatpush1.bf16.msra.mxu0 0
  %1683 = vmatprep.subr.bf16.mxu0 0
  %1684 = vmatpush1.bf16.msra.mxu0 0
  %1685 = vmatprep.subr.bf16.mxu0 0
  %1686 = vmatpush1.bf16.msra.mxu0 0
  %1687 = vmatprep.subr.bf16.mxu0 0
  %1688 = vmatpush1.bf16.msra.mxu0 0
  %1689 = vmatprep.subr.bf16.mxu0 0
  %1690 = vmatpush1.bf16.msra.mxu0 0
  %1691 = vmatprep.subr.bf16.mxu0 0
  %1692 = vmatpush1.bf16.msra.mxu0 0
  %1693 = vmatprep.subr.bf16.mxu0 0
  %1694 = vmatpush1.bf16.msra.mxu0 0
  %1695 = vmatprep.subr.bf16.mxu0 0
  %1696 = vmatpush1.bf16.msra.mxu0 0
  %1697 = vmatprep.mubr.bf16.mxu0 0
  %1698 = vmatmul.mubr.bf16.gmra.mrb[0].mxu0 %v1660
  %v1699 = vpop.f32.mrb[0].mxu0
  %v1700 = vadd.f32 0.0, %v1699
  %v1701 = vpop.f32.mrb[0].mxu0
  %v1702 = vpop.f32.mrb[0].mxu0
  %v1703 = vadd.f32 0.0, %v1702
  %v1704 = vpop.f32.mrb[0].mxu0
  %1705 = vmatprep.mubr.bf16.mxu0 0
  %1706 = vmatmul.mubr.bf16.gmra.mrb[0].mxu0 %v1663
  %v1707 = vpop.f32.mrb[0].mxu0
  %v1708 = vadd.f32 0.0, %v1707
  %v1709 = vpop.f32.mrb[0].mxu0
  %v1710 = vpop.f32.mrb[0].mxu0
  %v1711 = vadd.f32 0.0, %v1710
  %v1712 = vpop.f32.mrb[0].mxu0
  %1713 = vdwg.mxu0
  %v1714 = vadd.f32 %v1647, %v1700
  %v1715 = vadd.f32 %v1648, %v1703
  %v1716 = vadd.f32 %v1649, %v1708
  %v1717 = vadd.f32 %v1650, %v1711
  %v1718 = vmul.f32 %v1714, 0.5
  %v1719 = vmul.f32 %v1715, 0.5
  %v1720 = vmul.f32 %v1716, 0.5
  %v1721 = vmul.f32 %v1717, 0.5
  %v1722 = vtanh.pop %v1718
  %v1723 = vtanh.pop %v1719
  %v1724 = vtanh.pop %v1720
  %v1725 = vtanh.pop %v1721
  %v1726 = vmul.f32 %v1722, 0.5
  %v1727 = vmul.f32 %v1723, 0.5
  %v1728 = vmul.f32 %v1724, 0.5
  %v1729 = vmul.f32 %v1725, 0.5
  %v1730 = vadd.f32 %v1726, 0.5
  %v1731 = vadd.f32 %v1727, 0.5
  %v1732 = vadd.f32 %v1728, 0.5
  %v1733 = vadd.f32 %v1729, 0.5
  %1738 = vrot.lane.b32.xlu0 %v1643, 96
  %v1739 = vpop.permute.xlu0 %1738
  %1740 = vrot.lane.b32.xlu0 %v1644, 96
  %v1741 = vpop.permute.xlu0 %1740
  %1742 = vrot.lane.b32.xlu0 %v1645, 96
  %v1743 = vpop.permute.xlu0 %1742
  %1744 = vrot.lane.b32.xlu0 %v1646, 96
  %v1745 = vpop.permute.xlu0 %1744
  %v1750 = vmul.f32 %v1730, %v1739
  %v1751 = vmul.f32 %v1731, %v1741
  %v1752 = vmul.f32 %v1732, %v1743
  %v1753 = vmul.f32 %v1733, %v1745
  %v1754 = vpack.c.bf16 %v1751, %v1750
  %v1755 = vpack.c.bf16 %v1753, %v1752
  %v1757 = vsel %vm355, %v1754, 0
  %v1760 = vsel %vm355, %v1755, 0
  %1762 = vmatprep.subr.bf16.mxu0 0
  %1763 = vmatpush1.bf16.msra.mxu0 %v435
  %1764 = vmatprep.subr.bf16.mxu0 0
  %1765 = vmatpush1.bf16.msra.mxu0 %v437
  %1766 = vmatprep.subr.bf16.mxu0 0
  %1767 = vmatpush1.bf16.msra.mxu0 0
  %1768 = vmatprep.subr.bf16.mxu0 0
  %1769 = vmatpush1.bf16.msra.mxu0 0
  %1770 = vmatprep.subr.bf16.mxu0 0
  %1771 = vmatpush1.bf16.msra.mxu0 0
  %1772 = vmatprep.subr.bf16.mxu0 0
  %1773 = vmatpush1.bf16.msra.mxu0 0
  %1774 = vmatprep.subr.bf16.mxu0 0
  %1775 = vmatpush1.bf16.msra.mxu0 0
  %1776 = vmatprep.subr.bf16.mxu0 0
  %1777 = vmatpush1.bf16.msra.mxu0 0
  %1778 = vmatprep.subr.bf16.mxu0 0
  %1779 = vmatpush1.bf16.msra.mxu0 0
  %1780 = vmatprep.subr.bf16.mxu0 0
  %1781 = vmatpush1.bf16.msra.mxu0 0
  %1782 = vmatprep.subr.bf16.mxu0 0
  %1783 = vmatpush1.bf16.msra.mxu0 0
  %1784 = vmatprep.subr.bf16.mxu0 0
  %1785 = vmatpush1.bf16.msra.mxu0 0
  %1786 = vmatprep.subr.bf16.mxu0 0
  %1787 = vmatpush1.bf16.msra.mxu0 0
  %1788 = vmatprep.subr.bf16.mxu0 0
  %1789 = vmatpush1.bf16.msra.mxu0 0
  %1790 = vmatprep.subr.bf16.mxu0 0
  %1791 = vmatpush1.bf16.msra.mxu0 0
  %1792 = vmatprep.subr.bf16.mxu0 0
  %1793 = vmatpush1.bf16.msra.mxu0 0
  %1794 = vmatprep.mubr.bf16.mxu0 0
  %1795 = vmatmul.mubr.bf16.gmra.mrb[0].mxu0 %v1757
  %v1796 = vpop.f32.mrb[0].mxu0
  %v1797 = vadd.f32 0.0, %v1796
  %v1798 = vpop.f32.mrb[0].mxu0
  %v1799 = vpop.f32.mrb[0].mxu0
  %v1800 = vadd.f32 0.0, %v1799
  %v1801 = vpop.f32.mrb[0].mxu0
  %1802 = vmatprep.mubr.bf16.mxu0 0
  %1803 = vmatmul.mubr.bf16.gmra.mrb[0].mxu0 %v1760
  %v1804 = vpop.f32.mrb[0].mxu0
  %v1805 = vadd.f32 0.0, %v1804
  %v1806 = vpop.f32.mrb[0].mxu0
  %v1807 = vpop.f32.mrb[0].mxu0
  %v1808 = vadd.f32 0.0, %v1807
  %v1809 = vpop.f32.mrb[0].mxu0
  %1810 = vdwg.mxu0
  %1815 = vrot.lane.b32.xlu0 %v1797, 64
  %v1816 = vpop.permute.xlu0 %1815
  %1817 = vrot.lane.b32.xlu0 %v1800, 64
  %v1818 = vpop.permute.xlu0 %1817
  %1819 = vrot.lane.b32.xlu0 %v1805, 64
  %v1820 = vpop.permute.xlu0 %1819
  %1821 = vrot.lane.b32.xlu0 %v1808, 64
  %v1822 = vpop.permute.xlu0 %1821
  %v1827 = vadd.f32 %v1647, %v1816
  %v1828 = vadd.f32 %v1648, %v1818
  %v1829 = vadd.f32 %v1649, %v1820
  %v1830 = vadd.f32 %v1650, %v1822
  %v1831 = vtanh.pop %v1827
  %v1832 = vtanh.pop %v1828
  %v1833 = vtanh.pop %v1829
  %v1834 = vtanh.pop %v1830
  %v1835 = vmul.f32 %v1730, %v1643
  %v1836 = vmul.f32 %v1731, %v1644
  %v1837 = vmul.f32 %v1732, %v1645
  %v1838 = vmul.f32 %v1733, %v1646
  %v1839 = vsub.f32 1.0, %v1730
  %v1840 = vsub.f32 1.0, %v1731
  %v1841 = vsub.f32 1.0, %v1732
  %v1842 = vsub.f32 1.0, %v1733
  %1847 = vrot.lane.b32.xlu0 %v1831, 96
  %v1848 = vpop.permute.xlu0 %1847
  %1849 = vrot.lane.b32.xlu0 %v1832, 96
  %v1850 = vpop.permute.xlu0 %1849
  %1851 = vrot.lane.b32.xlu0 %v1833, 96
  %v1852 = vpop.permute.xlu0 %1851
  %1853 = vrot.lane.b32.xlu0 %v1834, 96
  %v1854 = vpop.permute.xlu0 %1853
  %v1859 = vmul.f32 %v1839, %v1848
  %v1860 = vmul.f32 %v1840, %v1850
  %v1861 = vmul.f32 %v1841, %v1852
  %v1862 = vmul.f32 %v1842, %v1854
  %v1863 = vadd.f32 %v1835, %v1859
  %v1864 = vadd.f32 %v1836, %v1860
  %v1865 = vadd.f32 %v1837, %v1861
  %v1866 = vadd.f32 %v1838, %v1862
  %v1867 = vld [vmem:[#allocation2 + $0xe0] sm:$0xff]
  %v1868 = vld [vmem:[#allocation2 + $0xe8] sm:$0xff]
  %v1869 = vld [vmem:[#allocation2 + $0xf0] sm:$0xff]
  %v1870 = vld [vmem:[#allocation2 + $0xf8] sm:$0xff]
  %v1871 = vpack.c.bf16 %v1864, %v1863
  %v1872 = vpack.c.bf16 %v1866, %v1865
  %1875 = vrot.lane.b32.xlu0 %v1871, 96
  %v1876 = vpop.permute.xlu0 %1875
  %1877 = vrot.lane.b32.xlu0 %v1872, 96
  %v1878 = vpop.permute.xlu0 %1877
  %v1880 = vsel %vm355, %v1876, 0
  %v1883 = vsel %vm355, %v1878, 0
  %1885 = vmatprep.subr.bf16.mxu0 0
  %1886 = vmatpush1.bf16.msra.mxu0 %v351
  %1887 = vmatprep.subr.bf16.mxu0 0
  %1888 = vmatpush1.bf16.msra.mxu0 %v352
  %1889 = vmatprep.subr.bf16.mxu0 0
  %1890 = vmatpush1.bf16.msra.mxu0 0
  %1891 = vmatprep.subr.bf16.mxu0 0
  %1892 = vmatpush1.bf16.msra.mxu0 0
  %1893 = vmatprep.subr.bf16.mxu0 0
  %1894 = vmatpush1.bf16.msra.mxu0 0
  %1895 = vmatprep.subr.bf16.mxu0 0
  %1896 = vmatpush1.bf16.msra.mxu0 0
  %1897 = vmatprep.subr.bf16.mxu0 0
  %1898 = vmatpush1.bf16.msra.mxu0 0
  %1899 = vmatprep.subr.bf16.mxu0 0
  %1900 = vmatpush1.bf16.msra.mxu0 0
  %1901 = vmatprep.subr.bf16.mxu0 0
  %1902 = vmatpush1.bf16.msra.mxu0 0
  %1903 = vmatprep.subr.bf16.mxu0 0
  %1904 = vmatpush1.bf16.msra.mxu0 0
  %1905 = vmatprep.subr.bf16.mxu0 0
  %1906 = vmatpush1.bf16.msra.mxu0 0
  %1907 = vmatprep.subr.bf16.mxu0 0
  %1908 = vmatpush1.bf16.msra.mxu0 0
  %1909 = vmatprep.subr.bf16.mxu0 0
  %1910 = vmatpush1.bf16.msra.mxu0 0
  %1911 = vmatprep.subr.bf16.mxu0 0
  %1912 = vmatpush1.bf16.msra.mxu0 0
  %1913 = vmatprep.subr.bf16.mxu0 0
  %1914 = vmatpush1.bf16.msra.mxu0 0
  %1915 = vmatprep.subr.bf16.mxu0 0
  %1916 = vmatpush1.bf16.msra.mxu0 0
  %1917 = vmatprep.mubr.bf16.mxu0 0
  %1918 = vmatmul.mubr.bf16.gmra.mrb[0].mxu0 %v1880
  %v1919 = vpop.f32.mrb[0].mxu0
  %v1920 = vadd.f32 0.0, %v1919
  %v1921 = vpop.f32.mrb[0].mxu0
  %v1922 = vpop.f32.mrb[0].mxu0
  %v1923 = vadd.f32 0.0, %v1922
  %v1924 = vpop.f32.mrb[0].mxu0
  %1925 = vmatprep.mubr.bf16.mxu0 0
  %1926 = vmatmul.mubr.bf16.gmra.mrb[0].mxu0 %v1883
  %v1927 = vpop.f32.mrb[0].mxu0
  %v1928 = vadd.f32 0.0, %v1927
  %v1929 = vpop.f32.mrb[0].mxu0
  %v1930 = vpop.f32.mrb[0].mxu0
  %v1931 = vadd.f32 0.0, %v1930
  %v1932 = vpop.f32.mrb[0].mxu0
  %1933 = vdwg.mxu0
  %v1934 = vadd.f32 %v1867, %v1920
  %v1935 = vadd.f32 %v1868, %v1923
  %v1936 = vadd.f32 %v1869, %v1928
  %v1937 = vadd.f32 %v1870, %v1931
  %v1938 = vmul.f32 %v1934, 0.5
  %v1939 = vmul.f32 %v1935, 0.5
  %v1940 = vmul.f32 %v1936, 0.5
  %v1941 = vmul.f32 %v1937, 0.5
  %v1942 = vtanh.pop %v1938
  %v1943 = vtanh.pop %v1939
  %v1944 = vtanh.pop %v1940
  %v1945 = vtanh.pop %v1941
  %v1946 = vmul.f32 %v1942, 0.5
  %v1947 = vmul.f32 %v1943, 0.5
  %v1948 = vmul.f32 %v1944, 0.5
  %v1949 = vmul.f32 %v1945, 0.5
  %v1950 = vadd.f32 %v1946, 0.5
  %v1951 = vadd.f32 %v1947, 0.5
  %v1952 = vadd.f32 %v1948, 0.5
  %v1953 = vadd.f32 %v1949, 0.5
  %1958 = vrot.lane.b32.xlu0 %v1863, 96
  %v1959 = vpop.permute.xlu0 %1958
  %1960 = vrot.lane.b32.xlu0 %v1864, 96
  %v1961 = vpop.permute.xlu0 %1960
  %1962 = vrot.lane.b32.xlu0 %v1865, 96
  %v1963 = vpop.permute.xlu0 %1962
  %1964 = vrot.lane.b32.xlu0 %v1866, 96
  %v1965 = vpop.permute.xlu0 %1964
  %v1970 = vmul.f32 %v1950, %v1959
  %v1971 = vmul.f32 %v1951, %v1961
  %v1972 = vmul.f32 %v1952, %v1963
  %v1973 = vmul.f32 %v1953, %v1965
  %v1974 = vpack.c.bf16 %v1971, %v1970
  %v1975 = vpack.c.bf16 %v1973, %v1972
  %v1977 = vsel %vm355, %v1974, 0
  %v1980 = vsel %vm355, %v1975, 0
  %1982 = vmatprep.subr.bf16.mxu0 0
  %1983 = vmatpush1.bf16.msra.mxu0 %v435
  %1984 = vmatprep.subr.bf16.mxu0 0
  %1985 = vmatpush1.bf16.msra.mxu0 %v437
  %1986 = vmatprep.subr.bf16.mxu0 0
  %1987 = vmatpush1.bf16.msra.mxu0 0
  %1988 = vmatprep.subr.bf16.mxu0 0
  %1989 = vmatpush1.bf16.msra.mxu0 0
  %1990 = vmatprep.subr.bf16.mxu0 0
  %1991 = vmatpush1.bf16.msra.mxu0 0
  %1992 = vmatprep.subr.bf16.mxu0 0
  %1993 = vmatpush1.bf16.msra.mxu0 0
  %1994 = vmatprep.subr.bf16.mxu0 0
  %1995 = vmatpush1.bf16.msra.mxu0 0
  %1996 = vmatprep.subr.bf16.mxu0 0
  %1997 = vmatpush1.bf16.msra.mxu0 0
  %1998 = vmatprep.subr.bf16.mxu0 0
  %1999 = vmatpush1.bf16.msra.mxu0 0
  %2000 = vmatprep.subr.bf16.mxu0 0
  %2001 = vmatpush1.bf16.msra.mxu0 0
  %2002 = vmatprep.subr.bf16.mxu0 0
  %2003 = vmatpush1.bf16.msra.mxu0 0
  %2004 = vmatprep.subr.bf16.mxu0 0
  %2005 = vmatpush1.bf16.msra.mxu0 0
  %2006 = vmatprep.subr.bf16.mxu0 0
  %2007 = vmatpush1.bf16.msra.mxu0 0
  %2008 = vmatprep.subr.bf16.mxu0 0
  %2009 = vmatpush1.bf16.msra.mxu0 0
  %2010 = vmatprep.subr.bf16.mxu0 0
  %2011 = vmatpush1.bf16.msra.mxu0 0
  %2012 = vmatprep.subr.bf16.mxu0 0
  %2013 = vmatpush1.bf16.msra.mxu0 0
  %2014 = vmatprep.mubr.bf16.mxu0 0
  %2015 = vmatmul.mubr.bf16.gmra.mrb[0].mxu0 %v1977
  %v2016 = vpop.f32.mrb[0].mxu0
  %v2017 = vadd.f32 0.0, %v2016
  %v2018 = vpop.f32.mrb[0].mxu0
  %v2019 = vpop.f32.mrb[0].mxu0
  %v2020 = vadd.f32 0.0, %v2019
  %v2021 = vpop.f32.mrb[0].mxu0
  %2022 = vmatprep.mubr.bf16.mxu0 0
  %2023 = vmatmul.mubr.bf16.gmra.mrb[0].mxu0 %v1980
  %v2024 = vpop.f32.mrb[0].mxu0
  %v2025 = vadd.f32 0.0, %v2024
  %v2026 = vpop.f32.mrb[0].mxu0
  %v2027 = vpop.f32.mrb[0].mxu0
  %v2028 = vadd.f32 0.0, %v2027
  %v2029 = vpop.f32.mrb[0].mxu0
  %2030 = vdwg.mxu0
  %2035 = vrot.lane.b32.xlu0 %v2017, 64
  %v2036 = vpop.permute.xlu0 %2035
  %2037 = vrot.lane.b32.xlu0 %v2020, 64
  %v2038 = vpop.permute.xlu0 %2037
  %2039 = vrot.lane.b32.xlu0 %v2025, 64
  %v2040 = vpop.permute.xlu0 %2039
  %2041 = vrot.lane.b32.xlu0 %v2028, 64
  %v2042 = vpop.permute.xlu0 %2041
  %v2047 = vadd.f32 %v1867, %v2036
  %v2048 = vadd.f32 %v1868, %v2038
  %v2049 = vadd.f32 %v1869, %v2040
  %v2050 = vadd.f32 %v1870, %v2042
  %v2051 = vtanh.pop %v2047
  %v2052 = vtanh.pop %v2048
  %v2053 = vtanh.pop %v2049
  %v2054 = vtanh.pop %v2050
  %v2055 = vmul.f32 %v1950, %v1863
  %v2056 = vmul.f32 %v1951, %v1864
  %v2057 = vmul.f32 %v1952, %v1865
  %v2058 = vmul.f32 %v1953, %v1866
  %v2059 = vsub.f32 1.0, %v1950
  %v2060 = vsub.f32 1.0, %v1951
  %v2061 = vsub.f32 1.0, %v1952
  %v2062 = vsub.f32 1.0, %v1953
  %2067 = vrot.lane.b32.xlu0 %v2051, 96
  %v2068 = vpop.permute.xlu0 %2067
  %2069 = vrot.lane.b32.xlu0 %v2052, 96
  %v2070 = vpop.permute.xlu0 %2069
  %2071 = vrot.lane.b32.xlu0 %v2053, 96
  %v2072 = vpop.permute.xlu0 %2071
  %2073 = vrot.lane.b32.xlu0 %v2054, 96
  %v2074 = vpop.permute.xlu0 %2073
  %v2079 = vmul.f32 %v2059, %v2068
  %v2080 = vmul.f32 %v2060, %v2070
  %v2081 = vmul.f32 %v2061, %v2072
  %v2082 = vmul.f32 %v2062, %v2074
  %v2083 = vadd.f32 %v2055, %v2079
  %v2084 = vadd.f32 %v2056, %v2080
  %v2085 = vadd.f32 %v2057, %v2081
  %v2086 = vadd.f32 %v2058, %v2082
  %v2087 = vpack.c.bf16 %v2084, %v2083
  %v2088 = vpack.c.bf16 %v2086, %v2085
  %v2089 = vlaneseq
  %v2090 = vshrl.u32 %v2089, 7
  %v2091 = vsub.s32 0, %v2090
  %v2092 = vrot.slane %v37, %v2091
  %2095 = vrot.lane.b32.xlu0 %v2087, 96
  %v2096 = vpop.permute.xlu0 %2095
  %2097 = vrot.lane.b32.xlu0 %v2088, 96
  %v2098 = vpop.permute.xlu0 %2097
  %v2103 = vunpack.c.l.b16 %v19
  %v2104 = vunpack.c.l.b16 %v20
  %v2105 = vunpack.c.l.b16 %v21
  %v2106 = vunpack.c.l.b16 %v22
  %v2107 = vpack.c.b16 %v2104, %v2103
  %v2108 = vpack.c.b16 %v2106, %v2105
  %v2112 = vsel %vm355, %v2096, 0
  %v2115 = vsel %vm355, %v2098, 0
  %2117 = vmatprep.subr.bf16.mxu0 0
  %2118 = vmatpush1.bf16.msra.mxu0 %v2107
  %2119 = vmatprep.subr.bf16.mxu0 0
  %2120 = vmatpush1.bf16.msra.mxu0 %v2108
  %2121 = vmatprep.subr.bf16.mxu0 0
  %2122 = vmatpush1.bf16.msra.mxu0 0
  %2123 = vmatprep.subr.bf16.mxu0 0
  %2124 = vmatpush1.bf16.msra.mxu0 0
  %2125 = vmatprep.subr.bf16.mxu0 0
  %2126 = vmatpush1.bf16.msra.mxu0 0
  %2127 = vmatprep.subr.bf16.mxu0 0
  %2128 = vmatpush1.bf16.msra.mxu0 0
  %2129 = vmatprep.subr.bf16.mxu0 0
  %2130 = vmatpush1.bf16.msra.mxu0 0
  %2131 = vmatprep.subr.bf16.mxu0 0
  %2132 = vmatpush1.bf16.msra.mxu0 0
  %2133 = vmatprep.subr.bf16.mxu0 0
  %2134 = vmatpush1.bf16.msra.mxu0 0
  %2135 = vmatprep.subr.bf16.mxu0 0
  %2136 = vmatpush1.bf16.msra.mxu0 0
  %2137 = vmatprep.subr.bf16.mxu0 0
  %2138 = vmatpush1.bf16.msra.mxu0 0
  %2139 = vmatprep.subr.bf16.mxu0 0
  %2140 = vmatpush1.bf16.msra.mxu0 0
  %2141 = vmatprep.subr.bf16.mxu0 0
  %2142 = vmatpush1.bf16.msra.mxu0 0
  %2143 = vmatprep.subr.bf16.mxu0 0
  %2144 = vmatpush1.bf16.msra.mxu0 0
  %2145 = vmatprep.subr.bf16.mxu0 0
  %2146 = vmatpush1.bf16.msra.mxu0 0
  %2147 = vmatprep.subr.bf16.mxu0 0
  %2148 = vmatpush1.bf16.msra.mxu0 0
  %2149 = vmatprep.mubr.bf16.mxu0 0
  %2150 = vmatmul.mubr.bf16.gmra.mrb[0].mxu0 %v2112
  %v2151 = vpop.f32.mrb[0].mxu0
  %v2152 = vadd.f32 %v2092, %v2151
  %v2153 = vpop.f32.mrb[0].mxu0
  %v2154 = vpop.f32.mrb[0].mxu0
  %v2155 = vadd.f32 %v2092, %v2154
  %v2156 = vpop.f32.mrb[0].mxu0
  %2157 = vmatprep.mubr.bf16.mxu0 0
  %2158 = vmatmul.mubr.bf16.gmra.mrb[0].mxu0 %v2115
  %v2159 = vpop.f32.mrb[0].mxu0
  %v2160 = vadd.f32 %v2092, %v2159
  %v2161 = vpop.f32.mrb[0].mxu0
  %v2162 = vpop.f32.mrb[0].mxu0
  %v2163 = vadd.f32 %v2092, %v2162
  %v2164 = vpop.f32.mrb[0].mxu0
  %2165 = vdwg.mxu0
  %v2166 = vmul.f32 %v2152, 0.5
  %v2167 = vmul.f32 %v2155, 0.5
  %v2168 = vmul.f32 %v2160, 0.5
  %v2169 = vmul.f32 %v2163, 0.5
  %v2170 = vtanh.pop %v2166
  %v2171 = vtanh.pop %v2167
  %v2172 = vtanh.pop %v2168
  %v2173 = vtanh.pop %v2169
  %v2174 = vmul.f32 %v2170, 0.5
  %v2175 = vmul.f32 %v2171, 0.5
  %v2176 = vmul.f32 %v2172, 0.5
  %v2177 = vmul.f32 %v2173, 0.5
  %v2178 = vadd.f32 %v2174, 0.5
  %v2179 = vadd.f32 %v2175, 0.5
  %v2180 = vadd.f32 %v2176, 0.5
  %v2181 = vadd.f32 %v2177, 0.5
  %v2182 = vpack.c.bf16 %v2179, %v2178
  %v2183 = vpack.c.bf16 %v2181, %v2180
  %v2184 = vlaneseq
  %v2185 = vshrl.u32 %v2184, 7
  %v2186 = vsub.s32 0, %v2185
  %v2187 = vrot.slane %v38, %v2186
  %v2192 = vunpack.c.l.b16 %v23
  %v2193 = vunpack.c.l.b16 %v24
  %v2194 = vunpack.c.l.b16 %v25
  %v2195 = vunpack.c.l.b16 %v26
  %v2196 = vpack.c.b16 %v2193, %v2192
  %v2197 = vpack.c.b16 %v2195, %v2194
  %v2201 = vsel %vm355, %v2182, 0
  %v2204 = vsel %vm355, %v2183, 0
  %2206 = vmatprep.subr.bf16.mxu0 0
  %2207 = vmatpush1.bf16.msra.mxu0 %v2196
  %2208 = vmatprep.subr.bf16.mxu0 0
  %2209 = vmatpush1.bf16.msra.mxu0 %v2197
  %2210 = vmatprep.subr.bf16.mxu0 0
  %2211 = vmatpush1.bf16.msra.mxu0 0
  %2212 = vmatprep.subr.bf16.mxu0 0
  %2213 = vmatpush1.bf16.msra.mxu0 0
  %2214 = vmatprep.subr.bf16.mxu0 0
  %2215 = vmatpush1.bf16.msra.mxu0 0
  %2216 = vmatprep.subr.bf16.mxu0 0
  %2217 = vmatpush1.bf16.msra.mxu0 0
  %2218 = vmatprep.subr.bf16.mxu0 0
  %2219 = vmatpush1.bf16.msra.mxu0 0
  %2220 = vmatprep.subr.bf16.mxu0 0
  %2221 = vmatpush1.bf16.msra.mxu0 0
  %2222 = vmatprep.subr.bf16.mxu0 0
  %2223 = vmatpush1.bf16.msra.mxu0 0
  %2224 = vmatprep.subr.bf16.mxu0 0
  %2225 = vmatpush1.bf16.msra.mxu0 0
  %2226 = vmatprep.subr.bf16.mxu0 0
  %2227 = vmatpush1.bf16.msra.mxu0 0
  %2228 = vmatprep.subr.bf16.mxu0 0
  %2229 = vmatpush1.bf16.msra.mxu0 0
  %2230 = vmatprep.subr.bf16.mxu0 0
  %2231 = vmatpush1.bf16.msra.mxu0 0
  %2232 = vmatprep.subr.bf16.mxu0 0
  %2233 = vmatpush1.bf16.msra.mxu0 0
  %2234 = vmatprep.subr.bf16.mxu0 0
  %2235 = vmatpush1.bf16.msra.mxu0 0
  %2236 = vmatprep.subr.bf16.mxu0 0
  %2237 = vmatpush1.bf16.msra.mxu0 0
  %2238 = vmatprep.mubr.bf16.mxu0 0
  %2239 = vmatmul.mubr.bf16.gmra.mrb[0].mxu0 %v2201
  %v2240 = vpop.f32.mrb[0].mxu0
  %v2241 = vadd.f32 %v2187, %v2240
  %v2242 = vpop.f32.mrb[0].mxu0
  %v2243 = vpop.f32.mrb[0].mxu0
  %v2244 = vadd.f32 %v2187, %v2243
  %v2245 = vpop.f32.mrb[0].mxu0
  %2246 = vmatprep.mubr.bf16.mxu0 0
  %2247 = vmatmul.mubr.bf16.gmra.mrb[0].mxu0 %v2204
  %v2248 = vpop.f32.mrb[0].mxu0
  %v2249 = vadd.f32 %v2187, %v2248
  %v2250 = vpop.f32.mrb[0].mxu0
  %v2251 = vpop.f32.mrb[0].mxu0
  %v2252 = vadd.f32 %v2187, %v2251
  %v2253 = vpop.f32.mrb[0].mxu0
  %2254 = vdwg.mxu0
  %v2259 = vunpack.c.l.b16 %v27
  %v2260 = vunpack.c.l.b16 %v28
  %v2261 = vunpack.c.l.b16 %v29
  %v2262 = vunpack.c.l.b16 %v30
  %v2263 = vpack.c.b16 %v2260, %v2259
  %v2264 = vpack.c.b16 %v2262, %v2261
  %2267 = vmatprep.subr.bf16.mxu0 0
  %2268 = vmatpush1.bf16.msra.mxu0 %v2263
  %2269 = vmatprep.subr.bf16.mxu0 0
  %2270 = vmatpush1.bf16.msra.mxu0 %v2264
  %2271 = vmatprep.subr.bf16.mxu0 0
  %2272 = vmatpush1.bf16.msra.mxu0 0
  %2273 = vmatprep.subr.bf16.mxu0 0
  %2274 = vmatpush1.bf16.msra.mxu0 0
  %2275 = vmatprep.subr.bf16.mxu0 0
  %2276 = vmatpush1.bf16.msra.mxu0 0
  %2277 = vmatprep.subr.bf16.mxu0 0
  %2278 = vmatpush1.bf16.msra.mxu0 0
  %2279 = vmatprep.subr.bf16.mxu0 0
  %2280 = vmatpush1.bf16.msra.mxu0 0
  %2281 = vmatprep.subr.bf16.mxu0 0
  %2282 = vmatpush1.bf16.msra.mxu0 0
  %2283 = vmatprep.subr.bf16.mxu0 0
  %2284 = vmatpush1.bf16.msra.mxu0 0
  %2285 = vmatprep.subr.bf16.mxu0 0
  %2286 = vmatpush1.bf16.msra.mxu0 0
  %2287 = vmatprep.subr.bf16.mxu0 0
  %2288 = vmatpush1.bf16.msra.mxu0 0
  %2289 = vmatprep.subr.bf16.mxu0 0
  %2290 = vmatpush1.bf16.msra.mxu0 0
  %2291 = vmatprep.subr.bf16.mxu0 0
  %2292 = vmatpush1.bf16.msra.mxu0 0
  %2293 = vmatprep.subr.bf16.mxu0 0
  %2294 = vmatpush1.bf16.msra.mxu0 0
  %2295 = vmatprep.subr.bf16.mxu0 0
  %2296 = vmatpush1.bf16.msra.mxu0 0
  %2297 = vmatprep.subr.bf16.mxu0 0
  %2298 = vmatpush1.bf16.msra.mxu0 0
  %2299 = vmatprep.mubr.bf16.mxu0 0
  %2300 = vmatmul.mubr.bf16.gmra.mrb[0].mxu0 %v2112
  %v2301 = vpop.f32.mrb[0].mxu0
  %v2302 = vadd.f32 0.0, %v2301
  %v2303 = vpop.f32.mrb[0].mxu0
  %v2304 = vpop.f32.mrb[0].mxu0
  %v2305 = vadd.f32 0.0, %v2304
  %v2306 = vpop.f32.mrb[0].mxu0
  %2307 = vmatprep.mubr.bf16.mxu0 0
  %2308 = vmatmul.mubr.bf16.gmra.mrb[0].mxu0 %v2115
  %v2309 = vpop.f32.mrb[0].mxu0
  %v2310 = vadd.f32 0.0, %v2309
  %v2311 = vpop.f32.mrb[0].mxu0
  %v2312 = vpop.f32.mrb[0].mxu0
  %v2313 = vadd.f32 0.0, %v2312
  %v2314 = vpop.f32.mrb[0].mxu0
  %2315 = vdwg.mxu0
  %v2316 = vadd.f32 %v2241, %v2302
  %v2317 = vadd.f32 %v2244, %v2305
  %v2318 = vadd.f32 %v2249, %v2310
  %v2319 = vadd.f32 %v2252, %v2313
  %v2320 = vmul.f32 %v2316, 0.5
  %v2321 = vmul.f32 %v2317, 0.5
  %v2322 = vmul.f32 %v2318, 0.5
  %v2323 = vmul.f32 %v2319, 0.5
  %v2324 = vtanh.pop %v2320
  %v2325 = vtanh.pop %v2321
  %v2326 = vtanh.pop %v2322
  %v2327 = vtanh.pop %v2323
  %v2328 = vmul.f32 %v2324, 0.5
  %v2329 = vmul.f32 %v2325, 0.5
  %v2330 = vmul.f32 %v2326, 0.5
  %v2331 = vmul.f32 %v2327, 0.5
  %v2332 = vadd.f32 %v2328, 0.5
  %v2333 = vadd.f32 %v2329, 0.5
  %v2334 = vadd.f32 %v2330, 0.5
  %v2335 = vadd.f32 %v2331, 0.5
  %2340 = vrot.lane.b32.xlu0 %v2083, 96
  %v2341 = vpop.permute.xlu0 %2340
  %2342 = vrot.lane.b32.xlu0 %v2084, 96
  %v2343 = vpop.permute.xlu0 %2342
  %2344 = vrot.lane.b32.xlu0 %v2085, 96
  %v2345 = vpop.permute.xlu0 %2344
  %2346 = vrot.lane.b32.xlu0 %v2086, 96
  %v2347 = vpop.permute.xlu0 %2346
  %v2352 = vmul.f32 %v2332, %v2341
  %v2353 = vmul.f32 %v2333, %v2343
  %v2354 = vmul.f32 %v2334, %v2345
  %v2355 = vmul.f32 %v2335, %v2347
  %v2356 = vpack.c.bf16 %v2353, %v2352
  %v2357 = vpack.c.bf16 %v2355, %v2354
  %2358 = vrot.lane.b32.xlu0 %v2263, 64
  %v2359 = vpop.permute.xlu0 %2358
  %2360 = vrot.lane.b32.xlu0 %v2264, 64
  %v2361 = vpop.permute.xlu0 %2360
  %v2365 = vsel %vm355, %v2356, 0
  %v2368 = vsel %vm355, %v2357, 0
  %2370 = vmatprep.subr.bf16.mxu0 0
  %2371 = vmatpush1.bf16.msra.mxu0 %v2359
  %2372 = vmatprep.subr.bf16.mxu0 0
  %2373 = vmatpush1.bf16.msra.mxu0 %v2361
  %2374 = vmatprep.subr.bf16.mxu0 0
  %2375 = vmatpush1.bf16.msra.mxu0 0
  %2376 = vmatprep.subr.bf16.mxu0 0
  %2377 = vmatpush1.bf16.msra.mxu0 0
  %2378 = vmatprep.subr.bf16.mxu0 0
  %2379 = vmatpush1.bf16.msra.mxu0 0
  %2380 = vmatprep.subr.bf16.mxu0 0
  %2381 = vmatpush1.bf16.msra.mxu0 0
  %2382 = vmatprep.subr.bf16.mxu0 0
  %2383 = vmatpush1.bf16.msra.mxu0 0
  %2384 = vmatprep.subr.bf16.mxu0 0
  %2385 = vmatpush1.bf16.msra.mxu0 0
  %2386 = vmatprep.subr.bf16.mxu0 0
  %2387 = vmatpush1.bf16.msra.mxu0 0
  %2388 = vmatprep.subr.bf16.mxu0 0
  %2389 = vmatpush1.bf16.msra.mxu0 0
  %2390 = vmatprep.subr.bf16.mxu0 0
  %2391 = vmatpush1.bf16.msra.mxu0 0
  %2392 = vmatprep.subr.bf16.mxu0 0
  %2393 = vmatpush1.bf16.msra.mxu0 0
  %2394 = vmatprep.subr.bf16.mxu0 0
  %2395 = vmatpush1.bf16.msra.mxu0 0
  %2396 = vmatprep.subr.bf16.mxu0 0
  %2397 = vmatpush1.bf16.msra.mxu0 0
  %2398 = vmatprep.subr.bf16.mxu0 0
  %2399 = vmatpush1.bf16.msra.mxu0 0
  %2400 = vmatprep.subr.bf16.mxu0 0
  %2401 = vmatpush1.bf16.msra.mxu0 0
  %2402 = vmatprep.mubr.bf16.mxu0 0
  %2403 = vmatmul.mubr.bf16.gmra.mrb[0].mxu0 %v2365
  %v2404 = vpop.f32.mrb[0].mxu0
  %v2405 = vadd.f32 0.0, %v2404
  %v2406 = vpop.f32.mrb[0].mxu0
  %v2407 = vpop.f32.mrb[0].mxu0
  %v2408 = vadd.f32 0.0, %v2407
  %v2409 = vpop.f32.mrb[0].mxu0
  %2410 = vmatprep.mubr.bf16.mxu0 0
  %2411 = vmatmul.mubr.bf16.gmra.mrb[0].mxu0 %v2368
  %v2412 = vpop.f32.mrb[0].mxu0
  %v2413 = vadd.f32 0.0, %v2412
  %v2414 = vpop.f32.mrb[0].mxu0
  %v2415 = vpop.f32.mrb[0].mxu0
  %v2416 = vadd.f32 0.0, %v2415
  %v2417 = vpop.f32.mrb[0].mxu0
  %2418 = vdwg.mxu0
  %2423 = vrot.lane.b32.xlu0 %v2405, 64
  %v2424 = vpop.permute.xlu0 %2423
  %2425 = vrot.lane.b32.xlu0 %v2408, 64
  %v2426 = vpop.permute.xlu0 %2425
  %2427 = vrot.lane.b32.xlu0 %v2413, 64
  %v2428 = vpop.permute.xlu0 %2427
  %2429 = vrot.lane.b32.xlu0 %v2416, 64
  %v2430 = vpop.permute.xlu0 %2429
  %v2435 = vadd.f32 %v2241, %v2424
  %v2436 = vadd.f32 %v2244, %v2426
  %v2437 = vadd.f32 %v2249, %v2428
  %v2438 = vadd.f32 %v2252, %v2430
  %v2439 = vtanh.pop %v2435
  %v2440 = vtanh.pop %v2436
  %v2441 = vtanh.pop %v2437
  %v2442 = vtanh.pop %v2438
  %v2443 = vmul.f32 %v2332, %v2083
  %v2444 = vmul.f32 %v2333, %v2084
  %v2445 = vmul.f32 %v2334, %v2085
  %v2446 = vmul.f32 %v2335, %v2086
  %v2447 = vsub.f32 1.0, %v2332
  %v2448 = vsub.f32 1.0, %v2333
  %v2449 = vsub.f32 1.0, %v2334
  %v2450 = vsub.f32 1.0, %v2335
  %2455 = vrot.lane.b32.xlu0 %v2439, 96
  %v2456 = vpop.permute.xlu0 %2455
  %2457 = vrot.lane.b32.xlu0 %v2440, 96
  %v2458 = vpop.permute.xlu0 %2457
  %2459 = vrot.lane.b32.xlu0 %v2441, 96
  %v2460 = vpop.permute.xlu0 %2459
  %2461 = vrot.lane.b32.xlu0 %v2442, 96
  %v2462 = vpop.permute.xlu0 %2461
  %v2467 = vmul.f32 %v2447, %v2456
  %v2468 = vmul.f32 %v2448, %v2458
  %v2469 = vmul.f32 %v2449, %v2460
  %v2470 = vmul.f32 %v2450, %v2462
  %v2471 = vadd.f32 %v2443, %v2467
  %v2472 = vadd.f32 %v2444, %v2468
  %v2473 = vadd.f32 %v2445, %v2469
  %v2474 = vadd.f32 %v2446, %v2470
  %v2475 = vpack.c.bf16 %v2472, %v2471
  %v2476 = vpack.c.bf16 %v2474, %v2473
  %v2477 = vlaneseq
  %v2478 = vshrl.u32 %v2477, 7
  %v2479 = vsub.s32 0, %v2478
  %v2480 = vrot.slane %v39, %v2479
  %2483 = vrot.lane.b32.xlu0 %v2475, 96
  %v2484 = vpop.permute.xlu0 %2483
  %2485 = vrot.lane.b32.xlu0 %v2476, 96
  %v2486 = vpop.permute.xlu0 %2485
  %v2491 = vunpack.c.l.b16 %v31
  %v2492 = vunpack.c.l.b16 %v32
  %v2493 = vunpack.c.l.b16 %v33
  %v2494 = vunpack.c.l.b16 %v34
  %v2495 = vpack.c.b16 %v2492, %v2491
  %v2496 = vpack.c.b16 %v2494, %v2493
  %v2500 = vsel %vm355, %v2484, 0
  %v2503 = vsel %vm355, %v2486, 0
  %2505 = vmatprep.subr.bf16.mxu0 0
  %2506 = vmatpush1.bf16.msra.mxu0 %v2495
  %2507 = vmatprep.subr.bf16.mxu0 0
  %2508 = vmatpush1.bf16.msra.mxu0 %v2496
  %2509 = vmatprep.subr.bf16.mxu0 0
  %2510 = vmatpush1.bf16.msra.mxu0 0
  %2511 = vmatprep.subr.bf16.mxu0 0
  %2512 = vmatpush1.bf16.msra.mxu0 0
  %2513 = vmatprep.subr.bf16.mxu0 0
  %2514 = vmatpush1.bf16.msra.mxu0 0
  %2515 = vmatprep.subr.bf16.mxu0 0
  %2516 = vmatpush1.bf16.msra.mxu0 0
  %2517 = vmatprep.subr.bf16.mxu0 0
  %2518 = vmatpush1.bf16.msra.mxu0 0
  %2519 = vmatprep.subr.bf16.mxu0 0
  %2520 = vmatpush1.bf16.msra.mxu0 0
  %2521 = vmatprep.subr.bf16.mxu0 0
  %2522 = vmatpush1.bf16.msra.mxu0 0
  %2523 = vmatprep.subr.bf16.mxu0 0
  %2524 = vmatpush1.bf16.msra.mxu0 0
  %2525 = vmatprep.subr.bf16.mxu0 0
  %2526 = vmatpush1.bf16.msra.mxu0 0
  %2527 = vmatprep.subr.bf16.mxu0 0
  %2528 = vmatpush1.bf16.msra.mxu0 0
  %2529 = vmatprep.subr.bf16.mxu0 0
  %2530 = vmatpush1.bf16.msra.mxu0 0
  %2531 = vmatprep.subr.bf16.mxu0 0
  %2532 = vmatpush1.bf16.msra.mxu0 0
  %2533 = vmatprep.subr.bf16.mxu0 0
  %2534 = vmatpush1.bf16.msra.mxu0 0
  %2535 = vmatprep.subr.bf16.mxu0 0
  %2536 = vmatpush1.bf16.msra.mxu0 0
  %2537 = vmatprep.mubr.bf16.mxu0 0
  %2538 = vmatmul.mubr.bf16.gmra.mrb[0].mxu0 %v2500
  %v2539 = vpop.f32.mrb[0].mxu0
  %v2540 = vadd.f32 %v2480, %v2539
  %v2541 = vpop.f32.mrb[0].mxu0
  %v2542 = vpop.f32.mrb[0].mxu0
  %v2543 = vadd.f32 %v2480, %v2542
  %v2544 = vpop.f32.mrb[0].mxu0
  %2545 = vmatprep.mubr.bf16.mxu0 0
  %2546 = vmatmul.mubr.bf16.gmra.mrb[0].mxu0 %v2503
  %v2547 = vpop.f32.mrb[0].mxu0
  %v2548 = vadd.f32 %v2480, %v2547
  %v2549 = vpop.f32.mrb[0].mxu0
  %v2550 = vpop.f32.mrb[0].mxu0
  %v2551 = vadd.f32 %v2480, %v2550
  %v2552 = vpop.f32.mrb[0].mxu0
  %2553 = vdwg.mxu0
  %v2554 = vmul.f32 %v2540, 0.5
  %v2555 = vmul.f32 %v2543, 0.5
  %v2556 = vmul.f32 %v2548, 0.5
  %v2557 = vmul.f32 %v2551, 0.5
  %v2558 = vtanh.pop %v2554
  %v2559 = vtanh.pop %v2555
  %v2560 = vtanh.pop %v2556
  %v2561 = vtanh.pop %v2557
  %v2562 = vmul.f32 %v2558, 0.5
  %v2563 = vmul.f32 %v2559, 0.5
  %v2564 = vmul.f32 %v2560, 0.5
  %v2565 = vmul.f32 %v2561, 0.5
  %v2566 = vadd.f32 %v2562, 0.5
  %v2567 = vadd.f32 %v2563, 0.5
  %v2568 = vadd.f32 %v2564, 0.5
  %v2569 = vadd.f32 %v2565, 0.5
  %v2570 = vlaneseq
  %v2571 = vshrl.u32 %v2570, 7
  %v2572 = vsub.s32 0, %v2571
  %v2573 = vrot.slane %v40, %v2572
  %v2574 = vmul.f32 %v2566, %v2573
  %v2575 = vmul.f32 %v2567, %v2573
  %v2576 = vmul.f32 %v2568, %v2573
  %v2577 = vmul.f32 %v2569, %v2573
  %v2578 = vsel %vm355, %v2574, 0.0
  %2579 = vadd.xlane.f32.xlu0 %v2578
  %v2580 = vpop.xlane.xlu0 %2579
  %v2581 = vsel %vm355, %v2575, 0.0
  %2582 = vadd.xlane.f32.xlu0 %v2581
  %v2583 = vpop.xlane.xlu0 %2582
  %v2584 = vsel %vm355, %v2576, 0.0
  %2585 = vadd.xlane.f32.xlu0 %v2584
  %v2586 = vpop.xlane.xlu0 %2585
  %v2587 = vsel %vm355, %v2577, 0.0
  %2588 = vadd.xlane.f32.xlu0 %v2587
  %v2589 = vpop.xlane.xlu0 %2588
  %v2590 = vlaneseq
  %v2591 = vshrl.u32 %v2590, 7
  %v2592 = vsub.s32 0, %v2591
  %v2593 = vrot.slane %v41, %v2592
  %v2594 = vadd.f32 %v2580, %v2593
  %v2595 = vadd.f32 %v2583, %v2593
  %v2596 = vadd.f32 %v2586, %v2593
  %v2597 = vadd.f32 %v2589, %v2593
  %2598 = vmatprep.subr.bf16.mxu0 0
  %2599 = vmatpush1.bf16.msra.mxu0 %v2263
  %2600 = vmatprep.subr.bf16.mxu0 0
  %2601 = vmatpush1.bf16.msra.mxu0 %v2264
  %2602 = vmatprep.subr.bf16.mxu0 0
  %2603 = vmatpush1.bf16.msra.mxu0 0
  %2604 = vmatprep.subr.bf16.mxu0 0
  %2605 = vmatpush1.bf16.msra.mxu0 0
  %2606 = vmatprep.subr.bf16.mxu0 0
  %2607 = vmatpush1.bf16.msra.mxu0 0
  %2608 = vmatprep.subr.bf16.mxu0 0
  %2609 = vmatpush1.bf16.msra.mxu0 0
  %2610 = vmatprep.subr.bf16.mxu0 0
  %2611 = vmatpush1.bf16.msra.mxu0 0
  %2612 = vmatprep.subr.bf16.mxu0 0
  %2613 = vmatpush1.bf16.msra.mxu0 0
  %2614 = vmatprep.subr.bf16.mxu0 0
  %2615 = vmatpush1.bf16.msra.mxu0 0
  %2616 = vmatprep.subr.bf16.mxu0 0
  %2617 = vmatpush1.bf16.msra.mxu0 0
  %2618 = vmatprep.subr.bf16.mxu0 0
  %2619 = vmatpush1.bf16.msra.mxu0 0
  %2620 = vmatprep.subr.bf16.mxu0 0
  %2621 = vmatpush1.bf16.msra.mxu0 0
  %2622 = vmatprep.subr.bf16.mxu0 0
  %2623 = vmatpush1.bf16.msra.mxu0 0
  %2624 = vmatprep.subr.bf16.mxu0 0
  %2625 = vmatpush1.bf16.msra.mxu0 0
  %2626 = vmatprep.subr.bf16.mxu0 0
  %2627 = vmatpush1.bf16.msra.mxu0 0
  %2628 = vmatprep.subr.bf16.mxu0 0
  %2629 = vmatpush1.bf16.msra.mxu0 0
  %2630 = vmatprep.mubr.bf16.mxu0 0
  %2631 = vmatmul.mubr.bf16.gmra.mrb[0].mxu0 %v2500
  %v2632 = vpop.f32.mrb[0].mxu0
  %v2633 = vadd.f32 0.0, %v2632
  %v2634 = vpop.f32.mrb[0].mxu0
  %v2635 = vpop.f32.mrb[0].mxu0
  %v2636 = vadd.f32 0.0, %v2635
  %v2637 = vpop.f32.mrb[0].mxu0
  %2638 = vmatprep.mubr.bf16.mxu0 0
  %2639 = vmatmul.mubr.bf16.gmra.mrb[0].mxu0 %v2503
  %v2640 = vpop.f32.mrb[0].mxu0
  %v2641 = vadd.f32 0.0, %v2640
  %v2642 = vpop.f32.mrb[0].mxu0
  %v2643 = vpop.f32.mrb[0].mxu0
  %v2644 = vadd.f32 0.0, %v2643
  %v2645 = vpop.f32.mrb[0].mxu0
  %2646 = vdwg.mxu0
  %v2647 = vadd.f32 %v2241, %v2633
  %v2648 = vadd.f32 %v2244, %v2636
  %v2649 = vadd.f32 %v2249, %v2641
  %v2650 = vadd.f32 %v2252, %v2644
  %v2651 = vmul.f32 %v2647, 0.5
  %v2652 = vmul.f32 %v2648, 0.5
  %v2653 = vmul.f32 %v2649, 0.5
  %v2654 = vmul.f32 %v2650, 0.5
  %v2655 = vtanh.pop %v2651
  %v2656 = vtanh.pop %v2652
  %v2657 = vtanh.pop %v2653
  %v2658 = vtanh.pop %v2654
  %v2659 = vmul.f32 %v2655, 0.5
  %v2660 = vmul.f32 %v2656, 0.5
  %v2661 = vmul.f32 %v2657, 0.5
  %v2662 = vmul.f32 %v2658, 0.5
  %v2663 = vadd.f32 %v2659, 0.5
  %v2664 = vadd.f32 %v2660, 0.5
  %v2665 = vadd.f32 %v2661, 0.5
  %v2666 = vadd.f32 %v2662, 0.5
  %2671 = vrot.lane.b32.xlu0 %v2471, 96
  %v2672 = vpop.permute.xlu0 %2671
  %2673 = vrot.lane.b32.xlu0 %v2472, 96
  %v2674 = vpop.permute.xlu0 %2673
  %2675 = vrot.lane.b32.xlu0 %v2473, 96
  %v2676 = vpop.permute.xlu0 %2675
  %2677 = vrot.lane.b32.xlu0 %v2474, 96
  %v2678 = vpop.permute.xlu0 %2677
  %v2683 = vmul.f32 %v2663, %v2672
  %v2684 = vmul.f32 %v2664, %v2674
  %v2685 = vmul.f32 %v2665, %v2676
  %v2686 = vmul.f32 %v2666, %v2678
  %v2687 = vpack.c.bf16 %v2684, %v2683
  %v2688 = vpack.c.bf16 %v2686, %v2685
  %v2690 = vsel %vm355, %v2687, 0
  %v2693 = vsel %vm355, %v2688, 0
  %2695 = vmatprep.subr.bf16.mxu0 0
  %2696 = vmatpush1.bf16.msra.mxu0 %v2359
  %2697 = vmatprep.subr.bf16.mxu0 0
  %2698 = vmatpush1.bf16.msra.mxu0 %v2361
  %2699 = vmatprep.subr.bf16.mxu0 0
  %2700 = vmatpush1.bf16.msra.mxu0 0
  %2701 = vmatprep.subr.bf16.mxu0 0
  %2702 = vmatpush1.bf16.msra.mxu0 0
  %2703 = vmatprep.subr.bf16.mxu0 0
  %2704 = vmatpush1.bf16.msra.mxu0 0
  %2705 = vmatprep.subr.bf16.mxu0 0
  %2706 = vmatpush1.bf16.msra.mxu0 0
  %2707 = vmatprep.subr.bf16.mxu0 0
  %2708 = vmatpush1.bf16.msra.mxu0 0
  %2709 = vmatprep.subr.bf16.mxu0 0
  %2710 = vmatpush1.bf16.msra.mxu0 0
  %2711 = vmatprep.subr.bf16.mxu0 0
  %2712 = vmatpush1.bf16.msra.mxu0 0
  %2713 = vmatprep.subr.bf16.mxu0 0
  %2714 = vmatpush1.bf16.msra.mxu0 0
  %2715 = vmatprep.subr.bf16.mxu0 0
  %2716 = vmatpush1.bf16.msra.mxu0 0
  %2717 = vmatprep.subr.bf16.mxu0 0
  %2718 = vmatpush1.bf16.msra.mxu0 0
  %2719 = vmatprep.subr.bf16.mxu0 0
  %2720 = vmatpush1.bf16.msra.mxu0 0
  %2721 = vmatprep.subr.bf16.mxu0 0
  %2722 = vmatpush1.bf16.msra.mxu0 0
  %2723 = vmatprep.subr.bf16.mxu0 0
  %2724 = vmatpush1.bf16.msra.mxu0 0
  %2725 = vmatprep.subr.bf16.mxu0 0
  %2726 = vmatpush1.bf16.msra.mxu0 0
  %2727 = vmatprep.mubr.bf16.mxu0 0
  %2728 = vmatmul.mubr.bf16.gmra.mrb[0].mxu0 %v2690
  %v2729 = vpop.f32.mrb[0].mxu0
  %v2730 = vadd.f32 0.0, %v2729
  %v2731 = vpop.f32.mrb[0].mxu0
  %v2732 = vpop.f32.mrb[0].mxu0
  %v2733 = vadd.f32 0.0, %v2732
  %v2734 = vpop.f32.mrb[0].mxu0
  %2735 = vmatprep.mubr.bf16.mxu0 0
  %2736 = vmatmul.mubr.bf16.gmra.mrb[0].mxu0 %v2693
  %v2737 = vpop.f32.mrb[0].mxu0
  %v2738 = vadd.f32 0.0, %v2737
  %v2739 = vpop.f32.mrb[0].mxu0
  %v2740 = vpop.f32.mrb[0].mxu0
  %v2741 = vadd.f32 0.0, %v2740
  %v2742 = vpop.f32.mrb[0].mxu0
  %2743 = vdwg.mxu0
  %2748 = vrot.lane.b32.xlu0 %v2730, 64
  %v2749 = vpop.permute.xlu0 %2748
  %2750 = vrot.lane.b32.xlu0 %v2733, 64
  %v2751 = vpop.permute.xlu0 %2750
  %2752 = vrot.lane.b32.xlu0 %v2738, 64
  %v2753 = vpop.permute.xlu0 %2752
  %2754 = vrot.lane.b32.xlu0 %v2741, 64
  %v2755 = vpop.permute.xlu0 %2754
  %v2760 = vadd.f32 %v2241, %v2749
  %v2761 = vadd.f32 %v2244, %v2751
  %v2762 = vadd.f32 %v2249, %v2753
  %v2763 = vadd.f32 %v2252, %v2755
  %v2764 = vtanh.pop %v2760
  %v2765 = vtanh.pop %v2761
  %v2766 = vtanh.pop %v2762
  %v2767 = vtanh.pop %v2763
  %v2768 = vmul.f32 %v2663, %v2471
  %v2769 = vmul.f32 %v2664, %v2472
  %v2770 = vmul.f32 %v2665, %v2473
  %v2771 = vmul.f32 %v2666, %v2474
  %v2772 = vsub.f32 1.0, %v2663
  %v2773 = vsub.f32 1.0, %v2664
  %v2774 = vsub.f32 1.0, %v2665
  %v2775 = vsub.f32 1.0, %v2666
  %2780 = vrot.lane.b32.xlu0 %v2764, 96
  %v2781 = vpop.permute.xlu0 %2780
  %2782 = vrot.lane.b32.xlu0 %v2765, 96
  %v2783 = vpop.permute.xlu0 %2782
  %2784 = vrot.lane.b32.xlu0 %v2766, 96
  %v2785 = vpop.permute.xlu0 %2784
  %2786 = vrot.lane.b32.xlu0 %v2767, 96
  %v2787 = vpop.permute.xlu0 %2786
  %v2792 = vmul.f32 %v2772, %v2781
  %v2793 = vmul.f32 %v2773, %v2783
  %v2794 = vmul.f32 %v2774, %v2785
  %v2795 = vmul.f32 %v2775, %v2787
  %v2796 = vadd.f32 %v2768, %v2792
  %v2797 = vadd.f32 %v2769, %v2793
  %v2798 = vadd.f32 %v2770, %v2794
  %v2799 = vadd.f32 %v2771, %v2795
  %v2800 = vpack.c.bf16 %v2797, %v2796
  %v2801 = vpack.c.bf16 %v2799, %v2798
  %2804 = vrot.lane.b32.xlu0 %v2800, 96
  %v2805 = vpop.permute.xlu0 %2804
  %2806 = vrot.lane.b32.xlu0 %v2801, 96
  %v2807 = vpop.permute.xlu0 %2806
  %v2809 = vsel %vm355, %v2805, 0
  %v2812 = vsel %vm355, %v2807, 0
  %2814 = vmatprep.subr.bf16.mxu0 0
  %2815 = vmatpush1.bf16.msra.mxu0 %v2495
  %2816 = vmatprep.subr.bf16.mxu0 0
  %2817 = vmatpush1.bf16.msra.mxu0 %v2496
  %2818 = vmatprep.subr.bf16.mxu0 0
  %2819 = vmatpush1.bf16.msra.mxu0 0
  %2820 = vmatprep.subr.bf16.mxu0 0
  %2821 = vmatpush1.bf16.msra.mxu0 0
  %2822 = vmatprep.subr.bf16.mxu0 0
  %2823 = vmatpush1.bf16.msra.mxu0 0
  %2824 = vmatprep.subr.bf16.mxu0 0
  %2825 = vmatpush1.bf16.msra.mxu0 0
  %2826 = vmatprep.subr.bf16.mxu0 0
  %2827 = vmatpush1.bf16.msra.mxu0 0
  %2828 = vmatprep.subr.bf16.mxu0 0
  %2829 = vmatpush1.bf16.msra.mxu0 0
  %2830 = vmatprep.subr.bf16.mxu0 0
  %2831 = vmatpush1.bf16.msra.mxu0 0
  %2832 = vmatprep.subr.bf16.mxu0 0
  %2833 = vmatpush1.bf16.msra.mxu0 0
  %2834 = vmatprep.subr.bf16.mxu0 0
  %2835 = vmatpush1.bf16.msra.mxu0 0
  %2836 = vmatprep.subr.bf16.mxu0 0
  %2837 = vmatpush1.bf16.msra.mxu0 0
  %2838 = vmatprep.subr.bf16.mxu0 0
  %2839 = vmatpush1.bf16.msra.mxu0 0
  %2840 = vmatprep.subr.bf16.mxu0 0
  %2841 = vmatpush1.bf16.msra.mxu0 0
  %2842 = vmatprep.subr.bf16.mxu0 0
  %2843 = vmatpush1.bf16.msra.mxu0 0
  %2844 = vmatprep.subr.bf16.mxu0 0
  %2845 = vmatpush1.bf16.msra.mxu0 0
  %2846 = vmatprep.mubr.bf16.mxu0 0
  %2847 = vmatmul.mubr.bf16.gmra.mrb[0].mxu0 %v2809
  %v2848 = vpop.f32.mrb[0].mxu0
  %v2849 = vadd.f32 %v2480, %v2848
  %v2850 = vpop.f32.mrb[0].mxu0
  %v2851 = vpop.f32.mrb[0].mxu0
  %v2852 = vadd.f32 %v2480, %v2851
  %v2853 = vpop.f32.mrb[0].mxu0
  %2854 = vmatprep.mubr.bf16.mxu0 0
  %2855 = vmatmul.mubr.bf16.gmra.mrb[0].mxu0 %v2812
  %v2856 = vpop.f32.mrb[0].mxu0
  %v2857 = vadd.f32 %v2480, %v2856
  %v2858 = vpop.f32.mrb[0].mxu0
  %v2859 = vpop.f32.mrb[0].mxu0
  %v2860 = vadd.f32 %v2480, %v2859
  %v2861 = vpop.f32.mrb[0].mxu0
  %2862 = vdwg.mxu0
  %v2863 = vmul.f32 %v2849, 0.5
  %v2864 = vmul.f32 %v2852, 0.5
  %v2865 = vmul.f32 %v2857, 0.5
  %v2866 = vmul.f32 %v2860, 0.5
  %v2867 = vtanh.pop %v2863
  %v2868 = vtanh.pop %v2864
  %v2869 = vtanh.pop %v2865
  %v2870 = vtanh.pop %v2866
  %v2871 = vmul.f32 %v2867, 0.5
  %v2872 = vmul.f32 %v2868, 0.5
  %v2873 = vmul.f32 %v2869, 0.5
  %v2874 = vmul.f32 %v2870, 0.5
  %v2875 = vadd.f32 %v2871, 0.5
  %v2876 = vadd.f32 %v2872, 0.5
  %v2877 = vadd.f32 %v2873, 0.5
  %v2878 = vadd.f32 %v2874, 0.5
  %v2879 = vmul.f32 %v2875, %v2573
  %v2880 = vmul.f32 %v2876, %v2573
  %v2881 = vmul.f32 %v2877, %v2573
  %v2882 = vmul.f32 %v2878, %v2573
  %v2883 = vsel %vm355, %v2879, 0.0
  %2884 = vadd.xlane.f32.xlu0 %v2883
  %v2885 = vpop.xlane.xlu0 %2884
  %v2886 = vsel %vm355, %v2880, 0.0
  %2887 = vadd.xlane.f32.xlu0 %v2886
  %v2888 = vpop.xlane.xlu0 %2887
  %v2889 = vsel %vm355, %v2881, 0.0
  %2890 = vadd.xlane.f32.xlu0 %v2889
  %v2891 = vpop.xlane.xlu0 %2890
  %v2892 = vsel %vm355, %v2882, 0.0
  %2893 = vadd.xlane.f32.xlu0 %v2892
  %v2894 = vpop.xlane.xlu0 %2893
  %v2895 = vadd.f32 %v2885, %v2593
  %v2896 = vadd.f32 %v2888, %v2593
  %v2897 = vadd.f32 %v2891, %v2593
  %v2898 = vadd.f32 %v2894, %v2593
  %2899 = vmatprep.subr.bf16.mxu0 0
  %2900 = vmatpush1.bf16.msra.mxu0 %v2263
  %2901 = vmatprep.subr.bf16.mxu0 0
  %2902 = vmatpush1.bf16.msra.mxu0 %v2264
  %2903 = vmatprep.subr.bf16.mxu0 0
  %2904 = vmatpush1.bf16.msra.mxu0 0
  %2905 = vmatprep.subr.bf16.mxu0 0
  %2906 = vmatpush1.bf16.msra.mxu0 0
  %2907 = vmatprep.subr.bf16.mxu0 0
  %2908 = vmatpush1.bf16.msra.mxu0 0
  %2909 = vmatprep.subr.bf16.mxu0 0
  %2910 = vmatpush1.bf16.msra.mxu0 0
  %2911 = vmatprep.subr.bf16.mxu0 0
  %2912 = vmatpush1.bf16.msra.mxu0 0
  %2913 = vmatprep.subr.bf16.mxu0 0
  %2914 = vmatpush1.bf16.msra.mxu0 0
  %2915 = vmatprep.subr.bf16.mxu0 0
  %2916 = vmatpush1.bf16.msra.mxu0 0
  %2917 = vmatprep.subr.bf16.mxu0 0
  %2918 = vmatpush1.bf16.msra.mxu0 0
  %2919 = vmatprep.subr.bf16.mxu0 0
  %2920 = vmatpush1.bf16.msra.mxu0 0
  %2921 = vmatprep.subr.bf16.mxu0 0
  %2922 = vmatpush1.bf16.msra.mxu0 0
  %2923 = vmatprep.subr.bf16.mxu0 0
  %2924 = vmatpush1.bf16.msra.mxu0 0
  %2925 = vmatprep.subr.bf16.mxu0 0
  %2926 = vmatpush1.bf16.msra.mxu0 0
  %2927 = vmatprep.subr.bf16.mxu0 0
  %2928 = vmatpush1.bf16.msra.mxu0 0
  %2929 = vmatprep.subr.bf16.mxu0 0
  %2930 = vmatpush1.bf16.msra.mxu0 0
  %2931 = vmatprep.mubr.bf16.mxu0 0
  %2932 = vmatmul.mubr.bf16.gmra.mrb[0].mxu0 %v2809
  %v2933 = vpop.f32.mrb[0].mxu0
  %v2934 = vadd.f32 0.0, %v2933
  %v2935 = vpop.f32.mrb[0].mxu0
  %v2936 = vpop.f32.mrb[0].mxu0
  %v2937 = vadd.f32 0.0, %v2936
  %v2938 = vpop.f32.mrb[0].mxu0
  %2939 = vmatprep.mubr.bf16.mxu0 0
  %2940 = vmatmul.mubr.bf16.gmra.mrb[0].mxu0 %v2812
  %v2941 = vpop.f32.mrb[0].mxu0
  %v2942 = vadd.f32 0.0, %v2941
  %v2943 = vpop.f32.mrb[0].mxu0
  %v2944 = vpop.f32.mrb[0].mxu0
  %v2945 = vadd.f32 0.0, %v2944
  %v2946 = vpop.f32.mrb[0].mxu0
  %2947 = vdwg.mxu0
  %v2948 = vadd.f32 %v2241, %v2934
  %v2949 = vadd.f32 %v2244, %v2937
  %v2950 = vadd.f32 %v2249, %v2942
  %v2951 = vadd.f32 %v2252, %v2945
  %v2952 = vmul.f32 %v2948, 0.5
  %v2953 = vmul.f32 %v2949, 0.5
  %v2954 = vmul.f32 %v2950, 0.5
  %v2955 = vmul.f32 %v2951, 0.5
  %v2956 = vtanh.pop %v2952
  %v2957 = vtanh.pop %v2953
  %v2958 = vtanh.pop %v2954
  %v2959 = vtanh.pop %v2955
  %v2960 = vmul.f32 %v2956, 0.5
  %v2961 = vmul.f32 %v2957, 0.5
  %v2962 = vmul.f32 %v2958, 0.5
  %v2963 = vmul.f32 %v2959, 0.5
  %v2964 = vadd.f32 %v2960, 0.5
  %v2965 = vadd.f32 %v2961, 0.5
  %v2966 = vadd.f32 %v2962, 0.5
  %v2967 = vadd.f32 %v2963, 0.5
  %2972 = vrot.lane.b32.xlu0 %v2796, 96
  %v2973 = vpop.permute.xlu0 %2972
  %2974 = vrot.lane.b32.xlu0 %v2797, 96
  %v2975 = vpop.permute.xlu0 %2974
  %2976 = vrot.lane.b32.xlu0 %v2798, 96
  %v2977 = vpop.permute.xlu0 %2976
  %2978 = vrot.lane.b32.xlu0 %v2799, 96
  %v2979 = vpop.permute.xlu0 %2978
  %v2984 = vmul.f32 %v2964, %v2973
  %v2985 = vmul.f32 %v2965, %v2975
  %v2986 = vmul.f32 %v2966, %v2977
  %v2987 = vmul.f32 %v2967, %v2979
  %v2988 = vpack.c.bf16 %v2985, %v2984
  %v2989 = vpack.c.bf16 %v2987, %v2986
  %v2991 = vsel %vm355, %v2988, 0
  %v2994 = vsel %vm355, %v2989, 0
  %2996 = vmatprep.subr.bf16.mxu0 0
  %2997 = vmatpush1.bf16.msra.mxu0 %v2359
  %2998 = vmatprep.subr.bf16.mxu0 0
  %2999 = vmatpush1.bf16.msra.mxu0 %v2361
  %3000 = vmatprep.subr.bf16.mxu0 0
  %3001 = vmatpush1.bf16.msra.mxu0 0
  %3002 = vmatprep.subr.bf16.mxu0 0
  %3003 = vmatpush1.bf16.msra.mxu0 0
  %3004 = vmatprep.subr.bf16.mxu0 0
  %3005 = vmatpush1.bf16.msra.mxu0 0
  %3006 = vmatprep.subr.bf16.mxu0 0
  %3007 = vmatpush1.bf16.msra.mxu0 0
  %3008 = vmatprep.subr.bf16.mxu0 0
  %3009 = vmatpush1.bf16.msra.mxu0 0
  %3010 = vmatprep.subr.bf16.mxu0 0
  %3011 = vmatpush1.bf16.msra.mxu0 0
  %3012 = vmatprep.subr.bf16.mxu0 0
  %3013 = vmatpush1.bf16.msra.mxu0 0
  %3014 = vmatprep.subr.bf16.mxu0 0
  %3015 = vmatpush1.bf16.msra.mxu0 0
  %3016 = vmatprep.subr.bf16.mxu0 0
  %3017 = vmatpush1.bf16.msra.mxu0 0
  %3018 = vmatprep.subr.bf16.mxu0 0
  %3019 = vmatpush1.bf16.msra.mxu0 0
  %3020 = vmatprep.subr.bf16.mxu0 0
  %3021 = vmatpush1.bf16.msra.mxu0 0
  %3022 = vmatprep.subr.bf16.mxu0 0
  %3023 = vmatpush1.bf16.msra.mxu0 0
  %3024 = vmatprep.subr.bf16.mxu0 0
  %3025 = vmatpush1.bf16.msra.mxu0 0
  %3026 = vmatprep.subr.bf16.mxu0 0
  %3027 = vmatpush1.bf16.msra.mxu0 0
  %3028 = vmatprep.mubr.bf16.mxu0 0
  %3029 = vmatmul.mubr.bf16.gmra.mrb[0].mxu0 %v2991
  %v3030 = vpop.f32.mrb[0].mxu0
  %v3031 = vadd.f32 0.0, %v3030
  %v3032 = vpop.f32.mrb[0].mxu0
  %v3033 = vpop.f32.mrb[0].mxu0
  %v3034 = vadd.f32 0.0, %v3033
  %v3035 = vpop.f32.mrb[0].mxu0
  %3036 = vmatprep.mubr.bf16.mxu0 0
  %3037 = vmatmul.mubr.bf16.gmra.mrb[0].mxu0 %v2994
  %v3038 = vpop.f32.mrb[0].mxu0
  %v3039 = vadd.f32 0.0, %v3038
  %v3040 = vpop.f32.mrb[0].mxu0
  %v3041 = vpop.f32.mrb[0].mxu0
  %v3042 = vadd.f32 0.0, %v3041
  %v3043 = vpop.f32.mrb[0].mxu0
  %3044 = vdwg.mxu0
  %3049 = vrot.lane.b32.xlu0 %v3031, 64
  %v3050 = vpop.permute.xlu0 %3049
  %3051 = vrot.lane.b32.xlu0 %v3034, 64
  %v3052 = vpop.permute.xlu0 %3051
  %3053 = vrot.lane.b32.xlu0 %v3039, 64
  %v3054 = vpop.permute.xlu0 %3053
  %3055 = vrot.lane.b32.xlu0 %v3042, 64
  %v3056 = vpop.permute.xlu0 %3055
  %v3061 = vadd.f32 %v2241, %v3050
  %v3062 = vadd.f32 %v2244, %v3052
  %v3063 = vadd.f32 %v2249, %v3054
  %v3064 = vadd.f32 %v2252, %v3056
  %v3065 = vtanh.pop %v3061
  %v3066 = vtanh.pop %v3062
  %v3067 = vtanh.pop %v3063
  %v3068 = vtanh.pop %v3064
  %v3069 = vmul.f32 %v2964, %v2796
  %v3070 = vmul.f32 %v2965, %v2797
  %v3071 = vmul.f32 %v2966, %v2798
  %v3072 = vmul.f32 %v2967, %v2799
  %v3073 = vsub.f32 1.0, %v2964
  %v3074 = vsub.f32 1.0, %v2965
  %v3075 = vsub.f32 1.0, %v2966
  %v3076 = vsub.f32 1.0, %v2967
  %3081 = vrot.lane.b32.xlu0 %v3065, 96
  %v3082 = vpop.permute.xlu0 %3081
  %3083 = vrot.lane.b32.xlu0 %v3066, 96
  %v3084 = vpop.permute.xlu0 %3083
  %3085 = vrot.lane.b32.xlu0 %v3067, 96
  %v3086 = vpop.permute.xlu0 %3085
  %3087 = vrot.lane.b32.xlu0 %v3068, 96
  %v3088 = vpop.permute.xlu0 %3087
  %v3093 = vmul.f32 %v3073, %v3082
  %v3094 = vmul.f32 %v3074, %v3084
  %v3095 = vmul.f32 %v3075, %v3086
  %v3096 = vmul.f32 %v3076, %v3088
  %v3097 = vadd.f32 %v3069, %v3093
  %v3098 = vadd.f32 %v3070, %v3094
  %v3099 = vadd.f32 %v3071, %v3095
  %v3100 = vadd.f32 %v3072, %v3096
  %v3101 = vpack.c.bf16 %v3098, %v3097
  %v3102 = vpack.c.bf16 %v3100, %v3099
  %3105 = vrot.lane.b32.xlu0 %v3101, 96
  %v3106 = vpop.permute.xlu0 %3105
  %3107 = vrot.lane.b32.xlu0 %v3102, 96
  %v3108 = vpop.permute.xlu0 %3107
  %v3110 = vsel %vm355, %v3106, 0
  %v3113 = vsel %vm355, %v3108, 0
  %3115 = vmatprep.subr.bf16.mxu0 0
  %3116 = vmatpush1.bf16.msra.mxu0 %v2495
  %3117 = vmatprep.subr.bf16.mxu0 0
  %3118 = vmatpush1.bf16.msra.mxu0 %v2496
  %3119 = vmatprep.subr.bf16.mxu0 0
  %3120 = vmatpush1.bf16.msra.mxu0 0
  %3121 = vmatprep.subr.bf16.mxu0 0
  %3122 = vmatpush1.bf16.msra.mxu0 0
  %3123 = vmatprep.subr.bf16.mxu0 0
  %3124 = vmatpush1.bf16.msra.mxu0 0
  %3125 = vmatprep.subr.bf16.mxu0 0
  %3126 = vmatpush1.bf16.msra.mxu0 0
  %3127 = vmatprep.subr.bf16.mxu0 0
  %3128 = vmatpush1.bf16.msra.mxu0 0
  %3129 = vmatprep.subr.bf16.mxu0 0
  %3130 = vmatpush1.bf16.msra.mxu0 0
  %3131 = vmatprep.subr.bf16.mxu0 0
  %3132 = vmatpush1.bf16.msra.mxu0 0
  %3133 = vmatprep.subr.bf16.mxu0 0
  %3134 = vmatpush1.bf16.msra.mxu0 0
  %3135 = vmatprep.subr.bf16.mxu0 0
  %3136 = vmatpush1.bf16.msra.mxu0 0
  %3137 = vmatprep.subr.bf16.mxu0 0
  %3138 = vmatpush1.bf16.msra.mxu0 0
  %3139 = vmatprep.subr.bf16.mxu0 0
  %3140 = vmatpush1.bf16.msra.mxu0 0
  %3141 = vmatprep.subr.bf16.mxu0 0
  %3142 = vmatpush1.bf16.msra.mxu0 0
  %3143 = vmatprep.subr.bf16.mxu0 0
  %3144 = vmatpush1.bf16.msra.mxu0 0
  %3145 = vmatprep.subr.bf16.mxu0 0
  %3146 = vmatpush1.bf16.msra.mxu0 0
  %3147 = vmatprep.mubr.bf16.mxu0 0
  %3148 = vmatmul.mubr.bf16.gmra.mrb[0].mxu0 %v3110
  %v3149 = vpop.f32.mrb[0].mxu0
  %v3150 = vadd.f32 %v2480, %v3149
  %v3151 = vpop.f32.mrb[0].mxu0
  %v3152 = vpop.f32.mrb[0].mxu0
  %v3153 = vadd.f32 %v2480, %v3152
  %v3154 = vpop.f32.mrb[0].mxu0
  %3155 = vmatprep.mubr.bf16.mxu0 0
  %3156 = vmatmul.mubr.bf16.gmra.mrb[0].mxu0 %v3113
  %v3157 = vpop.f32.mrb[0].mxu0
  %v3158 = vadd.f32 %v2480, %v3157
  %v3159 = vpop.f32.mrb[0].mxu0
  %v3160 = vpop.f32.mrb[0].mxu0
  %v3161 = vadd.f32 %v2480, %v3160
  %v3162 = vpop.f32.mrb[0].mxu0
  %3163 = vdwg.mxu0
  %v3164 = vmul.f32 %v3150, 0.5
  %v3165 = vmul.f32 %v3153, 0.5
  %v3166 = vmul.f32 %v3158, 0.5
  %v3167 = vmul.f32 %v3161, 0.5
  %v3168 = vtanh.pop %v3164
  %v3169 = vtanh.pop %v3165
  %v3170 = vtanh.pop %v3166
  %v3171 = vtanh.pop %v3167
  %v3172 = vmul.f32 %v3168, 0.5
  %v3173 = vmul.f32 %v3169, 0.5
  %v3174 = vmul.f32 %v3170, 0.5
  %v3175 = vmul.f32 %v3171, 0.5
  %v3176 = vadd.f32 %v3172, 0.5
  %v3177 = vadd.f32 %v3173, 0.5
  %v3178 = vadd.f32 %v3174, 0.5
  %v3179 = vadd.f32 %v3175, 0.5
  %v3180 = vmul.f32 %v3176, %v2573
  %v3181 = vmul.f32 %v3177, %v2573
  %v3182 = vmul.f32 %v3178, %v2573
  %v3183 = vmul.f32 %v3179, %v2573
  %v3184 = vsel %vm355, %v3180, 0.0
  %3185 = vadd.xlane.f32.xlu0 %v3184
  %v3186 = vpop.xlane.xlu0 %3185
  %v3187 = vsel %vm355, %v3181, 0.0
  %3188 = vadd.xlane.f32.xlu0 %v3187
  %v3189 = vpop.xlane.xlu0 %3188
  %v3190 = vsel %vm355, %v3182, 0.0
  %3191 = vadd.xlane.f32.xlu0 %v3190
  %v3192 = vpop.xlane.xlu0 %3191
  %v3193 = vsel %vm355, %v3183, 0.0
  %3194 = vadd.xlane.f32.xlu0 %v3193
  %v3195 = vpop.xlane.xlu0 %3194
  %v3196 = vadd.f32 %v3186, %v2593
  %v3197 = vadd.f32 %v3189, %v2593
  %v3198 = vadd.f32 %v3192, %v2593
  %v3199 = vadd.f32 %v3195, %v2593
  %3200 = vmatprep.subr.bf16.mxu0 0
  %3201 = vmatpush1.bf16.msra.mxu0 %v2263
  %3202 = vmatprep.subr.bf16.mxu0 0
  %3203 = vmatpush1.bf16.msra.mxu0 %v2264
  %3204 = vmatprep.subr.bf16.mxu0 0
  %3205 = vmatpush1.bf16.msra.mxu0 0
  %3206 = vmatprep.subr.bf16.mxu0 0
  %3207 = vmatpush1.bf16.msra.mxu0 0
  %3208 = vmatprep.subr.bf16.mxu0 0
  %3209 = vmatpush1.bf16.msra.mxu0 0
  %3210 = vmatprep.subr.bf16.mxu0 0
  %3211 = vmatpush1.bf16.msra.mxu0 0
  %3212 = vmatprep.subr.bf16.mxu0 0
  %3213 = vmatpush1.bf16.msra.mxu0 0
  %3214 = vmatprep.subr.bf16.mxu0 0
  %3215 = vmatpush1.bf16.msra.mxu0 0
  %3216 = vmatprep.subr.bf16.mxu0 0
  %3217 = vmatpush1.bf16.msra.mxu0 0
  %3218 = vmatprep.subr.bf16.mxu0 0
  %3219 = vmatpush1.bf16.msra.mxu0 0
  %3220 = vmatprep.subr.bf16.mxu0 0
  %3221 = vmatpush1.bf16.msra.mxu0 0
  %3222 = vmatprep.subr.bf16.mxu0 0
  %3223 = vmatpush1.bf16.msra.mxu0 0
  %3224 = vmatprep.subr.bf16.mxu0 0
  %3225 = vmatpush1.bf16.msra.mxu0 0
  %3226 = vmatprep.subr.bf16.mxu0 0
  %3227 = vmatpush1.bf16.msra.mxu0 0
  %3228 = vmatprep.subr.bf16.mxu0 0
  %3229 = vmatpush1.bf16.msra.mxu0 0
  %3230 = vmatprep.subr.bf16.mxu0 0
  %3231 = vmatpush1.bf16.msra.mxu0 0
  %3232 = vmatprep.mubr.bf16.mxu0 0
  %3233 = vmatmul.mubr.bf16.gmra.mrb[0].mxu0 %v3110
  %v3234 = vpop.f32.mrb[0].mxu0
  %v3235 = vadd.f32 0.0, %v3234
  %v3236 = vpop.f32.mrb[0].mxu0
  %v3237 = vpop.f32.mrb[0].mxu0
  %v3238 = vadd.f32 0.0, %v3237
  %v3239 = vpop.f32.mrb[0].mxu0
  %3240 = vmatprep.mubr.bf16.mxu0 0
  %3241 = vmatmul.mubr.bf16.gmra.mrb[0].mxu0 %v3113
  %v3242 = vpop.f32.mrb[0].mxu0
  %v3243 = vadd.f32 0.0, %v3242
  %v3244 = vpop.f32.mrb[0].mxu0
  %v3245 = vpop.f32.mrb[0].mxu0
  %v3246 = vadd.f32 0.0, %v3245
  %v3247 = vpop.f32.mrb[0].mxu0
  %3248 = vdwg.mxu0
  %v3249 = vadd.f32 %v2241, %v3235
  %v3250 = vadd.f32 %v2244, %v3238
  %v3251 = vadd.f32 %v2249, %v3243
  %v3252 = vadd.f32 %v2252, %v3246
  %v3253 = vmul.f32 %v3249, 0.5
  %v3254 = vmul.f32 %v3250, 0.5
  %v3255 = vmul.f32 %v3251, 0.5
  %v3256 = vmul.f32 %v3252, 0.5
  %v3257 = vtanh.pop %v3253
  %v3258 = vtanh.pop %v3254
  %v3259 = vtanh.pop %v3255
  %v3260 = vtanh.pop %v3256
  %v3261 = vmul.f32 %v3257, 0.5
  %v3262 = vmul.f32 %v3258, 0.5
  %v3263 = vmul.f32 %v3259, 0.5
  %v3264 = vmul.f32 %v3260, 0.5
  %v3265 = vadd.f32 %v3261, 0.5
  %v3266 = vadd.f32 %v3262, 0.5
  %v3267 = vadd.f32 %v3263, 0.5
  %v3268 = vadd.f32 %v3264, 0.5
  %3273 = vrot.lane.b32.xlu0 %v3097, 96
  %v3274 = vpop.permute.xlu0 %3273
  %3275 = vrot.lane.b32.xlu0 %v3098, 96
  %v3276 = vpop.permute.xlu0 %3275
  %3277 = vrot.lane.b32.xlu0 %v3099, 96
  %v3278 = vpop.permute.xlu0 %3277
  %3279 = vrot.lane.b32.xlu0 %v3100, 96
  %v3280 = vpop.permute.xlu0 %3279
  %v3285 = vmul.f32 %v3265, %v3274
  %v3286 = vmul.f32 %v3266, %v3276
  %v3287 = vmul.f32 %v3267, %v3278
  %v3288 = vmul.f32 %v3268, %v3280
  %v3289 = vpack.c.bf16 %v3286, %v3285
  %v3290 = vpack.c.bf16 %v3288, %v3287
  %v3292 = vsel %vm355, %v3289, 0
  %v3295 = vsel %vm355, %v3290, 0
  %3297 = vmatprep.subr.bf16.mxu0 0
  %3298 = vmatpush1.bf16.msra.mxu0 %v2359
  %3299 = vmatprep.subr.bf16.mxu0 0
  %3300 = vmatpush1.bf16.msra.mxu0 %v2361
  %3301 = vmatprep.subr.bf16.mxu0 0
  %3302 = vmatpush1.bf16.msra.mxu0 0
  %3303 = vmatprep.subr.bf16.mxu0 0
  %3304 = vmatpush1.bf16.msra.mxu0 0
  %3305 = vmatprep.subr.bf16.mxu0 0
  %3306 = vmatpush1.bf16.msra.mxu0 0
  %3307 = vmatprep.subr.bf16.mxu0 0
  %3308 = vmatpush1.bf16.msra.mxu0 0
  %3309 = vmatprep.subr.bf16.mxu0 0
  %3310 = vmatpush1.bf16.msra.mxu0 0
  %3311 = vmatprep.subr.bf16.mxu0 0
  %3312 = vmatpush1.bf16.msra.mxu0 0
  %3313 = vmatprep.subr.bf16.mxu0 0
  %3314 = vmatpush1.bf16.msra.mxu0 0
  %3315 = vmatprep.subr.bf16.mxu0 0
  %3316 = vmatpush1.bf16.msra.mxu0 0
  %3317 = vmatprep.subr.bf16.mxu0 0
  %3318 = vmatpush1.bf16.msra.mxu0 0
  %3319 = vmatprep.subr.bf16.mxu0 0
  %3320 = vmatpush1.bf16.msra.mxu0 0
  %3321 = vmatprep.subr.bf16.mxu0 0
  %3322 = vmatpush1.bf16.msra.mxu0 0
  %3323 = vmatprep.subr.bf16.mxu0 0
  %3324 = vmatpush1.bf16.msra.mxu0 0
  %3325 = vmatprep.subr.bf16.mxu0 0
  %3326 = vmatpush1.bf16.msra.mxu0 0
  %3327 = vmatprep.subr.bf16.mxu0 0
  %3328 = vmatpush1.bf16.msra.mxu0 0
  %3329 = vmatprep.mubr.bf16.mxu0 0
  %3330 = vmatmul.mubr.bf16.gmra.mrb[0].mxu0 %v3292
  %v3331 = vpop.f32.mrb[0].mxu0
  %v3332 = vadd.f32 0.0, %v3331
  %v3333 = vpop.f32.mrb[0].mxu0
  %v3334 = vpop.f32.mrb[0].mxu0
  %v3335 = vadd.f32 0.0, %v3334
  %v3336 = vpop.f32.mrb[0].mxu0
  %3337 = vmatprep.mubr.bf16.mxu0 0
  %3338 = vmatmul.mubr.bf16.gmra.mrb[0].mxu0 %v3295
  %v3339 = vpop.f32.mrb[0].mxu0
  %v3340 = vadd.f32 0.0, %v3339
  %v3341 = vpop.f32.mrb[0].mxu0
  %v3342 = vpop.f32.mrb[0].mxu0
  %v3343 = vadd.f32 0.0, %v3342
  %v3344 = vpop.f32.mrb[0].mxu0
  %3345 = vdwg.mxu0
  %3350 = vrot.lane.b32.xlu0 %v3332, 64
  %v3351 = vpop.permute.xlu0 %3350
  %3352 = vrot.lane.b32.xlu0 %v3335, 64
  %v3353 = vpop.permute.xlu0 %3352
  %3354 = vrot.lane.b32.xlu0 %v3340, 64
  %v3355 = vpop.permute.xlu0 %3354
  %3356 = vrot.lane.b32.xlu0 %v3343, 64
  %v3357 = vpop.permute.xlu0 %3356
  %v3362 = vadd.f32 %v2241, %v3351
  %v3363 = vadd.f32 %v2244, %v3353
  %v3364 = vadd.f32 %v2249, %v3355
  %v3365 = vadd.f32 %v2252, %v3357
  %v3366 = vtanh.pop %v3362
  %v3367 = vtanh.pop %v3363
  %v3368 = vtanh.pop %v3364
  %v3369 = vtanh.pop %v3365
  %v3370 = vmul.f32 %v3265, %v3097
  %v3371 = vmul.f32 %v3266, %v3098
  %v3372 = vmul.f32 %v3267, %v3099
  %v3373 = vmul.f32 %v3268, %v3100
  %v3374 = vsub.f32 1.0, %v3265
  %v3375 = vsub.f32 1.0, %v3266
  %v3376 = vsub.f32 1.0, %v3267
  %v3377 = vsub.f32 1.0, %v3268
  %3382 = vrot.lane.b32.xlu0 %v3366, 96
  %v3383 = vpop.permute.xlu0 %3382
  %3384 = vrot.lane.b32.xlu0 %v3367, 96
  %v3385 = vpop.permute.xlu0 %3384
  %3386 = vrot.lane.b32.xlu0 %v3368, 96
  %v3387 = vpop.permute.xlu0 %3386
  %3388 = vrot.lane.b32.xlu0 %v3369, 96
  %v3389 = vpop.permute.xlu0 %3388
  %v3394 = vmul.f32 %v3374, %v3383
  %v3395 = vmul.f32 %v3375, %v3385
  %v3396 = vmul.f32 %v3376, %v3387
  %v3397 = vmul.f32 %v3377, %v3389
  %v3398 = vadd.f32 %v3370, %v3394
  %v3399 = vadd.f32 %v3371, %v3395
  %v3400 = vadd.f32 %v3372, %v3396
  %v3401 = vadd.f32 %v3373, %v3397
  %v3402 = vpack.c.bf16 %v3399, %v3398
  %v3403 = vpack.c.bf16 %v3401, %v3400
  %3406 = vrot.lane.b32.xlu0 %v3402, 96
  %v3407 = vpop.permute.xlu0 %3406
  %3408 = vrot.lane.b32.xlu0 %v3403, 96
  %v3409 = vpop.permute.xlu0 %3408
  %v3411 = vsel %vm355, %v3407, 0
  %v3414 = vsel %vm355, %v3409, 0
  %3416 = vmatprep.subr.bf16.mxu0 0
  %3417 = vmatpush1.bf16.msra.mxu0 %v2495
  %3418 = vmatprep.subr.bf16.mxu0 0
  %3419 = vmatpush1.bf16.msra.mxu0 %v2496
  %3420 = vmatprep.subr.bf16.mxu0 0
  %3421 = vmatpush1.bf16.msra.mxu0 0
  %3422 = vmatprep.subr.bf16.mxu0 0
  %3423 = vmatpush1.bf16.msra.mxu0 0
  %3424 = vmatprep.subr.bf16.mxu0 0
  %3425 = vmatpush1.bf16.msra.mxu0 0
  %3426 = vmatprep.subr.bf16.mxu0 0
  %3427 = vmatpush1.bf16.msra.mxu0 0
  %3428 = vmatprep.subr.bf16.mxu0 0
  %3429 = vmatpush1.bf16.msra.mxu0 0
  %3430 = vmatprep.subr.bf16.mxu0 0
  %3431 = vmatpush1.bf16.msra.mxu0 0
  %3432 = vmatprep.subr.bf16.mxu0 0
  %3433 = vmatpush1.bf16.msra.mxu0 0
  %3434 = vmatprep.subr.bf16.mxu0 0
  %3435 = vmatpush1.bf16.msra.mxu0 0
  %3436 = vmatprep.subr.bf16.mxu0 0
  %3437 = vmatpush1.bf16.msra.mxu0 0
  %3438 = vmatprep.subr.bf16.mxu0 0
  %3439 = vmatpush1.bf16.msra.mxu0 0
  %3440 = vmatprep.subr.bf16.mxu0 0
  %3441 = vmatpush1.bf16.msra.mxu0 0
  %3442 = vmatprep.subr.bf16.mxu0 0
  %3443 = vmatpush1.bf16.msra.mxu0 0
  %3444 = vmatprep.subr.bf16.mxu0 0
  %3445 = vmatpush1.bf16.msra.mxu0 0
  %3446 = vmatprep.subr.bf16.mxu0 0
  %3447 = vmatpush1.bf16.msra.mxu0 0
  %3448 = vmatprep.mubr.bf16.mxu0 0
  %3449 = vmatmul.mubr.bf16.gmra.mrb[0].mxu0 %v3411
  %v3450 = vpop.f32.mrb[0].mxu0
  %v3451 = vadd.f32 %v2480, %v3450
  %v3452 = vpop.f32.mrb[0].mxu0
  %v3453 = vpop.f32.mrb[0].mxu0
  %v3454 = vadd.f32 %v2480, %v3453
  %v3455 = vpop.f32.mrb[0].mxu0
  %3456 = vmatprep.mubr.bf16.mxu0 0
  %3457 = vmatmul.mubr.bf16.gmra.mrb[0].mxu0 %v3414
  %v3458 = vpop.f32.mrb[0].mxu0
  %v3459 = vadd.f32 %v2480, %v3458
  %v3460 = vpop.f32.mrb[0].mxu0
  %v3461 = vpop.f32.mrb[0].mxu0
  %v3462 = vadd.f32 %v2480, %v3461
  %v3463 = vpop.f32.mrb[0].mxu0
  %3464 = vdwg.mxu0
  %v3465 = vmul.f32 %v3451, 0.5
  %v3466 = vmul.f32 %v3454, 0.5
  %v3467 = vmul.f32 %v3459, 0.5
  %v3468 = vmul.f32 %v3462, 0.5
  %v3469 = vtanh.pop %v3465
  %v3470 = vtanh.pop %v3466
  %v3471 = vtanh.pop %v3467
  %v3472 = vtanh.pop %v3468
  %v3473 = vmul.f32 %v3469, 0.5
  %v3474 = vmul.f32 %v3470, 0.5
  %v3475 = vmul.f32 %v3471, 0.5
  %v3476 = vmul.f32 %v3472, 0.5
  %v3477 = vadd.f32 %v3473, 0.5
  %v3478 = vadd.f32 %v3474, 0.5
  %v3479 = vadd.f32 %v3475, 0.5
  %v3480 = vadd.f32 %v3476, 0.5
  %v3481 = vmul.f32 %v3477, %v2573
  %v3482 = vmul.f32 %v3478, %v2573
  %v3483 = vmul.f32 %v3479, %v2573
  %v3484 = vmul.f32 %v3480, %v2573
  %v3485 = vsel %vm355, %v3481, 0.0
  %3486 = vadd.xlane.f32.xlu0 %v3485
  %v3487 = vpop.xlane.xlu0 %3486
  %v3488 = vsel %vm355, %v3482, 0.0
  %3489 = vadd.xlane.f32.xlu0 %v3488
  %v3490 = vpop.xlane.xlu0 %3489
  %v3491 = vsel %vm355, %v3483, 0.0
  %3492 = vadd.xlane.f32.xlu0 %v3491
  %v3493 = vpop.xlane.xlu0 %3492
  %v3494 = vsel %vm355, %v3484, 0.0
  %3495 = vadd.xlane.f32.xlu0 %v3494
  %v3496 = vpop.xlane.xlu0 %3495
  %v3497 = vadd.f32 %v3487, %v2593
  %v3498 = vadd.f32 %v3490, %v2593
  %v3499 = vadd.f32 %v3493, %v2593
  %v3500 = vadd.f32 %v3496, %v2593
  %3505 = vrot.lane.b32.xlu0 %v2895, 1
  %v3506 = vpop.permute.xlu0 %3505
  %3507 = vrot.lane.b32.xlu0 %v2896, 1
  %v3508 = vpop.permute.xlu0 %3507
  %3509 = vrot.lane.b32.xlu0 %v2897, 1
  %v3510 = vpop.permute.xlu0 %3509
  %3511 = vrot.lane.b32.xlu0 %v2898, 1
  %v3512 = vpop.permute.xlu0 %3511
  %3521 = vrot.lane.b32.xlu0 %v3196, 2
  %v3522 = vpop.permute.xlu0 %3521
  %3523 = vrot.lane.b32.xlu0 %v3197, 2
  %v3524 = vpop.permute.xlu0 %3523
  %3525 = vrot.lane.b32.xlu0 %v3198, 2
  %v3526 = vpop.permute.xlu0 %3525
  %3527 = vrot.lane.b32.xlu0 %v3199, 2
  %v3528 = vpop.permute.xlu0 %3527
  %3537 = vrot.lane.b32.xlu0 %v3497, 3
  %v3538 = vpop.permute.xlu0 %3537
  %3539 = vrot.lane.b32.xlu0 %v3498, 3
  %v3540 = vpop.permute.xlu0 %3539
  %3541 = vrot.lane.b32.xlu0 %v3499, 3
  %v3542 = vpop.permute.xlu0 %3541
  %3543 = vrot.lane.b32.xlu0 %v3500, 3
  %v3544 = vpop.permute.xlu0 %3543
  %vm3549 = vcmask 7168
  %v3550 = vsel %vm3549, %v2594, %v3506
  %v3551 = vsel %vm3549, %v2595, %v3508
  %v3552 = vsel %vm3549, %v2596, %v3510
  %v3553 = vsel %vm3549, %v2597, %v3512
  %vm3554 = vcmask 15360
  %v3555 = vsel %vm3554, %v3550, %v3522
  %v3556 = vsel %vm3554, %v3551, %v3524
  %v3557 = vsel %vm3554, %v3552, %v3526
  %v3558 = vsel %vm3554, %v3553, %v3528
  %vm3559 = vcmask 23552
  %v3560 = vsel %vm3559, %v3555, %v3538
  %v3561 = vsel %vm3559, %v3556, %v3540
  %v3562 = vsel %vm3559, %v3557, %v3542
  %v3563 = vsel %vm3559, %v3558, %v3544
  %vm3564 = vcmask 31744
  %3565 = vst.msk [vmem:[%s3] sm:$0xff] %vm3564, %v3560
  %3566 = vst.msk [vmem:[%s3 + $0x8] sm:$0xff] %vm3564, %v3561
  %3567 = vst.msk [vmem:[%s3 + $0x10] sm:$0xff] %vm3564, %v3562
  %3568 = vst.msk [vmem:[%s3 + $0x18] sm:$0xff] %vm3564, %v3563
  // Predicated region
  $region14: #{enc_dec_linear_forward.1} parent=0 // pred_check
    _
  $region15: #{enc_dec_linear_forward.1} parent=0 // pred_check_branch
    %3570 = sbr.rel (0) target = $region17
  $region16: #{enc_dec_linear_forward.1} parent=0 // pred_region
    _
  $region17: #{enc_dec_linear_forward.1} parent=0 // pred_fallthru
    _
  // Predicated region
  $region18: #{enc_dec_linear_forward.1} parent=0 // pred_check
    _
  $region19: #{enc_dec_linear_forward.1} parent=0 // pred_check_branch
    %3572 = sbr.rel (0) target = $region21
  $region20: #{enc_dec_linear_forward.1} parent=0 // pred_region
    _
  $region21: #{enc_dec_linear_forward.1} parent=0 // pred_fallthru
    _

</llo_original>
